<compile_context>
chip_gen: v7x
topology: tpu7x:2x2x1
jax: 0.10.0
libtpu: 0.0.40
codegen_flags: <defaults>
</compile_context>

<pallas_src>
import numpy as np
import jax
import jax.numpy as jnp
from jax import lax
from jax.experimental import pallas as pl
from jax.experimental.pallas import tpu as pltpu


def _vmem(n):
    return [pl.BlockSpec(memory_space=pltpu.MemorySpace.VMEM) for _ in range(n)]


# --------------------------------------------------------------------------
# Operand packing: many small arrays -> one lane-dense [R, 128] f32 slab
# --------------------------------------------------------------------------
def _pack_slab(entries, lanes=128):
    """Pack named 2-D arrays into one [R, lanes] f32 slab.

    Each segment is padded to an 8-row multiple so every in-kernel static slice
    starts on a sublane tile boundary. Returns (slab, {name: (off, rows, cols)}).
    """
    segs, layout, r = [], {}, 0
    for name, a in entries:
        a = jnp.asarray(a, jnp.float32)
        rows, cols = a.shape
        pr = -(-rows // 8) * 8
        seg = jnp.zeros((pr, lanes), jnp.float32).at[:rows, :cols].set(a)
        segs.append(seg)
        layout[name] = (r, rows, cols)
        r += pr
    return jnp.concatenate(segs, axis=0), layout


def _take(ref, layout, name):
    off, rows, cols = layout[name]
    return ref[off:off + rows, 0:cols]        # static slice -> plain VMEM load


# --------------------------------------------------------------------------
# In-kernel building blocks (traced functions called from the kernel body)
# --------------------------------------------------------------------------
def _gat_resplus(h, adj, w, a_src, a_dst, bias, gamma, beta):
    """DeepGCNLayer 'res+': h + GATConv(dropout(LeakyReLU(BN(h)))).

    bf16 MXU operands with f32 accumulation; all VPU/EUP math stays f32.
    """
    mean = jnp.mean(h, axis=0, keepdims=True)
    var = jnp.mean((h - mean) ** 2, axis=0, keepdims=True)
    z = (h - mean) * lax.rsqrt(var + 1e-5) * gamma + beta
    z = jnp.where(z > 0, z, 0.01 * z)            # LeakyReLU(0.01); dropout(0)=id
    xw = jnp.dot(z.astype(jnp.bfloat16), w.astype(jnp.bfloat16),
                 preferred_element_type=jnp.float32)                  # [N, C]
    a_d = jnp.sum(xw * a_dst, axis=-1, keepdims=True)                 # [N, 1]
    # [1, N] source coefficients via transposed-rhs matmul (no XLU transpose)
    a_s = lax.dot_general(a_src, xw, (((1,), (1,)), ((), ())),
                          preferred_element_type=jnp.float32)         # [1, N]
    e = a_d + a_s                                # e[i, j] = coeff for edge j -> i
    e = jnp.where(e > 0, e, 0.2 * e)
    e = jnp.where(adj > 0, e, -1e30)             # mask: exp() underflows to 0
    e = e - jnp.max(e, axis=1, keepdims=True)
    p = jnp.exp(e)
    alpha = p * pl.reciprocal(jnp.sum(p, axis=1, keepdims=True), approx=True)
    agg = jnp.dot(alpha.astype(jnp.bfloat16), xw.astype(jnp.bfloat16),
                  preferred_element_type=jnp.float32)
    return h + agg + bias


def _mem_assign(x, kt, ksq, gmat, mmat, tau):
    """PyG MemPooling cluster assignment S (pre-mask) for node features x."""
    expo = -(tau + 1.0) / 2.0
    xk = jnp.dot(x.astype(jnp.bfloat16), kt.astype(jnp.bfloat16),
                 preferred_element_type=jnp.float32)                  # [N, H*K]
    xsq = jnp.sum(x * x, axis=-1, keepdims=True)
    d = jnp.maximum(xsq + ksq - 2.0 * xk, 0.0)                        # ||x-k||^2
    base = 1.0 + d / tau
    dist = 1.0 / base if expo == -1.0 else jnp.exp(expo * jnp.log(base))
    # per-head normalization & 1x1 head-conv stay f32 with exact division: they
    # shape the S that feeds kl_loss (approx vrcp / bf16 error would leak into
    # log(S)).  These matmuls are tiny (<=[N,50]x[50,50]).
    gsum = jnp.dot(dist, gmat, preferred_element_type=jnp.float32)
    dist = dist / gsum
    sc = jnp.dot(dist, mmat, preferred_element_type=jnp.float32)      # [N, K]
    sc = sc - jnp.max(sc, axis=-1, keepdims=True)
    sc = jnp.exp(sc)
    return sc / jnp.sum(sc, axis=-1, keepdims=True)


def _kl_loss(s):
    """MemPooling.kl_loss contribution of one graph's S (sum, pre-batchmean)."""
    col = jnp.sum(s, axis=0, keepdims=True)
    col = jnp.where(col == 0.0, 1.0, col)        # guard; no-op for valid graphs
    p = (s * s) / col
    denom = jnp.sum(p, axis=1, keepdims=True)
    rowsum = jnp.sum(s, axis=1, keepdims=True)
    denom = jnp.where(rowsum == 0.0, 1.0, denom)
    p = p / denom
    pc = jnp.maximum(p, 1e-15)
    sc = jnp.maximum(s, 1e-15)
    return jnp.sum(pc * (jnp.log(pc) - jnp.log(sc)))


# --------------------------------------------------------------------------
# Parameters (deterministic synthetic init, shapes as in Net.__init__)
# --------------------------------------------------------------------------
def init_params(key, in_channels, hidden, out_channels):
    ks = jax.random.split(key, 12)
    p = {
        'lin_w': jax.random.normal(ks[0], (in_channels, hidden)) * 0.3,
        'lin_b': jnp.zeros((hidden,), jnp.float32),
        'layers': [],
    }
    for i in range(2):
        kk = jax.random.split(ks[1 + i], 3)
        p['layers'].append(dict(
            gat_w=jax.random.normal(kk[0], (hidden, hidden)) / np.sqrt(hidden),
            att_src=jax.random.normal(kk[1], (hidden,)) * 0.3,
            att_dst=jax.random.normal(kk[2], (hidden,)) * 0.3,
            gat_b=jnp.zeros((hidden,), jnp.float32),
            bn_gamma=jnp.ones((hidden,), jnp.float32),
            bn_beta=jnp.zeros((hidden,), jnp.float32),
        ))
    p['mem1'] = dict(
        k=jax.random.normal(ks[4], (5, 10, hidden)) * 0.5,
        conv_w=jax.random.normal(ks[5], (5,)) * 0.5,
        lin_w=jax.random.normal(ks[6], (hidden, 80)) / np.sqrt(hidden),
        lin_b=jnp.zeros((80,), jnp.float32),
    )
    p['mem2'] = dict(
        k=jax.random.normal(ks[7], (5, 1, 80)) * 0.5,
        conv_w=jax.random.normal(ks[8], (5,)) * 0.5,
        lin_w=jax.random.normal(ks[9], (80, out_channels)) / np.sqrt(80.0),
        lin_b=jnp.zeros((out_channels,), jnp.float32),
    )
    return p


# --------------------------------------------------------------------------
# Forward pass: single fused gridless pallas_call with 2 packed operands
# --------------------------------------------------------------------------
def net_forward(params, x, edge_index, batch, num_graphs, tau=1.0):
    x = jnp.asarray(x, jnp.float32)
    n_nodes = x.shape[0]
    hidden = params['lin_w'].shape[1]
    layers = params['layers']
    num_layers = len(layers)
    m1, m2 = params['mem1'], params['mem2']
    H1, K1, _ = m1['k'].shape
    H2, K2, c2 = m2['k'].shape
    out_ch = m2['lin_w'].shape[1]

    # dense adjacency (adj[i, j] = 1 iff edge j -> i), self loops added; only
    # used as a compare mask, never on the MXU.
    src, dst = np.asarray(edge_index)
    adj_np = np.zeros((n_nodes, n_nodes), np.float32)
    keep = src != dst
    adj_np[dst[keep], src[keep]] = 1.0
    adj_np[np.arange(n_nodes), np.arange(n_nodes)] = 1.0

    # per-graph node-membership mask (column b = indicator of graph b's nodes).
    # Replaces the former to_dense_batch scatter matmul: MemPooling is
    # invariant to row order within a graph, so pooling graph b is just
    # (S1 * mask[:, b])^T @ X over all nodes.
    batch = np.asarray(batch)
    mask_np = np.zeros((n_nodes, num_graphs), np.float32)
    mask_np[np.arange(n_nodes), batch] = 1.0

    # MemPooling constants (keys transposed; per-head group & 1x1-conv matrices)
    kt1 = jnp.transpose(m1['k'].reshape(H1 * K1, hidden))             # [H, H1*K1]
    G1 = np.kron(np.eye(H1, dtype=np.float32), np.ones((K1, K1), np.float32))
    M1 = jnp.kron(m1['conv_w'].reshape(H1, 1), jnp.eye(K1, dtype=jnp.float32))
    kt2 = jnp.transpose(m2['k'].reshape(H2 * K2, c2))                 # [80, H2*K2]
    G2 = np.kron(np.eye(H2, dtype=np.float32), np.ones((K2, K2), np.float32))
    M2 = jnp.kron(m2['conv_w'].reshape(H2, 1), jnp.eye(K2, dtype=jnp.float32))
    ksq1 = jnp.sum(kt1 * kt1, axis=0, keepdims=True)
    ksq2 = jnp.sum(kt2 * kt2, axis=0, keepdims=True)

    # Lane-dense output path: pad the final linear to 128 output lanes (pad
    # weights 0, pad bias -1e30) so log_softmax over the full 128-lane row is
    # exact on the first out_ch lanes and the store is a full-width vst.
    w2_pad = jnp.zeros((c2, 128), jnp.float32).at[:, :out_ch].set(m2['lin_w'])
    b2_pad = jnp.full((1, 128), -1e30, jnp.float32).at[0, :out_ch].set(m2['lin_b'])

    # ---- pack everything into two slabs (2 DMAs instead of 22) -------------
    param_entries = [("lin_w", params['lin_w']),
                     ("lin_b", params['lin_b'].reshape(1, -1))]
    for li, lp in enumerate(layers):
        param_entries += [
            (f"gat_w{li}", lp['gat_w']),
            (f"att_s{li}", lp['att_src'].reshape(1, -1)),
            (f"att_d{li}", lp['att_dst'].reshape(1, -1)),
            (f"gat_b{li}", lp['gat_b'].reshape(1, -1)),
            (f"bn_g{li}", lp['bn_gamma'].reshape(1, -1)),
            (f"bn_b{li}", lp['bn_beta'].reshape(1, -1)),
        ]
    param_entries += [
        ("kt1", kt1), ("ksq1", ksq1), ("G1", G1), ("M1", M1),
        ("w1", m1['lin_w']), ("b1", m1['lin_b'].reshape(1, -1)),
        ("kt2", kt2), ("ksq2", ksq2), ("G2", G2), ("M2", M2),
        ("w2", w2_pad), ("b2", b2_pad),
    ]
    param_slab, p_lay = _pack_slab(param_entries)

    data_slab, d_lay = _pack_slab([("x", x), ("adj", adj_np), ("mask", mask_np)])

    # ---- the fused kernel ---------------------------------------------------
    def kernel(data_ref, param_ref, out_ref, kl_ref):
        dp = lambda name: _take(data_ref, d_lay, name)
        pp = lambda name: _take(param_ref, p_lay, name)

        adj = dp("adj")
        # initial Linear (bf16 MXU, f32 accumulate)
        h = (jnp.dot(dp("x").astype(jnp.bfloat16),
                     pp("lin_w").astype(jnp.bfloat16),
                     preferred_element_type=jnp.float32) + pp("lin_b"))
        # 2x DeepGCNLayer('res+') with dense masked GAT attention
        for li in range(num_layers):
            h = _gat_resplus(h, adj, pp(f"gat_w{li}"), pp(f"att_s{li}"),
                             pp(f"att_d{li}"), pp(f"gat_b{li}"),
                             pp(f"bn_g{li}"), pp(f"bn_b{li}"))

        # MemPooling stage-1 assignment computed ONCE over all nodes
        S1 = _mem_assign(h, pp("kt1"), pp("ksq1"), pp("G1"), pp("M1"), tau)
        h16 = h.astype(jnp.bfloat16)
        w1 = pp("w1").astype(jnp.bfloat16)
        b1 = pp("b1")
        kt2_k, ksq2_k, g2_k, m2_k = pp("kt2"), pp("ksq2"), pp("G2"), pp("M2")
        w2 = pp("w2").astype(jnp.bfloat16)
        b2 = pp("b2")
        mask = dp("mask")

        kl_acc = jnp.zeros((1, 1), jnp.float32)
        for b in range(num_graphs):      # tiny static B -> unrolled, in-register
            mb = mask[:, b:b + 1]                                     # [N, 1]
            sb = S1 * mb                                              # [N, K1]
            # pooled = S^T X : contract the node axis directly on the MXU
            pooled = lax.dot_general(sb.astype(jnp.bfloat16), h16,
                                     (((0,), (0,)), ((), ())),
                                     preferred_element_type=jnp.float32)  # [K1, C]
            x1 = jnp.dot(pooled.astype(jnp.bfloat16), w1,
                         preferred_element_type=jnp.float32) + b1     # [K1, 80]
            x1 = jnp.where(x1 > 0, x1, 0.01 * x1)    # F.leaky_relu; dropout(0)=id
            kl1 = _kl_loss(sb)

            # second MemPooling stage (per graph, no mask)
            S2 = _mem_assign(x1, kt2_k, ksq2_k, g2_k, m2_k, tau)      # [K1, K2]
            pooled2 = lax.dot_general(S2.astype(jnp.bfloat16),
                                      x1.astype(jnp.bfloat16),
                                      (((0,), (0,)), ((), ())),
                                      preferred_element_type=jnp.float32)  # [K2, 80]
            logits = jnp.dot(pooled2.astype(jnp.bfloat16), w2,
                             preferred_element_type=jnp.float32) + b2  # [1, 128]
            z = logits - jnp.max(logits, axis=-1, keepdims=True)
            logp = z - jnp.log(jnp.sum(jnp.exp(z), axis=-1, keepdims=True))
            out_ref[pl.ds(b, 1), :] = logp            # full-width lane-dense store
            kl_acc = kl_acc + kl1 + _kl_loss(S2)
        kl_ref[...] = kl_acc / num_graphs             # batchmean for both stages

    logp_pad, kl = pl.pallas_call(
        kernel,
        out_shape=(jax.ShapeDtypeStruct((num_graphs, 128), jnp.float32),
                   jax.ShapeDtypeStruct((1, 1), jnp.float32)),
        in_specs=_vmem(2),
        out_specs=tuple(_vmem(2)),
    )(data_slab, param_slab)
    return logp_pad[:, :out_ch], kl[0, 0]


def _ring_edges(n, offset):
    s = np.arange(n)
    d = (s + 1) % n
    return np.stack([np.concatenate([s, d]), np.concatenate([d, s])]) + offset


if __name__ == "__main__":
    in_channels, hidden_channels, out_channels = 16, 32, 6
    nodes_per_graph = [7, 5]
    num_graphs = len(nodes_per_graph)
    n_nodes = sum(nodes_per_graph)                        # 12

    batch = np.repeat(np.arange(num_graphs), nodes_per_graph)
    edge_index = np.concatenate(
        [_ring_edges(nodes_per_graph[0], 0),
         _ring_edges(nodes_per_graph[1], nodes_per_graph[0])], axis=1)  # [2, 24]

    key = jax.random.PRNGKey(0)
    kx, kp = jax.random.split(key)
    x = jax.random.normal(kx, (n_nodes, in_channels), jnp.float32)
    params = init_params(kp, in_channels, hidden_channels, out_channels)

    log_probs, kl = net_forward(params, x, edge_index, batch, num_graphs)
    jax.block_until_ready((log_probs, kl))
    assert log_probs.shape == (num_graphs, out_channels)
    assert np.isfinite(np.asarray(log_probs)).all()
    assert np.isfinite(float(kl))
    print("KERNEL_OK")
</pallas_src>

<mosaic_0001>
module attributes {stable_mosaic.version = 11 : i64} {
  func.func @kernel(%arg0: memref<48x128xf32, #tpu.memory_space<vmem>>, %arg1: memref<552x128xf32, #tpu.memory_space<vmem>>, %arg2: memref<2x128xf32, #tpu.memory_space<vmem>>, %arg3: memref<1x1xf32, #tpu.memory_space<vmem>>) attributes {dimension_semantics = [], scalar_prefetch = 0 : i64, scratch_operands = 0 : i64, tpu.core_type = #tpu.core_type<tc>} {
    %c16 = arith.constant 16 : index
    %c0 = arith.constant 0 : index
    %0 = vector.load %arg0[%c16, %c0] : memref<48x128xf32, #tpu.memory_space<vmem>>, vector<12x12xf32>
    %c0_0 = arith.constant 0 : index
    %c0_1 = arith.constant 0 : index
    %1 = vector.load %arg0[%c0_0, %c0_1] : memref<48x128xf32, #tpu.memory_space<vmem>>, vector<12x16xf32>
    %2 = arith.truncf %1 : vector<12x16xf32> to vector<12x16xbf16>
    %c0_2 = arith.constant 0 : index
    %c0_3 = arith.constant 0 : index
    %3 = vector.load %arg1[%c0_2, %c0_3] : memref<552x128xf32, #tpu.memory_space<vmem>>, vector<16x32xf32>
    %4 = arith.truncf %3 : vector<16x32xf32> to vector<16x32xbf16>
    %cst = arith.constant dense<0.000000e+00> : vector<12x32xf32>
    %5 = tpu.matmul %2, %4, %cst {dimension_numbers = #tpu.dot_dimension_numbers<[1], [0], [0], [1], [0, 0, 1, 1], [], []>} : vector<12x16xbf16>, vector<16x32xbf16>, vector<12x32xf32> -> vector<12x32xf32>
    %c16_4 = arith.constant 16 : index
    %c0_5 = arith.constant 0 : index
    %6 = vector.load %arg1[%c16_4, %c0_5] : memref<552x128xf32, #tpu.memory_space<vmem>>, vector<1x32xf32>
    %7 = vector.broadcast %6 : vector<1x32xf32> to vector<12x32xf32>
    %8 = arith.addf %5, %7 : vector<12x32xf32>
    %c24 = arith.constant 24 : index
    %c0_6 = arith.constant 0 : index
    %9 = vector.load %arg1[%c24, %c0_6] : memref<552x128xf32, #tpu.memory_space<vmem>>, vector<32x32xf32>
    %c56 = arith.constant 56 : index
    %c0_7 = arith.constant 0 : index
    %10 = vector.load %arg1[%c56, %c0_7] : memref<552x128xf32, #tpu.memory_space<vmem>>, vector<1x32xf32>
    %c64 = arith.constant 64 : index
    %c0_8 = arith.constant 0 : index
    %11 = vector.load %arg1[%c64, %c0_8] : memref<552x128xf32, #tpu.memory_space<vmem>>, vector<1x32xf32>
    %c72 = arith.constant 72 : index
    %c0_9 = arith.constant 0 : index
    %12 = vector.load %arg1[%c72, %c0_9] : memref<552x128xf32, #tpu.memory_space<vmem>>, vector<1x32xf32>
    %c80 = arith.constant 80 : index
    %c0_10 = arith.constant 0 : index
    %13 = vector.load %arg1[%c80, %c0_10] : memref<552x128xf32, #tpu.memory_space<vmem>>, vector<1x32xf32>
    %c88 = arith.constant 88 : index
    %c0_11 = arith.constant 0 : index
    %14 = vector.load %arg1[%c88, %c0_11] : memref<552x128xf32, #tpu.memory_space<vmem>>, vector<1x32xf32>
    %cst_12 = arith.constant dense<0.000000e+00> : vector<32xf32>
    %15 = vector.multi_reduction <add>, %8, %cst_12 [0] : vector<12x32xf32> to vector<32xf32>
    %16 = vector.shape_cast %15 : vector<32xf32> to vector<1x32xf32>
    %cst_13 = arith.constant 1.200000e+01 : f32
    %17 = vector.broadcast %cst_13 : f32 to vector<1x32xf32>
    %18 = arith.divf %16, %17 : vector<1x32xf32>
    %19 = vector.broadcast %18 : vector<1x32xf32> to vector<12x32xf32>
    %20 = arith.subf %8, %19 : vector<12x32xf32>
    %21 = arith.mulf %20, %20 : vector<12x32xf32>
    %cst_14 = arith.constant dense<0.000000e+00> : vector<32xf32>
    %22 = vector.multi_reduction <add>, %21, %cst_14 [0] : vector<12x32xf32> to vector<32xf32>
    %23 = vector.shape_cast %22 : vector<32xf32> to vector<1x32xf32>
    %cst_15 = arith.constant 1.200000e+01 : f32
    %24 = vector.broadcast %cst_15 : f32 to vector<1x32xf32>
    %25 = arith.divf %23, %24 : vector<1x32xf32>
    %26 = vector.broadcast %18 : vector<1x32xf32> to vector<12x32xf32>
    %27 = arith.subf %8, %26 : vector<12x32xf32>
    %cst_16 = arith.constant 9.99999974E-6 : f32
    %28 = vector.broadcast %cst_16 : f32 to vector<1x32xf32>
    %29 = arith.addf %25, %28 : vector<1x32xf32>
    %30 = math.rsqrt %29 : vector<1x32xf32>
    %31 = vector.broadcast %30 : vector<1x32xf32> to vector<12x32xf32>
    %32 = arith.mulf %27, %31 : vector<12x32xf32>
    %33 = vector.broadcast %13 : vector<1x32xf32> to vector<12x32xf32>
    %34 = arith.mulf %32, %33 : vector<12x32xf32>
    %35 = vector.broadcast %14 : vector<1x32xf32> to vector<12x32xf32>
    %36 = arith.addf %34, %35 : vector<12x32xf32>
    %cst_17 = arith.constant 0.000000e+00 : f32
    %37 = vector.broadcast %cst_17 : f32 to vector<12x32xf32>
    %38 = arith.cmpf ogt, %36, %37 : vector<12x32xf32>
    %cst_18 = arith.constant 0.00999999977 : f32
    %39 = vector.broadcast %cst_18 : f32 to vector<12x32xf32>
    %40 = arith.mulf %39, %36 : vector<12x32xf32>
    %41 = arith.select %38, %36, %40 : vector<12x32xi1>, vector<12x32xf32>
    %42 = arith.truncf %41 : vector<12x32xf32> to vector<12x32xbf16>
    %43 = arith.truncf %9 : vector<32x32xf32> to vector<32x32xbf16>
    %cst_19 = arith.constant dense<0.000000e+00> : vector<12x32xf32>
    %44 = tpu.matmul %42, %43, %cst_19 {dimension_numbers = #tpu.dot_dimension_numbers<[1], [0], [0], [1], [0, 0, 1, 1], [], []>} : vector<12x32xbf16>, vector<32x32xbf16>, vector<12x32xf32> -> vector<12x32xf32>
    %45 = vector.broadcast %11 : vector<1x32xf32> to vector<12x32xf32>
    %46 = arith.mulf %44, %45 : vector<12x32xf32>
    %cst_20 = arith.constant dense<0.000000e+00> : vector<12xf32>
    %47 = vector.multi_reduction <add>, %46, %cst_20 [1] : vector<12x32xf32> to vector<12xf32>
    %48 = vector.shape_cast %47 : vector<12xf32> to vector<12x1xf32>
    %cst_21 = arith.constant dense<0.000000e+00> : vector<1x12xf32>
    %49 = tpu.matmul %10, %44, %cst_21 {dimension_numbers = #tpu.dot_dimension_numbers<[1], [1], [0], [0], [0, 0, 1, 0], [], []>} : vector<1x32xf32>, vector<12x32xf32>, vector<1x12xf32> -> vector<1x12xf32>
    %50 = vector.broadcast %48 : vector<12x1xf32> to vector<12x12xf32>
    %51 = vector.broadcast %49 : vector<1x12xf32> to vector<12x12xf32>
    %52 = arith.addf %50, %51 : vector<12x12xf32>
    %cst_22 = arith.constant 0.000000e+00 : f32
    %53 = vector.broadcast %cst_22 : f32 to vector<12x12xf32>
    %54 = arith.cmpf ogt, %52, %53 : vector<12x12xf32>
    %cst_23 = arith.constant 2.000000e-01 : f32
    %55 = vector.broadcast %cst_23 : f32 to vector<12x12xf32>
    %56 = arith.mulf %55, %52 : vector<12x12xf32>
    %57 = arith.select %54, %52, %56 : vector<12x12xi1>, vector<12x12xf32>
    %cst_24 = arith.constant 0.000000e+00 : f32
    %58 = vector.broadcast %cst_24 : f32 to vector<12x12xf32>
    %59 = arith.cmpf ogt, %0, %58 : vector<12x12xf32>
    %cst_25 = arith.constant -1.000000e+30 : f32
    %60 = vector.broadcast %cst_25 : f32 to vector<12x12xf32>
    %61 = arith.select %59, %57, %60 : vector<12x12xi1>, vector<12x12xf32>
    %cst_26 = arith.constant dense<0xFF800000> : vector<12xf32>
    %62 = vector.multi_reduction <maximumf>, %61, %cst_26 [1] : vector<12x12xf32> to vector<12xf32>
    %63 = vector.shape_cast %62 : vector<12xf32> to vector<12x1xf32>
    %64 = vector.broadcast %63 : vector<12x1xf32> to vector<12x12xf32>
    %65 = arith.subf %61, %64 : vector<12x12xf32>
    %66 = math.exp %65 : vector<12x12xf32>
    %cst_27 = arith.constant dense<0.000000e+00> : vector<12xf32>
    %67 = vector.multi_reduction <add>, %66, %cst_27 [1] : vector<12x12xf32> to vector<12xf32>
    %68 = vector.shape_cast %67 : vector<12xf32> to vector<12x1xf32>
    %69 = tpu.reciprocal %68 {approx = true} : vector<12x1xf32> -> vector<12x1xf32>
    %70 = vector.broadcast %69 : vector<12x1xf32> to vector<12x12xf32>
    %71 = arith.mulf %66, %70 : vector<12x12xf32>
    %72 = arith.truncf %71 : vector<12x12xf32> to vector<12x12xbf16>
    %73 = arith.truncf %44 : vector<12x32xf32> to vector<12x32xbf16>
    %cst_28 = arith.constant dense<0.000000e+00> : vector<12x32xf32>
    %74 = tpu.matmul %72, %73, %cst_28 {dimension_numbers = #tpu.dot_dimension_numbers<[1], [0], [0], [1], [0, 0, 1, 1], [], []>} : vector<12x12xbf16>, vector<12x32xbf16>, vector<12x32xf32> -> vector<12x32xf32>
    %75 = arith.addf %8, %74 : vector<12x32xf32>
    %76 = vector.broadcast %12 : vector<1x32xf32> to vector<12x32xf32>
    %77 = arith.addf %75, %76 : vector<12x32xf32>
    %c96 = arith.constant 96 : index
    %c0_29 = arith.constant 0 : index
    %78 = vector.load %arg1[%c96, %c0_29] : memref<552x128xf32, #tpu.memory_space<vmem>>, vector<32x32xf32>
    %c128 = arith.constant 128 : index
    %c0_30 = arith.constant 0 : index
    %79 = vector.load %arg1[%c128, %c0_30] : memref<552x128xf32, #tpu.memory_space<vmem>>, vector<1x32xf32>
    %c136 = arith.constant 136 : index
    %c0_31 = arith.constant 0 : index
    %80 = vector.load %arg1[%c136, %c0_31] : memref<552x128xf32, #tpu.memory_space<vmem>>, vector<1x32xf32>
    %c144 = arith.constant 144 : index
    %c0_32 = arith.constant 0 : index
    %81 = vector.load %arg1[%c144, %c0_32] : memref<552x128xf32, #tpu.memory_space<vmem>>, vector<1x32xf32>
    %c152 = arith.constant 152 : index
    %c0_33 = arith.constant 0 : index
    %82 = vector.load %arg1[%c152, %c0_33] : memref<552x128xf32, #tpu.memory_space<vmem>>, vector<1x32xf32>
    %c160 = arith.constant 160 : index
    %c0_34 = arith.constant 0 : index
    %83 = vector.load %arg1[%c160, %c0_34] : memref<552x128xf32, #tpu.memory_space<vmem>>, vector<1x32xf32>
    %cst_35 = arith.constant dense<0.000000e+00> : vector<32xf32>
    %84 = vector.multi_reduction <add>, %77, %cst_35 [0] : vector<12x32xf32> to vector<32xf32>
    %85 = vector.shape_cast %84 : vector<32xf32> to vector<1x32xf32>
    %cst_36 = arith.constant 1.200000e+01 : f32
    %86 = vector.broadcast %cst_36 : f32 to vector<1x32xf32>
    %87 = arith.divf %85, %86 : vector<1x32xf32>
    %88 = vector.broadcast %87 : vector<1x32xf32> to vector<12x32xf32>
    %89 = arith.subf %77, %88 : vector<12x32xf32>
    %90 = arith.mulf %89, %89 : vector<12x32xf32>
    %cst_37 = arith.constant dense<0.000000e+00> : vector<32xf32>
    %91 = vector.multi_reduction <add>, %90, %cst_37 [0] : vector<12x32xf32> to vector<32xf32>
    %92 = vector.shape_cast %91 : vector<32xf32> to vector<1x32xf32>
    %cst_38 = arith.constant 1.200000e+01 : f32
    %93 = vector.broadcast %cst_38 : f32 to vector<1x32xf32>
    %94 = arith.divf %92, %93 : vector<1x32xf32>
    %95 = vector.broadcast %87 : vector<1x32xf32> to vector<12x32xf32>
    %96 = arith.subf %77, %95 : vector<12x32xf32>
    %cst_39 = arith.constant 9.99999974E-6 : f32
    %97 = vector.broadcast %cst_39 : f32 to vector<1x32xf32>
    %98 = arith.addf %94, %97 : vector<1x32xf32>
    %99 = math.rsqrt %98 : vector<1x32xf32>
    %100 = vector.broadcast %99 : vector<1x32xf32> to vector<12x32xf32>
    %101 = arith.mulf %96, %100 : vector<12x32xf32>
    %102 = vector.broadcast %82 : vector<1x32xf32> to vector<12x32xf32>
    %103 = arith.mulf %101, %102 : vector<12x32xf32>
    %104 = vector.broadcast %83 : vector<1x32xf32> to vector<12x32xf32>
    %105 = arith.addf %103, %104 : vector<12x32xf32>
    %cst_40 = arith.constant 0.000000e+00 : f32
    %106 = vector.broadcast %cst_40 : f32 to vector<12x32xf32>
    %107 = arith.cmpf ogt, %105, %106 : vector<12x32xf32>
    %cst_41 = arith.constant 0.00999999977 : f32
    %108 = vector.broadcast %cst_41 : f32 to vector<12x32xf32>
    %109 = arith.mulf %108, %105 : vector<12x32xf32>
    %110 = arith.select %107, %105, %109 : vector<12x32xi1>, vector<12x32xf32>
    %111 = arith.truncf %110 : vector<12x32xf32> to vector<12x32xbf16>
    %112 = arith.truncf %78 : vector<32x32xf32> to vector<32x32xbf16>
    %cst_42 = arith.constant dense<0.000000e+00> : vector<12x32xf32>
    %113 = tpu.matmul %111, %112, %cst_42 {dimension_numbers = #tpu.dot_dimension_numbers<[1], [0], [0], [1], [0, 0, 1, 1], [], []>} : vector<12x32xbf16>, vector<32x32xbf16>, vector<12x32xf32> -> vector<12x32xf32>
    %114 = vector.broadcast %80 : vector<1x32xf32> to vector<12x32xf32>
    %115 = arith.mulf %113, %114 : vector<12x32xf32>
    %cst_43 = arith.constant dense<0.000000e+00> : vector<12xf32>
    %116 = vector.multi_reduction <add>, %115, %cst_43 [1] : vector<12x32xf32> to vector<12xf32>
    %117 = vector.shape_cast %116 : vector<12xf32> to vector<12x1xf32>
    %cst_44 = arith.constant dense<0.000000e+00> : vector<1x12xf32>
    %118 = tpu.matmul %79, %113, %cst_44 {dimension_numbers = #tpu.dot_dimension_numbers<[1], [1], [0], [0], [0, 0, 1, 0], [], []>} : vector<1x32xf32>, vector<12x32xf32>, vector<1x12xf32> -> vector<1x12xf32>
    %119 = vector.broadcast %117 : vector<12x1xf32> to vector<12x12xf32>
    %120 = vector.broadcast %118 : vector<1x12xf32> to vector<12x12xf32>
    %121 = arith.addf %119, %120 : vector<12x12xf32>
    %cst_45 = arith.constant 0.000000e+00 : f32
    %122 = vector.broadcast %cst_45 : f32 to vector<12x12xf32>
    %123 = arith.cmpf ogt, %121, %122 : vector<12x12xf32>
    %cst_46 = arith.constant 2.000000e-01 : f32
    %124 = vector.broadcast %cst_46 : f32 to vector<12x12xf32>
    %125 = arith.mulf %124, %121 : vector<12x12xf32>
    %126 = arith.select %123, %121, %125 : vector<12x12xi1>, vector<12x12xf32>
    %cst_47 = arith.constant 0.000000e+00 : f32
    %127 = vector.broadcast %cst_47 : f32 to vector<12x12xf32>
    %128 = arith.cmpf ogt, %0, %127 : vector<12x12xf32>
    %cst_48 = arith.constant -1.000000e+30 : f32
    %129 = vector.broadcast %cst_48 : f32 to vector<12x12xf32>
    %130 = arith.select %128, %126, %129 : vector<12x12xi1>, vector<12x12xf32>
    %cst_49 = arith.constant dense<0xFF800000> : vector<12xf32>
    %131 = vector.multi_reduction <maximumf>, %130, %cst_49 [1] : vector<12x12xf32> to vector<12xf32>
    %132 = vector.shape_cast %131 : vector<12xf32> to vector<12x1xf32>
    %133 = vector.broadcast %132 : vector<12x1xf32> to vector<12x12xf32>
    %134 = arith.subf %130, %133 : vector<12x12xf32>
    %135 = math.exp %134 : vector<12x12xf32>
    %cst_50 = arith.constant dense<0.000000e+00> : vector<12xf32>
    %136 = vector.multi_reduction <add>, %135, %cst_50 [1] : vector<12x12xf32> to vector<12xf32>
    %137 = vector.shape_cast %136 : vector<12xf32> to vector<12x1xf32>
    %138 = tpu.reciprocal %137 {approx = true} : vector<12x1xf32> -> vector<12x1xf32>
    %139 = vector.broadcast %138 : vector<12x1xf32> to vector<12x12xf32>
    %140 = arith.mulf %135, %139 : vector<12x12xf32>
    %141 = arith.truncf %140 : vector<12x12xf32> to vector<12x12xbf16>
    %142 = arith.truncf %113 : vector<12x32xf32> to vector<12x32xbf16>
    %cst_51 = arith.constant dense<0.000000e+00> : vector<12x32xf32>
    %143 = tpu.matmul %141, %142, %cst_51 {dimension_numbers = #tpu.dot_dimension_numbers<[1], [0], [0], [1], [0, 0, 1, 1], [], []>} : vector<12x12xbf16>, vector<12x32xbf16>, vector<12x32xf32> -> vector<12x32xf32>
    %144 = arith.addf %77, %143 : vector<12x32xf32>
    %145 = vector.broadcast %81 : vector<1x32xf32> to vector<12x32xf32>
    %146 = arith.addf %144, %145 : vector<12x32xf32>
    %c168 = arith.constant 168 : index
    %c0_52 = arith.constant 0 : index
    %147 = vector.load %arg1[%c168, %c0_52] : memref<552x128xf32, #tpu.memory_space<vmem>>, vector<32x50xf32>
    %c200 = arith.constant 200 : index
    %c0_53 = arith.constant 0 : index
    %148 = vector.load %arg1[%c200, %c0_53] : memref<552x128xf32, #tpu.memory_space<vmem>>, vector<1x50xf32>
    %c208 = arith.constant 208 : index
    %c0_54 = arith.constant 0 : index
    %149 = vector.load %arg1[%c208, %c0_54] : memref<552x128xf32, #tpu.memory_space<vmem>>, vector<50x50xf32>
    %c264 = arith.constant 264 : index
    %c0_55 = arith.constant 0 : index
    %150 = vector.load %arg1[%c264, %c0_55] : memref<552x128xf32, #tpu.memory_space<vmem>>, vector<50x10xf32>
    %151 = arith.truncf %146 : vector<12x32xf32> to vector<12x32xbf16>
    %152 = arith.truncf %147 : vector<32x50xf32> to vector<32x50xbf16>
    %cst_56 = arith.constant dense<0.000000e+00> : vector<12x50xf32>
    %153 = tpu.matmul %151, %152, %cst_56 {dimension_numbers = #tpu.dot_dimension_numbers<[1], [0], [0], [1], [0, 0, 1, 1], [], []>} : vector<12x32xbf16>, vector<32x50xbf16>, vector<12x50xf32> -> vector<12x50xf32>
    %154 = arith.mulf %146, %146 : vector<12x32xf32>
    %cst_57 = arith.constant dense<0.000000e+00> : vector<12xf32>
    %155 = vector.multi_reduction <add>, %154, %cst_57 [1] : vector<12x32xf32> to vector<12xf32>
    %156 = vector.shape_cast %155 : vector<12xf32> to vector<12x1xf32>
    %157 = vector.broadcast %156 : vector<12x1xf32> to vector<12x50xf32>
    %158 = vector.broadcast %148 : vector<1x50xf32> to vector<12x50xf32>
    %159 = arith.addf %157, %158 : vector<12x50xf32>
    %cst_58 = arith.constant 2.000000e+00 : f32
    %160 = vector.broadcast %cst_58 : f32 to vector<12x50xf32>
    %161 = arith.mulf %160, %153 : vector<12x50xf32>
    %162 = arith.subf %159, %161 : vector<12x50xf32>
    %cst_59 = arith.constant 0.000000e+00 : f32
    %163 = vector.broadcast %cst_59 : f32 to vector<12x50xf32>
    %164 = arith.maximumf %162, %163 : vector<12x50xf32>
    %cst_60 = arith.constant 1.000000e+00 : f32
    %165 = vector.broadcast %cst_60 : f32 to vector<12x50xf32>
    %166 = arith.divf %164, %165 : vector<12x50xf32>
    %cst_61 = arith.constant 1.000000e+00 : f32
    %167 = vector.broadcast %cst_61 : f32 to vector<12x50xf32>
    %168 = arith.addf %167, %166 : vector<12x50xf32>
    %cst_62 = arith.constant 1.000000e+00 : f32
    %169 = vector.broadcast %cst_62 : f32 to vector<12x50xf32>
    %170 = arith.divf %169, %168 : vector<12x50xf32>
    %cst_63 = arith.constant dense<0.000000e+00> : vector<12x50xf32>
    %171 = tpu.matmul %170, %149, %cst_63 {dimension_numbers = #tpu.dot_dimension_numbers<[1], [0], [0], [1], [0, 0, 1, 1], [], []>} : vector<12x50xf32>, vector<50x50xf32>, vector<12x50xf32> -> vector<12x50xf32>
    %172 = arith.divf %170, %171 : vector<12x50xf32>
    %cst_64 = arith.constant dense<0.000000e+00> : vector<12x10xf32>
    %173 = tpu.matmul %172, %150, %cst_64 {dimension_numbers = #tpu.dot_dimension_numbers<[1], [0], [0], [1], [0, 0, 1, 1], [], []>} : vector<12x50xf32>, vector<50x10xf32>, vector<12x10xf32> -> vector<12x10xf32>
    %cst_65 = arith.constant dense<0xFF800000> : vector<12xf32>
    %174 = vector.multi_reduction <maximumf>, %173, %cst_65 [1] : vector<12x10xf32> to vector<12xf32>
    %175 = vector.shape_cast %174 : vector<12xf32> to vector<12x1xf32>
    %176 = vector.broadcast %175 : vector<12x1xf32> to vector<12x10xf32>
    %177 = arith.subf %173, %176 : vector<12x10xf32>
    %178 = math.exp %177 : vector<12x10xf32>
    %cst_66 = arith.constant dense<0.000000e+00> : vector<12xf32>
    %179 = vector.multi_reduction <add>, %178, %cst_66 [1] : vector<12x10xf32> to vector<12xf32>
    %180 = vector.shape_cast %179 : vector<12xf32> to vector<12x1xf32>
    %181 = vector.broadcast %180 : vector<12x1xf32> to vector<12x10xf32>
    %182 = arith.divf %178, %181 : vector<12x10xf32>
    %183 = arith.truncf %146 : vector<12x32xf32> to vector<12x32xbf16>
    %c320 = arith.constant 320 : index
    %c0_67 = arith.constant 0 : index
    %184 = vector.load %arg1[%c320, %c0_67] : memref<552x128xf32, #tpu.memory_space<vmem>>, vector<32x80xf32>
    %185 = arith.truncf %184 : vector<32x80xf32> to vector<32x80xbf16>
    %c352 = arith.constant 352 : index
    %c0_68 = arith.constant 0 : index
    %186 = vector.load %arg1[%c352, %c0_68] : memref<552x128xf32, #tpu.memory_space<vmem>>, vector<1x80xf32>
    %c360 = arith.constant 360 : index
    %c0_69 = arith.constant 0 : index
    %187 = vector.load %arg1[%c360, %c0_69] : memref<552x128xf32, #tpu.memory_space<vmem>>, vector<80x5xf32>
    %c440 = arith.constant 440 : index
    %c0_70 = arith.constant 0 : index
    %188 = vector.load %arg1[%c440, %c0_70] : memref<552x128xf32, #tpu.memory_space<vmem>>, vector<1x5xf32>
    %c448 = arith.constant 448 : index
    %c0_71 = arith.constant 0 : index
    %189 = vector.load %arg1[%c448, %c0_71] : memref<552x128xf32, #tpu.memory_space<vmem>>, vector<5x5xf32>
    %c456 = arith.constant 456 : index
    %c0_72 = arith.constant 0 : index
    %190 = vector.load %arg1[%c456, %c0_72] : memref<552x128xf32, #tpu.memory_space<vmem>>, vector<5x1xf32>
    %c464 = arith.constant 464 : index
    %c0_73 = arith.constant 0 : index
    %191 = vector.load %arg1[%c464, %c0_73] : memref<552x128xf32, #tpu.memory_space<vmem>>, vector<80x128xf32>
    %192 = arith.truncf %191 : vector<80x128xf32> to vector<80x128xbf16>
    %c544 = arith.constant 544 : index
    %c0_74 = arith.constant 0 : index
    %193 = vector.load %arg1[%c544, %c0_74] : memref<552x128xf32, #tpu.memory_space<vmem>>, vector<1x128xf32>
    %c32 = arith.constant 32 : index
    %c0_75 = arith.constant 0 : index
    %194 = vector.load %arg0[%c32, %c0_75] : memref<48x128xf32, #tpu.memory_space<vmem>>, vector<12x2xf32>
    %cst_76 = arith.constant 0.000000e+00 : f32
    %195 = vector.broadcast %cst_76 : f32 to vector<1x1xf32>
    %196 = vector.extract_strided_slice %194 {offsets = [0, 0], sizes = [12, 1], strides = [1, 1]} : vector<12x2xf32> to vector<12x1xf32>
    %197 = vector.broadcast %196 : vector<12x1xf32> to vector<12x10xf32>
    %198 = arith.mulf %182, %197 : vector<12x10xf32>
    %199 = arith.truncf %198 : vector<12x10xf32> to vector<12x10xbf16>
    %cst_77 = arith.constant dense<0.000000e+00> : vector<10x32xf32>
    %200 = tpu.matmul %199, %183, %cst_77 {dimension_numbers = #tpu.dot_dimension_numbers<[0], [0], [1], [1], [0, 1, 1, 1], [], []>} : vector<12x10xbf16>, vector<12x32xbf16>, vector<10x32xf32> -> vector<10x32xf32>
    %201 = arith.truncf %200 : vector<10x32xf32> to vector<10x32xbf16>
    %cst_78 = arith.constant dense<0.000000e+00> : vector<10x80xf32>
    %202 = tpu.matmul %201, %185, %cst_78 {dimension_numbers = #tpu.dot_dimension_numbers<[1], [0], [0], [1], [0, 0, 1, 1], [], []>} : vector<10x32xbf16>, vector<32x80xbf16>, vector<10x80xf32> -> vector<10x80xf32>
    %203 = vector.broadcast %186 : vector<1x80xf32> to vector<10x80xf32>
    %204 = arith.addf %202, %203 : vector<10x80xf32>
    %cst_79 = arith.constant 0.000000e+00 : f32
    %205 = vector.broadcast %cst_79 : f32 to vector<10x80xf32>
    %206 = arith.cmpf ogt, %204, %205 : vector<10x80xf32>
    %cst_80 = arith.constant 0.00999999977 : f32
    %207 = vector.broadcast %cst_80 : f32 to vector<10x80xf32>
    %208 = arith.mulf %207, %204 : vector<10x80xf32>
    %209 = arith.select %206, %204, %208 : vector<10x80xi1>, vector<10x80xf32>
    %cst_81 = arith.constant dense<0.000000e+00> : vector<10xf32>
    %210 = vector.multi_reduction <add>, %198, %cst_81 [0] : vector<12x10xf32> to vector<10xf32>
    %211 = vector.shape_cast %210 : vector<10xf32> to vector<1x10xf32>
    %cst_82 = arith.constant 0.000000e+00 : f32
    %212 = vector.broadcast %cst_82 : f32 to vector<1x10xf32>
    %213 = arith.cmpf oeq, %211, %212 : vector<1x10xf32>
    %cst_83 = arith.constant 1.000000e+00 : f32
    %214 = vector.broadcast %cst_83 : f32 to vector<1x10xf32>
    %215 = arith.select %213, %214, %211 : vector<1x10xi1>, vector<1x10xf32>
    %216 = arith.mulf %198, %198 : vector<12x10xf32>
    %217 = vector.broadcast %215 : vector<1x10xf32> to vector<12x10xf32>
    %218 = arith.divf %216, %217 : vector<12x10xf32>
    %cst_84 = arith.constant dense<0.000000e+00> : vector<12xf32>
    %219 = vector.multi_reduction <add>, %218, %cst_84 [1] : vector<12x10xf32> to vector<12xf32>
    %220 = vector.shape_cast %219 : vector<12xf32> to vector<12x1xf32>
    %cst_85 = arith.constant dense<0.000000e+00> : vector<12xf32>
    %221 = vector.multi_reduction <add>, %198, %cst_85 [1] : vector<12x10xf32> to vector<12xf32>
    %222 = vector.shape_cast %221 : vector<12xf32> to vector<12x1xf32>
    %cst_86 = arith.constant 0.000000e+00 : f32
    %223 = vector.broadcast %cst_86 : f32 to vector<12x1xf32>
    %224 = arith.cmpf oeq, %222, %223 : vector<12x1xf32>
    %cst_87 = arith.constant 1.000000e+00 : f32
    %225 = vector.broadcast %cst_87 : f32 to vector<12x1xf32>
    %226 = arith.select %224, %225, %220 : vector<12x1xi1>, vector<12x1xf32>
    %227 = vector.broadcast %226 : vector<12x1xf32> to vector<12x10xf32>
    %228 = arith.divf %218, %227 : vector<12x10xf32>
    %cst_88 = arith.constant 1.000000e-15 : f32
    %229 = vector.broadcast %cst_88 : f32 to vector<12x10xf32>
    %230 = arith.maximumf %228, %229 : vector<12x10xf32>
    %cst_89 = arith.constant 1.000000e-15 : f32
    %231 = vector.broadcast %cst_89 : f32 to vector<12x10xf32>
    %232 = arith.maximumf %198, %231 : vector<12x10xf32>
    %233 = math.log %230 : vector<12x10xf32>
    %234 = math.log %232 : vector<12x10xf32>
    %235 = arith.subf %233, %234 : vector<12x10xf32>
    %236 = arith.mulf %230, %235 : vector<12x10xf32>
    %237 = vector.shape_cast %236 : vector<12x10xf32> to vector<1x12x10xf32>
    %cst_90 = arith.constant dense<0.000000e+00> : vector<1xf32>
    %238 = vector.multi_reduction <add>, %237, %cst_90 [1, 2] : vector<1x12x10xf32> to vector<1xf32>
    %239 = vector.shape_cast %238 : vector<1xf32> to vector<1x1x1xf32>
    %240 = vector.extract %239[0, 0, 0] : f32 from vector<1x1x1xf32>
    %241 = arith.truncf %209 : vector<10x80xf32> to vector<10x80xbf16>
    %242 = arith.truncf %187 : vector<80x5xf32> to vector<80x5xbf16>
    %cst_91 = arith.constant dense<0.000000e+00> : vector<10x5xf32>
    %243 = tpu.matmul %241, %242, %cst_91 {dimension_numbers = #tpu.dot_dimension_numbers<[1], [0], [0], [1], [0, 0, 1, 1], [], []>} : vector<10x80xbf16>, vector<80x5xbf16>, vector<10x5xf32> -> vector<10x5xf32>
    %244 = arith.mulf %209, %209 : vector<10x80xf32>
    %cst_92 = arith.constant dense<0.000000e+00> : vector<10xf32>
    %245 = vector.multi_reduction <add>, %244, %cst_92 [1] : vector<10x80xf32> to vector<10xf32>
    %246 = vector.shape_cast %245 : vector<10xf32> to vector<10x1xf32>
    %247 = vector.broadcast %246 : vector<10x1xf32> to vector<10x5xf32>
    %248 = vector.broadcast %188 : vector<1x5xf32> to vector<10x5xf32>
    %249 = arith.addf %247, %248 : vector<10x5xf32>
    %cst_93 = arith.constant 2.000000e+00 : f32
    %250 = vector.broadcast %cst_93 : f32 to vector<10x5xf32>
    %251 = arith.mulf %250, %243 : vector<10x5xf32>
    %252 = arith.subf %249, %251 : vector<10x5xf32>
    %cst_94 = arith.constant 0.000000e+00 : f32
    %253 = vector.broadcast %cst_94 : f32 to vector<10x5xf32>
    %254 = arith.maximumf %252, %253 : vector<10x5xf32>
    %cst_95 = arith.constant 1.000000e+00 : f32
    %255 = vector.broadcast %cst_95 : f32 to vector<10x5xf32>
    %256 = arith.divf %254, %255 : vector<10x5xf32>
    %cst_96 = arith.constant 1.000000e+00 : f32
    %257 = vector.broadcast %cst_96 : f32 to vector<10x5xf32>
    %258 = arith.addf %257, %256 : vector<10x5xf32>
    %cst_97 = arith.constant 1.000000e+00 : f32
    %259 = vector.broadcast %cst_97 : f32 to vector<10x5xf32>
    %260 = arith.divf %259, %258 : vector<10x5xf32>
    %cst_98 = arith.constant dense<0.000000e+00> : vector<10x5xf32>
    %261 = tpu.matmul %260, %189, %cst_98 {dimension_numbers = #tpu.dot_dimension_numbers<[1], [0], [0], [1], [0, 0, 1, 1], [], []>} : vector<10x5xf32>, vector<5x5xf32>, vector<10x5xf32> -> vector<10x5xf32>
    %262 = arith.divf %260, %261 : vector<10x5xf32>
    %cst_99 = arith.constant dense<0.000000e+00> : vector<10x1xf32>
    %263 = tpu.matmul %262, %190, %cst_99 {dimension_numbers = #tpu.dot_dimension_numbers<[1], [0], [0], [1], [0, 0, 1, 1], [], []>} : vector<10x5xf32>, vector<5x1xf32>, vector<10x1xf32> -> vector<10x1xf32>
    %cst_100 = arith.constant dense<0xFF800000> : vector<10xf32>
    %264 = vector.multi_reduction <maximumf>, %263, %cst_100 [1] : vector<10x1xf32> to vector<10xf32>
    %265 = vector.shape_cast %264 : vector<10xf32> to vector<10x1xf32>
    %266 = arith.subf %263, %265 : vector<10x1xf32>
    %267 = math.exp %266 : vector<10x1xf32>
    %cst_101 = arith.constant dense<0.000000e+00> : vector<10xf32>
    %268 = vector.multi_reduction <add>, %267, %cst_101 [1] : vector<10x1xf32> to vector<10xf32>
    %269 = vector.shape_cast %268 : vector<10xf32> to vector<10x1xf32>
    %270 = arith.divf %267, %269 : vector<10x1xf32>
    %271 = arith.truncf %270 : vector<10x1xf32> to vector<10x1xbf16>
    %272 = arith.truncf %209 : vector<10x80xf32> to vector<10x80xbf16>
    %cst_102 = arith.constant dense<0.000000e+00> : vector<1x80xf32>
    %273 = tpu.matmul %271, %272, %cst_102 {dimension_numbers = #tpu.dot_dimension_numbers<[0], [0], [1], [1], [0, 1, 1, 1], [], []>} : vector<10x1xbf16>, vector<10x80xbf16>, vector<1x80xf32> -> vector<1x80xf32>
    %274 = arith.truncf %273 : vector<1x80xf32> to vector<1x80xbf16>
    %cst_103 = arith.constant dense<0.000000e+00> : vector<1x128xf32>
    %275 = tpu.matmul %274, %192, %cst_103 {dimension_numbers = #tpu.dot_dimension_numbers<[1], [0], [0], [1], [0, 0, 1, 1], [], []>} : vector<1x80xbf16>, vector<80x128xbf16>, vector<1x128xf32> -> vector<1x128xf32>
    %276 = arith.addf %275, %193 : vector<1x128xf32>
    %cst_104 = arith.constant dense<0xFF800000> : vector<1xf32>
    %277 = vector.multi_reduction <maximumf>, %276, %cst_104 [1] : vector<1x128xf32> to vector<1xf32>
    %278 = vector.shape_cast %277 : vector<1xf32> to vector<1x1xf32>
    %279 = vector.broadcast %278 : vector<1x1xf32> to vector<1x128xf32>
    %280 = arith.subf %276, %279 : vector<1x128xf32>
    %281 = math.exp %280 : vector<1x128xf32>
    %cst_105 = arith.constant dense<0.000000e+00> : vector<1xf32>
    %282 = vector.multi_reduction <add>, %281, %cst_105 [1] : vector<1x128xf32> to vector<1xf32>
    %283 = vector.shape_cast %282 : vector<1xf32> to vector<1x1xf32>
    %284 = math.log %283 : vector<1x1xf32>
    %285 = vector.broadcast %284 : vector<1x1xf32> to vector<1x128xf32>
    %286 = arith.subf %280, %285 : vector<1x128xf32>
    %c0_106 = arith.constant 0 : index
    %c0_107 = arith.constant 0 : index
    %287 = vector.load %arg2[%c0_106, %c0_107] : memref<2x128xf32, #tpu.memory_space<vmem>>, vector<1x128xf32>
    tpu.vector_store %arg2[%c0_106, %c0_107], %286 {strides = array<i32>} : memref<2x128xf32, #tpu.memory_space<vmem>>, vector<1x128xf32>,
    %288 = vector.broadcast %240 : f32 to vector<1x1xf32>
    %289 = arith.addf %195, %288 : vector<1x1xf32>
    %cst_108 = arith.constant dense<0.000000e+00> : vector<1xf32>
    %290 = vector.multi_reduction <add>, %270, %cst_108 [0] : vector<10x1xf32> to vector<1xf32>
    %291 = vector.shape_cast %290 : vector<1xf32> to vector<1x1xf32>
    %cst_109 = arith.constant 0.000000e+00 : f32
    %292 = vector.broadcast %cst_109 : f32 to vector<1x1xf32>
    %293 = arith.cmpf oeq, %291, %292 : vector<1x1xf32>
    %cst_110 = arith.constant 1.000000e+00 : f32
    %294 = vector.broadcast %cst_110 : f32 to vector<1x1xf32>
    %295 = arith.select %293, %294, %291 : vector<1x1xi1>, vector<1x1xf32>
    %296 = arith.mulf %270, %270 : vector<10x1xf32>
    %297 = vector.broadcast %295 : vector<1x1xf32> to vector<10x1xf32>
    %298 = arith.divf %296, %297 : vector<10x1xf32>
    %cst_111 = arith.constant dense<0.000000e+00> : vector<10xf32>
    %299 = vector.multi_reduction <add>, %298, %cst_111 [1] : vector<10x1xf32> to vector<10xf32>
    %300 = vector.shape_cast %299 : vector<10xf32> to vector<10x1xf32>
    %cst_112 = arith.constant dense<0.000000e+00> : vector<10xf32>
    %301 = vector.multi_reduction <add>, %270, %cst_112 [1] : vector<10x1xf32> to vector<10xf32>
    %302 = vector.shape_cast %301 : vector<10xf32> to vector<10x1xf32>
    %cst_113 = arith.constant 0.000000e+00 : f32
    %303 = vector.broadcast %cst_113 : f32 to vector<10x1xf32>
    %304 = arith.cmpf oeq, %302, %303 : vector<10x1xf32>
    %cst_114 = arith.constant 1.000000e+00 : f32
    %305 = vector.broadcast %cst_114 : f32 to vector<10x1xf32>
    %306 = arith.select %304, %305, %300 : vector<10x1xi1>, vector<10x1xf32>
    %307 = arith.divf %298, %306 : vector<10x1xf32>
    %cst_115 = arith.constant 1.000000e-15 : f32
    %308 = vector.broadcast %cst_115 : f32 to vector<10x1xf32>
    %309 = arith.maximumf %307, %308 : vector<10x1xf32>
    %cst_116 = arith.constant 1.000000e-15 : f32
    %310 = vector.broadcast %cst_116 : f32 to vector<10x1xf32>
    %311 = arith.maximumf %270, %310 : vector<10x1xf32>
    %312 = math.log %309 : vector<10x1xf32>
    %313 = math.log %311 : vector<10x1xf32>
    %314 = arith.subf %312, %313 : vector<10x1xf32>
    %315 = arith.mulf %309, %314 : vector<10x1xf32>
    %316 = vector.shape_cast %315 : vector<10x1xf32> to vector<1x10x1xf32>
    %cst_117 = arith.constant dense<0.000000e+00> : vector<1xf32>
    %317 = vector.multi_reduction <add>, %316, %cst_117 [1, 2] : vector<1x10x1xf32> to vector<1xf32>
    %318 = vector.shape_cast %317 : vector<1xf32> to vector<1x1x1xf32>
    %319 = vector.extract %318[0, 0, 0] : f32 from vector<1x1x1xf32>
    %320 = vector.broadcast %319 : f32 to vector<1x1xf32>
    %321 = arith.addf %289, %320 : vector<1x1xf32>
    %322 = vector.extract_strided_slice %194 {offsets = [0, 1], sizes = [12, 1], strides = [1, 1]} : vector<12x2xf32> to vector<12x1xf32>
    %323 = vector.broadcast %322 : vector<12x1xf32> to vector<12x10xf32>
    %324 = arith.mulf %182, %323 : vector<12x10xf32>
    %325 = arith.truncf %324 : vector<12x10xf32> to vector<12x10xbf16>
    %cst_118 = arith.constant dense<0.000000e+00> : vector<10x32xf32>
    %326 = tpu.matmul %325, %183, %cst_118 {dimension_numbers = #tpu.dot_dimension_numbers<[0], [0], [1], [1], [0, 1, 1, 1], [], []>} : vector<12x10xbf16>, vector<12x32xbf16>, vector<10x32xf32> -> vector<10x32xf32>
    %327 = arith.truncf %326 : vector<10x32xf32> to vector<10x32xbf16>
    %cst_119 = arith.constant dense<0.000000e+00> : vector<10x80xf32>
    %328 = tpu.matmul %327, %185, %cst_119 {dimension_numbers = #tpu.dot_dimension_numbers<[1], [0], [0], [1], [0, 0, 1, 1], [], []>} : vector<10x32xbf16>, vector<32x80xbf16>, vector<10x80xf32> -> vector<10x80xf32>
    %329 = vector.broadcast %186 : vector<1x80xf32> to vector<10x80xf32>
    %330 = arith.addf %328, %329 : vector<10x80xf32>
    %cst_120 = arith.constant 0.000000e+00 : f32
    %331 = vector.broadcast %cst_120 : f32 to vector<10x80xf32>
    %332 = arith.cmpf ogt, %330, %331 : vector<10x80xf32>
    %cst_121 = arith.constant 0.00999999977 : f32
    %333 = vector.broadcast %cst_121 : f32 to vector<10x80xf32>
    %334 = arith.mulf %333, %330 : vector<10x80xf32>
    %335 = arith.select %332, %330, %334 : vector<10x80xi1>, vector<10x80xf32>
    %cst_122 = arith.constant dense<0.000000e+00> : vector<10xf32>
    %336 = vector.multi_reduction <add>, %324, %cst_122 [0] : vector<12x10xf32> to vector<10xf32>
    %337 = vector.shape_cast %336 : vector<10xf32> to vector<1x10xf32>
    %cst_123 = arith.constant 0.000000e+00 : f32
    %338 = vector.broadcast %cst_123 : f32 to vector<1x10xf32>
    %339 = arith.cmpf oeq, %337, %338 : vector<1x10xf32>
    %cst_124 = arith.constant 1.000000e+00 : f32
    %340 = vector.broadcast %cst_124 : f32 to vector<1x10xf32>
    %341 = arith.select %339, %340, %337 : vector<1x10xi1>, vector<1x10xf32>
    %342 = arith.mulf %324, %324 : vector<12x10xf32>
    %343 = vector.broadcast %341 : vector<1x10xf32> to vector<12x10xf32>
    %344 = arith.divf %342, %343 : vector<12x10xf32>
    %cst_125 = arith.constant dense<0.000000e+00> : vector<12xf32>
    %345 = vector.multi_reduction <add>, %344, %cst_125 [1] : vector<12x10xf32> to vector<12xf32>
    %346 = vector.shape_cast %345 : vector<12xf32> to vector<12x1xf32>
    %cst_126 = arith.constant dense<0.000000e+00> : vector<12xf32>
    %347 = vector.multi_reduction <add>, %324, %cst_126 [1] : vector<12x10xf32> to vector<12xf32>
    %348 = vector.shape_cast %347 : vector<12xf32> to vector<12x1xf32>
    %cst_127 = arith.constant 0.000000e+00 : f32
    %349 = vector.broadcast %cst_127 : f32 to vector<12x1xf32>
    %350 = arith.cmpf oeq, %348, %349 : vector<12x1xf32>
    %cst_128 = arith.constant 1.000000e+00 : f32
    %351 = vector.broadcast %cst_128 : f32 to vector<12x1xf32>
    %352 = arith.select %350, %351, %346 : vector<12x1xi1>, vector<12x1xf32>
    %353 = vector.broadcast %352 : vector<12x1xf32> to vector<12x10xf32>
    %354 = arith.divf %344, %353 : vector<12x10xf32>
    %cst_129 = arith.constant 1.000000e-15 : f32
    %355 = vector.broadcast %cst_129 : f32 to vector<12x10xf32>
    %356 = arith.maximumf %354, %355 : vector<12x10xf32>
    %cst_130 = arith.constant 1.000000e-15 : f32
    %357 = vector.broadcast %cst_130 : f32 to vector<12x10xf32>
    %358 = arith.maximumf %324, %357 : vector<12x10xf32>
    %359 = math.log %356 : vector<12x10xf32>
    %360 = math.log %358 : vector<12x10xf32>
    %361 = arith.subf %359, %360 : vector<12x10xf32>
    %362 = arith.mulf %356, %361 : vector<12x10xf32>
    %363 = vector.shape_cast %362 : vector<12x10xf32> to vector<1x12x10xf32>
    %cst_131 = arith.constant dense<0.000000e+00> : vector<1xf32>
    %364 = vector.multi_reduction <add>, %363, %cst_131 [1, 2] : vector<1x12x10xf32> to vector<1xf32>
    %365 = vector.shape_cast %364 : vector<1xf32> to vector<1x1x1xf32>
    %366 = vector.extract %365[0, 0, 0] : f32 from vector<1x1x1xf32>
    %367 = arith.truncf %335 : vector<10x80xf32> to vector<10x80xbf16>
    %368 = arith.truncf %187 : vector<80x5xf32> to vector<80x5xbf16>
    %cst_132 = arith.constant dense<0.000000e+00> : vector<10x5xf32>
    %369 = tpu.matmul %367, %368, %cst_132 {dimension_numbers = #tpu.dot_dimension_numbers<[1], [0], [0], [1], [0, 0, 1, 1], [], []>} : vector<10x80xbf16>, vector<80x5xbf16>, vector<10x5xf32> -> vector<10x5xf32>
    %370 = arith.mulf %335, %335 : vector<10x80xf32>
    %cst_133 = arith.constant dense<0.000000e+00> : vector<10xf32>
    %371 = vector.multi_reduction <add>, %370, %cst_133 [1] : vector<10x80xf32> to vector<10xf32>
    %372 = vector.shape_cast %371 : vector<10xf32> to vector<10x1xf32>
    %373 = vector.broadcast %372 : vector<10x1xf32> to vector<10x5xf32>
    %374 = vector.broadcast %188 : vector<1x5xf32> to vector<10x5xf32>
    %375 = arith.addf %373, %374 : vector<10x5xf32>
    %cst_134 = arith.constant 2.000000e+00 : f32
    %376 = vector.broadcast %cst_134 : f32 to vector<10x5xf32>
    %377 = arith.mulf %376, %369 : vector<10x5xf32>
    %378 = arith.subf %375, %377 : vector<10x5xf32>
    %cst_135 = arith.constant 0.000000e+00 : f32
    %379 = vector.broadcast %cst_135 : f32 to vector<10x5xf32>
    %380 = arith.maximumf %378, %379 : vector<10x5xf32>
    %cst_136 = arith.constant 1.000000e+00 : f32
    %381 = vector.broadcast %cst_136 : f32 to vector<10x5xf32>
    %382 = arith.divf %380, %381 : vector<10x5xf32>
    %cst_137 = arith.constant 1.000000e+00 : f32
    %383 = vector.broadcast %cst_137 : f32 to vector<10x5xf32>
    %384 = arith.addf %383, %382 : vector<10x5xf32>
    %cst_138 = arith.constant 1.000000e+00 : f32
    %385 = vector.broadcast %cst_138 : f32 to vector<10x5xf32>
    %386 = arith.divf %385, %384 : vector<10x5xf32>
    %cst_139 = arith.constant dense<0.000000e+00> : vector<10x5xf32>
    %387 = tpu.matmul %386, %189, %cst_139 {dimension_numbers = #tpu.dot_dimension_numbers<[1], [0], [0], [1], [0, 0, 1, 1], [], []>} : vector<10x5xf32>, vector<5x5xf32>, vector<10x5xf32> -> vector<10x5xf32>
    %388 = arith.divf %386, %387 : vector<10x5xf32>
    %cst_140 = arith.constant dense<0.000000e+00> : vector<10x1xf32>
    %389 = tpu.matmul %388, %190, %cst_140 {dimension_numbers = #tpu.dot_dimension_numbers<[1], [0], [0], [1], [0, 0, 1, 1], [], []>} : vector<10x5xf32>, vector<5x1xf32>, vector<10x1xf32> -> vector<10x1xf32>
    %cst_141 = arith.constant dense<0xFF800000> : vector<10xf32>
    %390 = vector.multi_reduction <maximumf>, %389, %cst_141 [1] : vector<10x1xf32> to vector<10xf32>
    %391 = vector.shape_cast %390 : vector<10xf32> to vector<10x1xf32>
    %392 = arith.subf %389, %391 : vector<10x1xf32>
    %393 = math.exp %392 : vector<10x1xf32>
    %cst_142 = arith.constant dense<0.000000e+00> : vector<10xf32>
    %394 = vector.multi_reduction <add>, %393, %cst_142 [1] : vector<10x1xf32> to vector<10xf32>
    %395 = vector.shape_cast %394 : vector<10xf32> to vector<10x1xf32>
    %396 = arith.divf %393, %395 : vector<10x1xf32>
    %397 = arith.truncf %396 : vector<10x1xf32> to vector<10x1xbf16>
    %398 = arith.truncf %335 : vector<10x80xf32> to vector<10x80xbf16>
    %cst_143 = arith.constant dense<0.000000e+00> : vector<1x80xf32>
    %399 = tpu.matmul %397, %398, %cst_143 {dimension_numbers = #tpu.dot_dimension_numbers<[0], [0], [1], [1], [0, 1, 1, 1], [], []>} : vector<10x1xbf16>, vector<10x80xbf16>, vector<1x80xf32> -> vector<1x80xf32>
    %400 = arith.truncf %399 : vector<1x80xf32> to vector<1x80xbf16>
    %cst_144 = arith.constant dense<0.000000e+00> : vector<1x128xf32>
    %401 = tpu.matmul %400, %192, %cst_144 {dimension_numbers = #tpu.dot_dimension_numbers<[1], [0], [0], [1], [0, 0, 1, 1], [], []>} : vector<1x80xbf16>, vector<80x128xbf16>, vector<1x128xf32> -> vector<1x128xf32>
    %402 = arith.addf %401, %193 : vector<1x128xf32>
    %cst_145 = arith.constant dense<0xFF800000> : vector<1xf32>
    %403 = vector.multi_reduction <maximumf>, %402, %cst_145 [1] : vector<1x128xf32> to vector<1xf32>
    %404 = vector.shape_cast %403 : vector<1xf32> to vector<1x1xf32>
    %405 = vector.broadcast %404 : vector<1x1xf32> to vector<1x128xf32>
    %406 = arith.subf %402, %405 : vector<1x128xf32>
    %407 = math.exp %406 : vector<1x128xf32>
    %cst_146 = arith.constant dense<0.000000e+00> : vector<1xf32>
    %408 = vector.multi_reduction <add>, %407, %cst_146 [1] : vector<1x128xf32> to vector<1xf32>
    %409 = vector.shape_cast %408 : vector<1xf32> to vector<1x1xf32>
    %410 = math.log %409 : vector<1x1xf32>
    %411 = vector.broadcast %410 : vector<1x1xf32> to vector<1x128xf32>
    %412 = arith.subf %406, %411 : vector<1x128xf32>
    %c1 = arith.constant 1 : index
    %c0_147 = arith.constant 0 : index
    %413 = vector.load %arg2[%c1, %c0_147] : memref<2x128xf32, #tpu.memory_space<vmem>>, vector<1x128xf32>
    tpu.vector_store %arg2[%c1, %c0_147], %412 {strides = array<i32>} : memref<2x128xf32, #tpu.memory_space<vmem>>, vector<1x128xf32>,
    %414 = vector.broadcast %366 : f32 to vector<1x1xf32>
    %415 = arith.addf %321, %414 : vector<1x1xf32>
    %cst_148 = arith.constant dense<0.000000e+00> : vector<1xf32>
    %416 = vector.multi_reduction <add>, %396, %cst_148 [0] : vector<10x1xf32> to vector<1xf32>
    %417 = vector.shape_cast %416 : vector<1xf32> to vector<1x1xf32>
    %cst_149 = arith.constant 0.000000e+00 : f32
    %418 = vector.broadcast %cst_149 : f32 to vector<1x1xf32>
    %419 = arith.cmpf oeq, %417, %418 : vector<1x1xf32>
    %cst_150 = arith.constant 1.000000e+00 : f32
    %420 = vector.broadcast %cst_150 : f32 to vector<1x1xf32>
    %421 = arith.select %419, %420, %417 : vector<1x1xi1>, vector<1x1xf32>
    %422 = arith.mulf %396, %396 : vector<10x1xf32>
    %423 = vector.broadcast %421 : vector<1x1xf32> to vector<10x1xf32>
    %424 = arith.divf %422, %423 : vector<10x1xf32>
    %cst_151 = arith.constant dense<0.000000e+00> : vector<10xf32>
    %425 = vector.multi_reduction <add>, %424, %cst_151 [1] : vector<10x1xf32> to vector<10xf32>
    %426 = vector.shape_cast %425 : vector<10xf32> to vector<10x1xf32>
    %cst_152 = arith.constant dense<0.000000e+00> : vector<10xf32>
    %427 = vector.multi_reduction <add>, %396, %cst_152 [1] : vector<10x1xf32> to vector<10xf32>
    %428 = vector.shape_cast %427 : vector<10xf32> to vector<10x1xf32>
    %cst_153 = arith.constant 0.000000e+00 : f32
    %429 = vector.broadcast %cst_153 : f32 to vector<10x1xf32>
    %430 = arith.cmpf oeq, %428, %429 : vector<10x1xf32>
    %cst_154 = arith.constant 1.000000e+00 : f32
    %431 = vector.broadcast %cst_154 : f32 to vector<10x1xf32>
    %432 = arith.select %430, %431, %426 : vector<10x1xi1>, vector<10x1xf32>
    %433 = arith.divf %424, %432 : vector<10x1xf32>
    %cst_155 = arith.constant 1.000000e-15 : f32
    %434 = vector.broadcast %cst_155 : f32 to vector<10x1xf32>
    %435 = arith.maximumf %433, %434 : vector<10x1xf32>
    %cst_156 = arith.constant 1.000000e-15 : f32
    %436 = vector.broadcast %cst_156 : f32 to vector<10x1xf32>
    %437 = arith.maximumf %396, %436 : vector<10x1xf32>
    %438 = math.log %435 : vector<10x1xf32>
    %439 = math.log %437 : vector<10x1xf32>
    %440 = arith.subf %438, %439 : vector<10x1xf32>
    %441 = arith.mulf %435, %440 : vector<10x1xf32>
    %442 = vector.shape_cast %441 : vector<10x1xf32> to vector<1x10x1xf32>
    %cst_157 = arith.constant dense<0.000000e+00> : vector<1xf32>
    %443 = vector.multi_reduction <add>, %442, %cst_157 [1, 2] : vector<1x10x1xf32> to vector<1xf32>
    %444 = vector.shape_cast %443 : vector<1xf32> to vector<1x1x1xf32>
    %445 = vector.extract %444[0, 0, 0] : f32 from vector<1x1x1xf32>
    %446 = vector.broadcast %445 : f32 to vector<1x1xf32>
    %447 = arith.addf %415, %446 : vector<1x1xf32>
    %cst_158 = arith.constant 2.000000e+00 : f32
    %448 = vector.broadcast %cst_158 : f32 to vector<1x1xf32>
    %449 = arith.divf %447, %448 : vector<1x1xf32>
    %c0_159 = arith.constant 0 : index
    %c0_160 = arith.constant 0 : index
    %450 = vector.load %arg3[%c0_159, %c0_160] : memref<1x1xf32, #tpu.memory_space<vmem>>, vector<1x1xf32>
    tpu.vector_store %arg3[%c0_159, %c0_160], %449 {strides = array<i32>} : memref<1x1xf32, #tpu.memory_space<vmem>>, vector<1x1xf32>,
    return
  }
}

</mosaic_0001>

<llo_original>
// kernel: tpu_custom_call.1
$region0: #{tpu_custom_call.1}
  #allocation0 [shape = 'u32[]', space=smem, size = 0x4, offset = 0x4, fixed_abs, tag = 'smem constant byte address 0x4 - core index']
  #allocation1 [shape = 'u32[144,128]{1,0:T(1,128)}', space=vmem, size = 0x12000, scoped, tag = 'internal scratch']
  %s0 = inlined_call_operand.hbm [shape: f32[48,128], index: 0, kind: input, shape index: {}]
  %s1 = inlined_call_operand.hbm [shape: f32[552,128], index: 1, kind: input, shape index: {}]
  %s2 = inlined_call_operand.hbm [shape: f32[2,128], index: 2, kind: output, shape index: {0}]
  %s3 = inlined_call_operand.hbm [shape: f32[1,1], index: 3, kind: output, shape index: {1}]
  %4 = xla_tuple %s2, %s3
  %s5 = sld [smem:[#allocation0]]
  $region34: #{tpu_custom_call.1} parent=0
    _
  %s7 = ssub.s32 1, %s5
  %s8 = scalar_select 0, %s7, %s5
  $region1: #{tpu_custom_call.1} parent=0
    #allocation2 [shape = 'u8[24576]{0}', space=vmem, size = 0x6000, scoped, tag = 'input window, operand 0, single buffered']
    #allocation3 [shape = 's32[1]{0}', space=sflag, size = 0x4, scoped, tag = 'scoped memory for tpu_custom_call.1']
    #allocation4 [shape = 's32[1]{0}', space=sflag, size = 0x4, scoped, tag = 'scoped memory for tpu_custom_call.1']
    #allocation5 [shape = 'u8[282624]{0}', space=vmem, size = 0x45000, scoped, tag = 'input window, operand 1, single buffered']
    #allocation6 [shape = 's32[1]{0}', space=sflag, size = 0x4, scoped, tag = 'scoped memory for tpu_custom_call.1']
    #allocation7 [shape = 'u8[1024]{0}', space=vmem, size = 0x400, scoped, tag = 'output window, operand 0, single buffered']
    #allocation8 [shape = 'u8[512]{0}', space=vmem, size = 0x400, scoped, tag = 'output window, operand 1, single buffered']
    #allocation9 [shape = 's32[1]{0}', space=sflag, size = 0x4, scoped, tag = 'scoped memory for tpu_custom_call.1']
    %9 = vsyncpa [#allocation3], 0
    %10 = vsyncpa [#allocation6], 0
    %11 = vsyncpa [#allocation4], 0
    %12 = vsyncpa [#allocation9], 0
    // Predicated region
    $region2: #{tpu_custom_call.1} parent=1 // pred_check
      _
    $region3: #{tpu_custom_call.1} parent=1 // pred_check_branch
      %14 = sbr.rel (0) target = $region5
    $region4: #{tpu_custom_call.1} parent=1 // pred_region
      %s16 = ssub.s32 768, 768
      %17 = vsyncadd [#allocation3], %s16
      %s18 = sshll.u32 [#allocation2], 4
      %s19 = int_to_ptr.vmem [resolvable:$true] %s18
      %24 = dma.hbm_to_vmem [thread:$0]  %s0, 768, %s19, [#allocation3], 128, 128, 8
    $region5: #{tpu_custom_call.1} parent=1 // pred_fallthru
      _
    // Predicated region
    $region6: #{tpu_custom_call.1} parent=1 // pred_check
      _
    $region7: #{tpu_custom_call.1} parent=1 // pred_check_branch
      %26 = sbr.rel (0) target = $region9
    $region8: #{tpu_custom_call.1} parent=1 // pred_region
      %s28 = ssub.s32 8832, 8832
      %29 = vsyncadd [#allocation6], %s28
      %s30 = sshll.u32 [#allocation5], 4
      %s31 = int_to_ptr.vmem [resolvable:$true] %s30
      %36 = dma.hbm_to_vmem [thread:$0]  %s1, 8832, %s31, [#allocation6], 128, 128, 8
    $region9: #{tpu_custom_call.1} parent=1 // pred_fallthru
      _
    // Predicated region
    $region10: #{tpu_custom_call.1} parent=1 // pred_check
      _
    $region11: #{tpu_custom_call.1} parent=1 // pred_check_branch
      %38 = sbr.rel (0) target = $region13
    $region12: #{tpu_custom_call.1} parent=1 // pred_region
      %39 = dma.done [#allocation3], 768
    $region13: #{tpu_custom_call.1} parent=1 // pred_fallthru
      _
    // Predicated region
    $region14: #{tpu_custom_call.1} parent=1 // pred_check
      _
    $region15: #{tpu_custom_call.1} parent=1 // pred_check_branch
      %41 = sbr.rel (0) target = $region17
    $region16: #{tpu_custom_call.1} parent=1 // pred_region
      %42 = dma.done [#allocation6], 8832
    $region17: #{tpu_custom_call.1} parent=1 // pred_fallthru
      _
    %v44 = vld [vmem:[#allocation2 + $0x10] sm:$0xff]
    %v45 = vld [vmem:[#allocation2 + $0x18] sm:$0xf]
    %v46 = vld [vmem:[#allocation2] sm:$0xff]
    %v47 = vld [vmem:[#allocation2 + $0x8] sm:$0xf]
    %v48 = vpack.c.bf16 %v47, %v46
    %v49 = vld [vmem:[#allocation5] sm:$0xff]
    %v50 = vld [vmem:[#allocation5 + $0x8] sm:$0xff]
    %v51 = vpack.c.bf16 %v50, %v49
    %v52 = vld [vmem:[#allocation5 + $0x10] sm:$0x1]
    %v53 = vlaneseq
    %v54 = vshrl.u32 %v53, 7
    %v55 = vsub.s32 0, %v54
    %v56 = vrot.slane %v52, %v55
    %vm57 = vcmask 130048
    %v59 = vsel %vm57, %v48, 0
    %61 = vmatprep.subr.bf16.mxu0 0
    %62 = vmatpush1.bf16.msra.mxu0 %v51
    %63 = vmatprep.subr.bf16.mxu0 0
    %64 = vmatpush1.bf16.msra.mxu0 0
    %65 = vmatprep.subr.bf16.mxu0 0
    %66 = vmatpush1.bf16.msra.mxu0 0
    %67 = vmatprep.subr.bf16.mxu0 0
    %68 = vmatpush1.bf16.msra.mxu0 0
    %69 = vmatprep.subr.bf16.mxu0 0
    %70 = vmatpush1.bf16.msra.mxu0 0
    %71 = vmatprep.subr.bf16.mxu0 0
    %72 = vmatpush1.bf16.msra.mxu0 0
    %73 = vmatprep.subr.bf16.mxu0 0
    %74 = vmatpush1.bf16.msra.mxu0 0
    %75 = vmatprep.subr.bf16.mxu0 0
    %76 = vmatpush1.bf16.msra.mxu0 0
    %77 = vmatprep.subr.bf16.mxu0 0
    %78 = vmatpush1.bf16.msra.mxu0 0
    %79 = vmatprep.subr.bf16.mxu0 0
    %80 = vmatpush1.bf16.msra.mxu0 0
    %81 = vmatprep.subr.bf16.mxu0 0
    %82 = vmatpush1.bf16.msra.mxu0 0
    %83 = vmatprep.subr.bf16.mxu0 0
    %84 = vmatpush1.bf16.msra.mxu0 0
    %85 = vmatprep.subr.bf16.mxu0 0
    %86 = vmatpush1.bf16.msra.mxu0 0
    %87 = vmatprep.subr.bf16.mxu0 0
    %88 = vmatpush1.bf16.msra.mxu0 0
    %89 = vmatprep.subr.bf16.mxu0 0
    %90 = vmatpush1.bf16.msra.mxu0 0
    %91 = vmatprep.subr.bf16.mxu0 0
    %92 = vmatpush1.bf16.msra.mxu0 0
    %93 = vmatprep.mubr.bf16.mxu0 0
    %94 = vmatmul.mubr.bf16.gmra.mrb[0].mxu0 %v59
    %v95 = vpop.f32.mrb[0].mxu0
    %v96 = vadd.f32 %v56, %v95
    %v97 = vpop.f32.mrb[0].mxu0
    %v98 = vpop.f32.mrb[0].mxu0
    %v99 = vadd.f32 %v56, %v98
    %v100 = vpop.f32.mrb[0].mxu0
    %101 = vdwg.mxu0
    %v102 = vld [vmem:[#allocation5 + $0x18] sm:$0xff]
    %v103 = vld [vmem:[#allocation5 + $0x20] sm:$0xff]
    %v104 = vld [vmem:[#allocation5 + $0x28] sm:$0xff]
    %v105 = vld [vmem:[#allocation5 + $0x30] sm:$0xff]
    %v106 = vld [vmem:[#allocation5 + $0x38] sm:$0x1]
    %v107 = vld [vmem:[#allocation5 + $0x40] sm:$0x1]
    %v108 = vld [vmem:[#allocation5 + $0x48] sm:$0x1]
    %v109 = vld [vmem:[#allocation5 + $0x50] sm:$0x1]
    %v110 = vld [vmem:[#allocation5 + $0x58] sm:$0x1]
    %vm111 = vcmask 261120
    %v112 = vsel %vm111, %v96, 0.0
    %vm113 = vcmask 257024
    %v114 = vsel %vm113, %v99, 0.0
    %v115 = vadd.f32 %v112, %v114
    %v116 = vrot.slane %v115, 4
    %v117 = vadd.f32 %v115, %v116
    %v118 = vrot.slane %v117, 2
    %v119 = vadd.f32 %v117, %v118
    %v120 = vrot.slane %v119, 1
    %v121 = vadd.f32 %v119, %v120
    %v122 = vrcp.pop 12.0
    %v123 = vmul.f32 %v121, %v122
    %v124 = vsub.f32 %v96, %v123
    %v125 = vsub.f32 %v99, %v123
    %v126 = vmul.f32 %v124, %v124
    %v127 = vmul.f32 %v125, %v125
    %v128 = vsel %vm111, %v126, 0.0
    %v129 = vsel %vm113, %v127, 0.0
    %v130 = vadd.f32 %v128, %v129
    %v131 = vrot.slane %v130, 4
    %v132 = vadd.f32 %v130, %v131
    %v133 = vrot.slane %v132, 2
    %v134 = vadd.f32 %v132, %v133
    %v135 = vrot.slane %v134, 1
    %v136 = vadd.f32 %v134, %v135
    %v137 = vmul.f32 %v136, %v122
    %v138 = vadd.f32 %v137, 1e-05
    %v139 = vrsqrt.pop %v138
    %v140 = vmul.f32 %v124, %v139
    %v141 = vmul.f32 %v125, %v139
    %v142 = vlaneseq
    %v143 = vshrl.u32 %v142, 7
    %v144 = vsub.s32 0, %v143
    %v145 = vrot.slane %v109, %v144
    %v146 = vmul.f32 %v140, %v145
    %v147 = vmul.f32 %v141, %v145
    %v148 = vlaneseq
    %v149 = vshrl.u32 %v148, 7
    %v150 = vsub.s32 0, %v149
    %v151 = vrot.slane %v110, %v150
    %v152 = vadd.f32 %v146, %v151
    %v153 = vadd.f32 %v147, %v151
    %vm154 = vcmp.gt.f32.partialorder %v152, 0.0
    %vm155 = vcmp.gt.f32.partialorder %v153, 0.0
    %v156 = vmul.f32 %v152, 0.01
    %v157 = vmul.f32 %v153, 0.01
    %v158 = vsel %vm154, %v152, %v156
    %v159 = vsel %vm155, %v153, %v157
    %v160 = vpack.c.bf16 %v159, %v158
    %v161 = vpack.c.bf16 %v103, %v102
    %v162 = vpack.c.bf16 %v105, %v104
    %v164 = vsel %vm111, %v160, 0
    %166 = vmatprep.subr.bf16.mxu0 0
    %167 = vmatpush1.bf16.msra.mxu0 %v161
    %168 = vmatprep.subr.bf16.mxu0 0
    %169 = vmatpush1.bf16.msra.mxu0 %v162
    %170 = vmatprep.subr.bf16.mxu0 0
    %171 = vmatpush1.bf16.msra.mxu0 0
    %172 = vmatprep.subr.bf16.mxu0 0
    %173 = vmatpush1.bf16.msra.mxu0 0
    %174 = vmatprep.subr.bf16.mxu0 0
    %175 = vmatpush1.bf16.msra.mxu0 0
    %176 = vmatprep.subr.bf16.mxu0 0
    %177 = vmatpush1.bf16.msra.mxu0 0
    %178 = vmatprep.subr.bf16.mxu0 0
    %179 = vmatpush1.bf16.msra.mxu0 0
    %180 = vmatprep.subr.bf16.mxu0 0
    %181 = vmatpush1.bf16.msra.mxu0 0
    %182 = vmatprep.subr.bf16.mxu0 0
    %183 = vmatpush1.bf16.msra.mxu0 0
    %184 = vmatprep.subr.bf16.mxu0 0
    %185 = vmatpush1.bf16.msra.mxu0 0
    %186 = vmatprep.subr.bf16.mxu0 0
    %187 = vmatpush1.bf16.msra.mxu0 0
    %188 = vmatprep.subr.bf16.mxu0 0
    %189 = vmatpush1.bf16.msra.mxu0 0
    %190 = vmatprep.subr.bf16.mxu0 0
    %191 = vmatpush1.bf16.msra.mxu0 0
    %192 = vmatprep.subr.bf16.mxu0 0
    %193 = vmatpush1.bf16.msra.mxu0 0
    %194 = vmatprep.subr.bf16.mxu0 0
    %195 = vmatpush1.bf16.msra.mxu0 0
    %196 = vmatprep.subr.bf16.mxu0 0
    %197 = vmatpush1.bf16.msra.mxu0 0
    %198 = vmatprep.mubr.bf16.mxu0 0
    %199 = vmatmul.mubr.bf16.gmra.mrb[0].mxu0 %v164
    %v200 = vpop.f32.mrb[0].mxu0
    %v201 = vadd.f32 0.0, %v200
    %v202 = vpop.f32.mrb[0].mxu0
    %v203 = vpop.f32.mrb[0].mxu0
    %v204 = vadd.f32 0.0, %v203
    %v205 = vpop.f32.mrb[0].mxu0
    %206 = vdwg.mxu0
    %v207 = vlaneseq
    %v208 = vshrl.u32 %v207, 7
    %v209 = vsub.s32 0, %v208
    %v210 = vrot.slane %v107, %v209
    %v211 = vmul.f32 %v201, %v210
    %v212 = vmul.f32 %v204, %v210
    %v213 = vsel %vm111, %v211, 0.0
    %214 = vadd.xlane.f32.xlu0 %v213
    %v215 = vpop.xlane.xlu0 %214
    %v216 = vsel %vm113, %v212, 0.0
    %217 = vadd.xlane.f32.xlu0 %v216
    %v218 = vpop.xlane.xlu0 %217
    %v220 = vsel %vm111, %v106, 0
    %v223 = vsel %vm111, %v201, 0
    %v226 = vsel %vm111, %v204, 0
    %228 = vmatprep.subr.mxu0 0.0
    %229 = vmatpush1.xpose.msra.mxu0 %v223
    %230 = vmatprep.subr.mxu0 0.0
    %231 = vmatpush1.xpose.msra.mxu0 %v226
    %232 = vmatprep.subr.mxu0 0.0
    %233 = vmatpush1.xpose.msra.mxu0 0.0
    %234 = vmatprep.subr.mxu0 0.0
    %235 = vmatpush1.xpose.msra.mxu0 0.0
    %236 = vmatprep.subr.mxu0 0.0
    %237 = vmatpush1.xpose.msra.mxu0 0.0
    %238 = vmatprep.subr.mxu0 0.0
    %239 = vmatpush1.xpose.msra.mxu0 0.0
    %240 = vmatprep.subr.mxu0 0.0
    %241 = vmatpush1.xpose.msra.mxu0 0.0
    %242 = vmatprep.subr.mxu0 0.0
    %243 = vmatpush1.xpose.msra.mxu0 0.0
    %244 = vmatprep.subr.mxu0 0.0
    %245 = vmatpush1.xpose.msra.mxu0 0.0
    %246 = vmatprep.subr.mxu0 0.0
    %247 = vmatpush1.xpose.msra.mxu0 0.0
    %248 = vmatprep.subr.mxu0 0.0
    %249 = vmatpush1.xpose.msra.mxu0 0.0
    %250 = vmatprep.subr.mxu0 0.0
    %251 = vmatpush1.xpose.msra.mxu0 0.0
    %252 = vmatprep.subr.mxu0 0.0
    %253 = vmatpush1.xpose.msra.mxu0 0.0
    %254 = vmatprep.subr.mxu0 0.0
    %255 = vmatpush1.xpose.msra.mxu0 0.0
    %256 = vmatprep.subr.mxu0 0.0
    %257 = vmatpush1.xpose.msra.mxu0 0.0
    %258 = vmatprep.subr.mxu0 0.0
    %259 = vmatpush1.xpose.msra.mxu0 0.0
    %260 = vmatprep.subr.mxu0 0.0
    %261 = vmatpush1.xpose.msra.mxu0 0.0
    %262 = vmatprep.subr.mxu0 0.0
    %263 = vmatpush1.xpose.msra.mxu0 0.0
    %264 = vmatprep.subr.mxu0 0.0
    %265 = vmatpush1.xpose.msra.mxu0 0.0
    %266 = vmatprep.subr.mxu0 0.0
    %267 = vmatpush1.xpose.msra.mxu0 0.0
    %268 = vmatprep.subr.mxu0 0.0
    %269 = vmatpush1.xpose.msra.mxu0 0.0
    %270 = vmatprep.subr.mxu0 0.0
    %271 = vmatpush1.xpose.msra.mxu0 0.0
    %272 = vmatprep.subr.mxu0 0.0
    %273 = vmatpush1.xpose.msra.mxu0 0.0
    %274 = vmatprep.subr.mxu0 0.0
    %275 = vmatpush1.xpose.msra.mxu0 0.0
    %276 = vmatprep.subr.mxu0 0.0
    %277 = vmatpush1.xpose.msra.mxu0 0.0
    %278 = vmatprep.subr.mxu0 0.0
    %279 = vmatpush1.xpose.msra.mxu0 0.0
    %280 = vmatprep.subr.mxu0 0.0
    %281 = vmatpush1.xpose.msra.mxu0 0.0
    %282 = vmatprep.subr.mxu0 0.0
    %283 = vmatpush1.xpose.msra.mxu0 0.0
    %284 = vmatprep.subr.mxu0 0.0
    %285 = vmatpush1.xpose.msra.mxu0 0.0
    %286 = vmatprep.subr.mxu0 0.0
    %287 = vmatpush1.xpose.msra.mxu0 0.0
    %288 = vmatprep.subr.mxu0 0.0
    %289 = vmatpush1.xpose.msra.mxu0 0.0
    %290 = vmatprep.subr.mxu0 0.0
    %291 = vmatpush1.xpose.msra.mxu0 0.0
    %292 = vmatprep.mubr.f32.mxu0 0.0
    %293 = vmatmul.mubr.f32.gmra.mrb[0].mxu0 %v220
    %v294 = vpop.f32.mrb[0].mxu0
    %v295 = vadd.f32 0.0, %v294
    %v296 = vpop.f32.mrb[0].mxu0
    %297 = vdwg.mxu0
    %v298 = vlaneseq
    %v299 = vshrl.u32 %v298, 7
    %v300 = vsub.s32 0, %v299
    %v301 = vrot.slane %v295, %v300
    %v302 = vadd.f32 %v215, %v301
    %v303 = vadd.f32 %v218, %v301
    %vm304 = vcmp.gt.f32.partialorder %v302, 0.0
    %vm305 = vcmp.gt.f32.partialorder %v303, 0.0
    %v306 = vmul.f32 %v302, 0.2
    %v307 = vmul.f32 %v303, 0.2
    %v308 = vsel %vm304, %v302, %v306
    %v309 = vsel %vm305, %v303, %v307
    %vm310 = vcmp.gt.f32.partialorder %v44, 0.0
    %vm311 = vcmp.gt.f32.partialorder %v45, 0.0
    %v312 = vsel %vm310, %v308, -1e+30
    %v313 = vsel %vm311, %v309, -1e+30
    %vm314 = vcmask 97280
    %v315 = vsel %vm314, %v312, -inf
    %316 = vmax.xlane.f32.xlu0 %v315
    %v317 = vpop.xlane.xlu0 %316
    %vm318 = vcmask 93184
    %v319 = vsel %vm318, %v313, -inf
    %320 = vmax.xlane.f32.xlu0 %v319
    %v321 = vpop.xlane.xlu0 %320
    %v322 = vsub.f32 %v312, %v317
    %v323 = vsub.f32 %v313, %v321
    %v324 = vmul.f32 %v322, 1.442695
    %v325 = vpow.pop %v324
    %v326 = vmul.f32 %v323, 1.442695
    %v327 = vpow.pop %v326
    %v328 = vsel %vm314, %v325, 0.0
    %329 = vadd.xlane.f32.xlu0 %v328
    %v330 = vpop.xlane.xlu0 %329
    %v331 = vsel %vm318, %v327, 0.0
    %332 = vadd.xlane.f32.xlu0 %v331
    %v333 = vpop.xlane.xlu0 %332
    %v334 = vrcp.pop %v330
    %v335 = vrcp.pop %v333
    %v336 = vmul.f32 %v325, %v334
    %v337 = vmul.f32 %v327, %v335
    %v338 = vpack.c.bf16 %v337, %v336
    %v339 = vpack.c.bf16 %v204, %v201
    %v341 = vsel %vm314, %v338, 0
    %vm343 = vcmask 1045504
    %v345 = vsel %vm343, %v339, 0
    %347 = vmatprep.subr.bf16.mxu0 0
    %348 = vmatpush1.bf16.msra.mxu0 %v345
    %349 = vmatprep.subr.bf16.mxu0 0
    %350 = vmatpush1.bf16.msra.mxu0 0
    %351 = vmatprep.subr.bf16.mxu0 0
    %352 = vmatpush1.bf16.msra.mxu0 0
    %353 = vmatprep.subr.bf16.mxu0 0
    %354 = vmatpush1.bf16.msra.mxu0 0
    %355 = vmatprep.subr.bf16.mxu0 0
    %356 = vmatpush1.bf16.msra.mxu0 0
    %357 = vmatprep.subr.bf16.mxu0 0
    %358 = vmatpush1.bf16.msra.mxu0 0
    %359 = vmatprep.subr.bf16.mxu0 0
    %360 = vmatpush1.bf16.msra.mxu0 0
    %361 = vmatprep.subr.bf16.mxu0 0
    %362 = vmatpush1.bf16.msra.mxu0 0
    %363 = vmatprep.subr.bf16.mxu0 0
    %364 = vmatpush1.bf16.msra.mxu0 0
    %365 = vmatprep.subr.bf16.mxu0 0
    %366 = vmatpush1.bf16.msra.mxu0 0
    %367 = vmatprep.subr.bf16.mxu0 0
    %368 = vmatpush1.bf16.msra.mxu0 0
    %369 = vmatprep.subr.bf16.mxu0 0
    %370 = vmatpush1.bf16.msra.mxu0 0
    %371 = vmatprep.subr.bf16.mxu0 0
    %372 = vmatpush1.bf16.msra.mxu0 0
    %373 = vmatprep.subr.bf16.mxu0 0
    %374 = vmatpush1.bf16.msra.mxu0 0
    %375 = vmatprep.subr.bf16.mxu0 0
    %376 = vmatpush1.bf16.msra.mxu0 0
    %377 = vmatprep.subr.bf16.mxu0 0
    %378 = vmatpush1.bf16.msra.mxu0 0
    %379 = vmatprep.mubr.bf16.mxu0 0
    %380 = vmatmul.mubr.bf16.gmra.mrb[0].mxu0 %v341
    %v381 = vpop.f32.mrb[0].mxu0
    %v382 = vadd.f32 0.0, %v381
    %v383 = vpop.f32.mrb[0].mxu0
    %v384 = vpop.f32.mrb[0].mxu0
    %v385 = vadd.f32 0.0, %v384
    %v386 = vpop.f32.mrb[0].mxu0
    %387 = vdwg.mxu0
    %v388 = vadd.f32 %v96, %v382
    %v389 = vadd.f32 %v99, %v385
    %v390 = vlaneseq
    %v391 = vshrl.u32 %v390, 7
    %v392 = vsub.s32 0, %v391
    %v393 = vrot.slane %v108, %v392
    %v394 = vadd.f32 %v388, %v393
    %v395 = vadd.f32 %v389, %v393
    %v396 = vld [vmem:[#allocation5 + $0x60] sm:$0xff]
    %v397 = vld [vmem:[#allocation5 + $0x68] sm:$0xff]
    %v398 = vld [vmem:[#allocation5 + $0x70] sm:$0xff]
    %v399 = vld [vmem:[#allocation5 + $0x78] sm:$0xff]
    %v400 = vld [vmem:[#allocation5 + $0x80] sm:$0x1]
    %v401 = vld [vmem:[#allocation5 + $0x88] sm:$0x1]
    %v402 = vld [vmem:[#allocation5 + $0x90] sm:$0x1]
    %v403 = vld [vmem:[#allocation5 + $0x98] sm:$0x1]
    %v404 = vld [vmem:[#allocation5 + $0xa0] sm:$0x1]
    %v405 = vsel %vm111, %v394, 0.0
    %v406 = vsel %vm113, %v395, 0.0
    %v407 = vadd.f32 %v405, %v406
    %v408 = vrot.slane %v407, 4
    %v409 = vadd.f32 %v407, %v408
    %v410 = vrot.slane %v409, 2
    %v411 = vadd.f32 %v409, %v410
    %v412 = vrot.slane %v411, 1
    %v413 = vadd.f32 %v411, %v412
    %v414 = vmul.f32 %v413, %v122
    %v415 = vsub.f32 %v394, %v414
    %v416 = vsub.f32 %v395, %v414
    %v417 = vmul.f32 %v415, %v415
    %v418 = vmul.f32 %v416, %v416
    %v419 = vsel %vm111, %v417, 0.0
    %v420 = vsel %vm113, %v418, 0.0
    %v421 = vadd.f32 %v419, %v420
    %v422 = vrot.slane %v421, 4
    %v423 = vadd.f32 %v421, %v422
    %v424 = vrot.slane %v423, 2
    %v425 = vadd.f32 %v423, %v424
    %v426 = vrot.slane %v425, 1
    %v427 = vadd.f32 %v425, %v426
    %v428 = vmul.f32 %v427, %v122
    %v429 = vadd.f32 %v428, 1e-05
    %v430 = vrsqrt.pop %v429
    %v431 = vmul.f32 %v415, %v430
    %v432 = vmul.f32 %v416, %v430
    %v433 = vlaneseq
    %v434 = vshrl.u32 %v433, 7
    %v435 = vsub.s32 0, %v434
    %v436 = vrot.slane %v403, %v435
    %v437 = vmul.f32 %v431, %v436
    %v438 = vmul.f32 %v432, %v436
    %v439 = vlaneseq
    %v440 = vshrl.u32 %v439, 7
    %v441 = vsub.s32 0, %v440
    %v442 = vrot.slane %v404, %v441
    %v443 = vadd.f32 %v437, %v442
    %v444 = vadd.f32 %v438, %v442
    %vm445 = vcmp.gt.f32.partialorder %v443, 0.0
    %vm446 = vcmp.gt.f32.partialorder %v444, 0.0
    %v447 = vmul.f32 %v443, 0.01
    %v448 = vmul.f32 %v444, 0.01
    %v449 = vsel %vm445, %v443, %v447
    %v450 = vsel %vm446, %v444, %v448
    %v451 = vpack.c.bf16 %v450, %v449
    %v452 = vpack.c.bf16 %v397, %v396
    %v453 = vpack.c.bf16 %v399, %v398
    %v455 = vsel %vm111, %v451, 0
    %457 = vmatprep.subr.bf16.mxu0 0
    %458 = vmatpush1.bf16.msra.mxu0 %v452
    %459 = vmatprep.subr.bf16.mxu0 0
    %460 = vmatpush1.bf16.msra.mxu0 %v453
    %461 = vmatprep.subr.bf16.mxu0 0
    %462 = vmatpush1.bf16.msra.mxu0 0
    %463 = vmatprep.subr.bf16.mxu0 0
    %464 = vmatpush1.bf16.msra.mxu0 0
    %465 = vmatprep.subr.bf16.mxu0 0
    %466 = vmatpush1.bf16.msra.mxu0 0
    %467 = vmatprep.subr.bf16.mxu0 0
    %468 = vmatpush1.bf16.msra.mxu0 0
    %469 = vmatprep.subr.bf16.mxu0 0
    %470 = vmatpush1.bf16.msra.mxu0 0
    %471 = vmatprep.subr.bf16.mxu0 0
    %472 = vmatpush1.bf16.msra.mxu0 0
    %473 = vmatprep.subr.bf16.mxu0 0
    %474 = vmatpush1.bf16.msra.mxu0 0
    %475 = vmatprep.subr.bf16.mxu0 0
    %476 = vmatpush1.bf16.msra.mxu0 0
    %477 = vmatprep.subr.bf16.mxu0 0
    %478 = vmatpush1.bf16.msra.mxu0 0
    %479 = vmatprep.subr.bf16.mxu0 0
    %480 = vmatpush1.bf16.msra.mxu0 0
    %481 = vmatprep.subr.bf16.mxu0 0
    %482 = vmatpush1.bf16.msra.mxu0 0
    %483 = vmatprep.subr.bf16.mxu0 0
    %484 = vmatpush1.bf16.msra.mxu0 0
    %485 = vmatprep.subr.bf16.mxu0 0
    %486 = vmatpush1.bf16.msra.mxu0 0
    %487 = vmatprep.subr.bf16.mxu0 0
    %488 = vmatpush1.bf16.msra.mxu0 0
    %489 = vmatprep.mubr.bf16.mxu0 0
    %490 = vmatmul.mubr.bf16.gmra.mrb[0].mxu0 %v455
    %v491 = vpop.f32.mrb[0].mxu0
    %v492 = vadd.f32 0.0, %v491
    %v493 = vpop.f32.mrb[0].mxu0
    %v494 = vpop.f32.mrb[0].mxu0
    %v495 = vadd.f32 0.0, %v494
    %v496 = vpop.f32.mrb[0].mxu0
    %497 = vdwg.mxu0
    %v498 = vlaneseq
    %v499 = vshrl.u32 %v498, 7
    %v500 = vsub.s32 0, %v499
    %v501 = vrot.slane %v401, %v500
    %v502 = vmul.f32 %v492, %v501
    %v503 = vmul.f32 %v495, %v501
    %v504 = vsel %vm111, %v502, 0.0
    %505 = vadd.xlane.f32.xlu0 %v504
    %v506 = vpop.xlane.xlu0 %505
    %v507 = vsel %vm113, %v503, 0.0
    %508 = vadd.xlane.f32.xlu0 %v507
    %v509 = vpop.xlane.xlu0 %508
    %v511 = vsel %vm111, %v400, 0
    %v514 = vsel %vm111, %v492, 0
    %v517 = vsel %vm111, %v495, 0
    %519 = vmatprep.subr.mxu0 0.0
    %520 = vmatpush1.xpose.msra.mxu0 %v514
    %521 = vmatprep.subr.mxu0 0.0
    %522 = vmatpush1.xpose.msra.mxu0 %v517
    %523 = vmatprep.subr.mxu0 0.0
    %524 = vmatpush1.xpose.msra.mxu0 0.0
    %525 = vmatprep.subr.mxu0 0.0
    %526 = vmatpush1.xpose.msra.mxu0 0.0
    %527 = vmatprep.subr.mxu0 0.0
    %528 = vmatpush1.xpose.msra.mxu0 0.0
    %529 = vmatprep.subr.mxu0 0.0
    %530 = vmatpush1.xpose.msra.mxu0 0.0
    %531 = vmatprep.subr.mxu0 0.0
    %532 = vmatpush1.xpose.msra.mxu0 0.0
    %533 = vmatprep.subr.mxu0 0.0
    %534 = vmatpush1.xpose.msra.mxu0 0.0
    %535 = vmatprep.subr.mxu0 0.0
    %536 = vmatpush1.xpose.msra.mxu0 0.0
    %537 = vmatprep.subr.mxu0 0.0
    %538 = vmatpush1.xpose.msra.mxu0 0.0
    %539 = vmatprep.subr.mxu0 0.0
    %540 = vmatpush1.xpose.msra.mxu0 0.0
    %541 = vmatprep.subr.mxu0 0.0
    %542 = vmatpush1.xpose.msra.mxu0 0.0
    %543 = vmatprep.subr.mxu0 0.0
    %544 = vmatpush1.xpose.msra.mxu0 0.0
    %545 = vmatprep.subr.mxu0 0.0
    %546 = vmatpush1.xpose.msra.mxu0 0.0
    %547 = vmatprep.subr.mxu0 0.0
    %548 = vmatpush1.xpose.msra.mxu0 0.0
    %549 = vmatprep.subr.mxu0 0.0
    %550 = vmatpush1.xpose.msra.mxu0 0.0
    %551 = vmatprep.subr.mxu0 0.0
    %552 = vmatpush1.xpose.msra.mxu0 0.0
    %553 = vmatprep.subr.mxu0 0.0
    %554 = vmatpush1.xpose.msra.mxu0 0.0
    %555 = vmatprep.subr.mxu0 0.0
    %556 = vmatpush1.xpose.msra.mxu0 0.0
    %557 = vmatprep.subr.mxu0 0.0
    %558 = vmatpush1.xpose.msra.mxu0 0.0
    %559 = vmatprep.subr.mxu0 0.0
    %560 = vmatpush1.xpose.msra.mxu0 0.0
    %561 = vmatprep.subr.mxu0 0.0
    %562 = vmatpush1.xpose.msra.mxu0 0.0
    %563 = vmatprep.subr.mxu0 0.0
    %564 = vmatpush1.xpose.msra.mxu0 0.0
    %565 = vmatprep.subr.mxu0 0.0
    %566 = vmatpush1.xpose.msra.mxu0 0.0
    %567 = vmatprep.subr.mxu0 0.0
    %568 = vmatpush1.xpose.msra.mxu0 0.0
    %569 = vmatprep.subr.mxu0 0.0
    %570 = vmatpush1.xpose.msra.mxu0 0.0
    %571 = vmatprep.subr.mxu0 0.0
    %572 = vmatpush1.xpose.msra.mxu0 0.0
    %573 = vmatprep.subr.mxu0 0.0
    %574 = vmatpush1.xpose.msra.mxu0 0.0
    %575 = vmatprep.subr.mxu0 0.0
    %576 = vmatpush1.xpose.msra.mxu0 0.0
    %577 = vmatprep.subr.mxu0 0.0
    %578 = vmatpush1.xpose.msra.mxu0 0.0
    %579 = vmatprep.subr.mxu0 0.0
    %580 = vmatpush1.xpose.msra.mxu0 0.0
    %581 = vmatprep.subr.mxu0 0.0
    %582 = vmatpush1.xpose.msra.mxu0 0.0
    %583 = vmatprep.mubr.f32.mxu0 0.0
    %584 = vmatmul.mubr.f32.gmra.mrb[0].mxu0 %v511
    %v585 = vpop.f32.mrb[0].mxu0
    %v586 = vadd.f32 0.0, %v585
    %v587 = vpop.f32.mrb[0].mxu0
    %588 = vdwg.mxu0
    %v589 = vlaneseq
    %v590 = vshrl.u32 %v589, 7
    %v591 = vsub.s32 0, %v590
    %v592 = vrot.slane %v586, %v591
    %v593 = vadd.f32 %v506, %v592
    %v594 = vadd.f32 %v509, %v592
    %vm595 = vcmp.gt.f32.partialorder %v593, 0.0
    %vm596 = vcmp.gt.f32.partialorder %v594, 0.0
    %v597 = vmul.f32 %v593, 0.2
    %v598 = vmul.f32 %v594, 0.2
    %v599 = vsel %vm595, %v593, %v597
    %v600 = vsel %vm596, %v594, %v598
    %v601 = vsel %vm310, %v599, -1e+30
    %v602 = vsel %vm311, %v600, -1e+30
    %v603 = vsel %vm314, %v601, -inf
    %604 = vmax.xlane.f32.xlu0 %v603
    %v605 = vpop.xlane.xlu0 %604
    %v606 = vsel %vm318, %v602, -inf
    %607 = vmax.xlane.f32.xlu0 %v606
    %v608 = vpop.xlane.xlu0 %607
    %v609 = vsub.f32 %v601, %v605
    %v610 = vsub.f32 %v602, %v608
    %v611 = vmul.f32 %v609, 1.442695
    %v612 = vpow.pop %v611
    %v613 = vmul.f32 %v610, 1.442695
    %v614 = vpow.pop %v613
    %v615 = vsel %vm314, %v612, 0.0
    %616 = vadd.xlane.f32.xlu0 %v615
    %v617 = vpop.xlane.xlu0 %616
    %v618 = vsel %vm318, %v614, 0.0
    %619 = vadd.xlane.f32.xlu0 %v618
    %v620 = vpop.xlane.xlu0 %619
    %v621 = vrcp.pop %v617
    %v622 = vrcp.pop %v620
    %v623 = vmul.f32 %v612, %v621
    %v624 = vmul.f32 %v614, %v622
    %v625 = vpack.c.bf16 %v624, %v623
    %v626 = vpack.c.bf16 %v495, %v492
    %v628 = vsel %vm314, %v625, 0
    %v631 = vsel %vm343, %v626, 0
    %633 = vmatprep.subr.bf16.mxu0 0
    %634 = vmatpush1.bf16.msra.mxu0 %v631
    %635 = vmatprep.subr.bf16.mxu0 0
    %636 = vmatpush1.bf16.msra.mxu0 0
    %637 = vmatprep.subr.bf16.mxu0 0
    %638 = vmatpush1.bf16.msra.mxu0 0
    %639 = vmatprep.subr.bf16.mxu0 0
    %640 = vmatpush1.bf16.msra.mxu0 0
    %641 = vmatprep.subr.bf16.mxu0 0
    %642 = vmatpush1.bf16.msra.mxu0 0
    %643 = vmatprep.subr.bf16.mxu0 0
    %644 = vmatpush1.bf16.msra.mxu0 0
    %645 = vmatprep.subr.bf16.mxu0 0
    %646 = vmatpush1.bf16.msra.mxu0 0
    %647 = vmatprep.subr.bf16.mxu0 0
    %648 = vmatpush1.bf16.msra.mxu0 0
    %649 = vmatprep.subr.bf16.mxu0 0
    %650 = vmatpush1.bf16.msra.mxu0 0
    %651 = vmatprep.subr.bf16.mxu0 0
    %652 = vmatpush1.bf16.msra.mxu0 0
    %653 = vmatprep.subr.bf16.mxu0 0
    %654 = vmatpush1.bf16.msra.mxu0 0
    %655 = vmatprep.subr.bf16.mxu0 0
    %656 = vmatpush1.bf16.msra.mxu0 0
    %657 = vmatprep.subr.bf16.mxu0 0
    %658 = vmatpush1.bf16.msra.mxu0 0
    %659 = vmatprep.subr.bf16.mxu0 0
    %660 = vmatpush1.bf16.msra.mxu0 0
    %661 = vmatprep.subr.bf16.mxu0 0
    %662 = vmatpush1.bf16.msra.mxu0 0
    %663 = vmatprep.subr.bf16.mxu0 0
    %664 = vmatpush1.bf16.msra.mxu0 0
    %665 = vmatprep.mubr.bf16.mxu0 0
    %666 = vmatmul.mubr.bf16.gmra.mrb[0].mxu0 %v628
    %v667 = vpop.f32.mrb[0].mxu0
    %v668 = vadd.f32 0.0, %v667
    %v669 = vpop.f32.mrb[0].mxu0
    %v670 = vpop.f32.mrb[0].mxu0
    %v671 = vadd.f32 0.0, %v670
    %v672 = vpop.f32.mrb[0].mxu0
    %673 = vdwg.mxu0
    %v674 = vadd.f32 %v394, %v668
    %v675 = vadd.f32 %v395, %v671
    %v676 = vlaneseq
    %v677 = vshrl.u32 %v676, 7
    %v678 = vsub.s32 0, %v677
    %v679 = vrot.slane %v402, %v678
    %v680 = vadd.f32 %v674, %v679
    %v681 = vadd.f32 %v675, %v679
    %v682 = vld [vmem:[#allocation5 + $0xa8] sm:$0xff]
    %v683 = vld [vmem:[#allocation5 + $0xb0] sm:$0xff]
    %v684 = vld [vmem:[#allocation5 + $0xb8] sm:$0xff]
    %v685 = vld [vmem:[#allocation5 + $0xc0] sm:$0xff]
    %v686 = vld [vmem:[#allocation5 + $0xc8] sm:$0x1]
    %v687 = vld [vmem:[#allocation5 + $0xd0] sm:$0xff]
    %v688 = vld [vmem:[#allocation5 + $0xd8] sm:$0xff]
    %v689 = vld [vmem:[#allocation5 + $0xe0] sm:$0xff]
    %v690 = vld [vmem:[#allocation5 + $0xe8] sm:$0xff]
    %v691 = vld [vmem:[#allocation5 + $0xf0] sm:$0xff]
    %v692 = vld [vmem:[#allocation5 + $0xf8] sm:$0xff]
    %v693 = vld [vmem:[#allocation5 + $0x100] sm:$0x3]
    %v694 = vld [vmem:[#allocation5 + $0x108] sm:$0xff]
    %v695 = vld [vmem:[#allocation5 + $0x110] sm:$0xff]
    %v696 = vld [vmem:[#allocation5 + $0x118] sm:$0xff]
    %v697 = vld [vmem:[#allocation5 + $0x120] sm:$0xff]
    %v698 = vld [vmem:[#allocation5 + $0x128] sm:$0xff]
    %v699 = vld [vmem:[#allocation5 + $0x130] sm:$0xff]
    %v700 = vld [vmem:[#allocation5 + $0x138] sm:$0x3]
    %v701 = vpack.c.bf16 %v681, %v680
    %v702 = vpack.c.bf16 %v683, %v682
    %v703 = vpack.c.bf16 %v685, %v684
    %v705 = vsel %vm111, %v701, 0
    %707 = vmatprep.subr.bf16.mxu0 0
    %708 = vmatpush1.bf16.msra.mxu0 %v702
    %709 = vmatprep.subr.bf16.mxu0 0
    %710 = vmatpush1.bf16.msra.mxu0 %v703
    %711 = vmatprep.subr.bf16.mxu0 0
    %712 = vmatpush1.bf16.msra.mxu0 0
    %713 = vmatprep.subr.bf16.mxu0 0
    %714 = vmatpush1.bf16.msra.mxu0 0
    %715 = vmatprep.subr.bf16.mxu0 0
    %716 = vmatpush1.bf16.msra.mxu0 0
    %717 = vmatprep.subr.bf16.mxu0 0
    %718 = vmatpush1.bf16.msra.mxu0 0
    %719 = vmatprep.subr.bf16.mxu0 0
    %720 = vmatpush1.bf16.msra.mxu0 0
    %721 = vmatprep.subr.bf16.mxu0 0
    %722 = vmatpush1.bf16.msra.mxu0 0
    %723 = vmatprep.subr.bf16.mxu0 0
    %724 = vmatpush1.bf16.msra.mxu0 0
    %725 = vmatprep.subr.bf16.mxu0 0
    %726 = vmatpush1.bf16.msra.mxu0 0
    %727 = vmatprep.subr.bf16.mxu0 0
    %728 = vmatpush1.bf16.msra.mxu0 0
    %729 = vmatprep.subr.bf16.mxu0 0
    %730 = vmatpush1.bf16.msra.mxu0 0
    %731 = vmatprep.subr.bf16.mxu0 0
    %732 = vmatpush1.bf16.msra.mxu0 0
    %733 = vmatprep.subr.bf16.mxu0 0
    %734 = vmatpush1.bf16.msra.mxu0 0
    %735 = vmatprep.subr.bf16.mxu0 0
    %736 = vmatpush1.bf16.msra.mxu0 0
    %737 = vmatprep.subr.bf16.mxu0 0
    %738 = vmatpush1.bf16.msra.mxu0 0
    %739 = vmatprep.mubr.bf16.mxu0 0
    %740 = vmatmul.mubr.bf16.gmra.mrb[0].mxu0 %v705
    %v741 = vpop.f32.mrb[0].mxu0
    %v742 = vadd.f32 0.0, %v741
    %v743 = vpop.f32.mrb[0].mxu0
    %v744 = vpop.f32.mrb[0].mxu0
    %v745 = vadd.f32 0.0, %v744
    %v746 = vpop.f32.mrb[0].mxu0
    %747 = vdwg.mxu0
    %v748 = vmul.f32 %v680, %v680
    %v749 = vmul.f32 %v681, %v681
    %v750 = vsel %vm111, %v748, 0.0
    %751 = vadd.xlane.f32.xlu0 %v750
    %v752 = vpop.xlane.xlu0 %751
    %v753 = vsel %vm113, %v749, 0.0
    %754 = vadd.xlane.f32.xlu0 %v753
    %v755 = vpop.xlane.xlu0 %754
    %v756 = vlaneseq
    %v757 = vshrl.u32 %v756, 7
    %v758 = vsub.s32 0, %v757
    %v759 = vrot.slane %v686, %v758
    %v760 = vadd.f32 %v752, %v759
    %v761 = vadd.f32 %v755, %v759
    %v762 = vmul.f32 %v742, 2.0
    %v763 = vmul.f32 %v745, 2.0
    %v764 = vsub.f32 %v760, %v762
    %v765 = vsub.f32 %v761, %v763
    %v766 = vmax.f32 %v764, 0.0
    %v767 = vmax.f32 %v765, 0.0
    %v768 = vadd.f32 %v766, 1.0
    %v769 = vadd.f32 %v767, 1.0
    %v770 = vrcp.pop %v768
    %v771 = vmul.f32 1.0, %v770
    %v772 = vrcp.pop %v769
    %v773 = vmul.f32 1.0, %v772
    %vm774 = vcmask 408576
    %v776 = vsel %vm774, %v771, 0
    %v779 = vsel %vm774, %v773, 0
    %vm781 = vcmask 1041408
    %v783 = vsel %vm781, %v693, 0
    %785 = vmatprep.subr.mxu0 0.0
    %786 = vmatpush1.msra.mxu0 %v687
    %787 = vmatprep.subr.mxu0 0.0
    %788 = vmatpush1.msra.mxu0 %v688
    %789 = vmatprep.subr.mxu0 0.0
    %790 = vmatpush1.msra.mxu0 %v689
    %791 = vmatprep.subr.mxu0 0.0
    %792 = vmatpush1.msra.mxu0 %v690
    %793 = vmatprep.subr.mxu0 0.0
    %794 = vmatpush1.msra.mxu0 %v691
    %795 = vmatprep.subr.mxu0 0.0
    %796 = vmatpush1.msra.mxu0 %v692
    %797 = vmatprep.subr.mxu0 0.0
    %798 = vmatpush1.msra.mxu0 %v783
    %799 = vmatprep.subr.mxu0 0.0
    %800 = vmatpush1.msra.mxu0 0.0
    %801 = vmatprep.subr.mxu0 0.0
    %802 = vmatpush1.msra.mxu0 0.0
    %803 = vmatprep.subr.mxu0 0.0
    %804 = vmatpush1.msra.mxu0 0.0
    %805 = vmatprep.subr.mxu0 0.0
    %806 = vmatpush1.msra.mxu0 0.0
    %807 = vmatprep.subr.mxu0 0.0
    %808 = vmatpush1.msra.mxu0 0.0
    %809 = vmatprep.subr.mxu0 0.0
    %810 = vmatpush1.msra.mxu0 0.0
    %811 = vmatprep.subr.mxu0 0.0
    %812 = vmatpush1.msra.mxu0 0.0
    %813 = vmatprep.subr.mxu0 0.0
    %814 = vmatpush1.msra.mxu0 0.0
    %815 = vmatprep.subr.mxu0 0.0
    %816 = vmatpush1.msra.mxu0 0.0
    %817 = vmatprep.subr.mxu0 0.0
    %818 = vmatpush1.msra.mxu0 0.0
    %819 = vmatprep.subr.mxu0 0.0
    %820 = vmatpush1.msra.mxu0 0.0
    %821 = vmatprep.subr.mxu0 0.0
    %822 = vmatpush1.msra.mxu0 0.0
    %823 = vmatprep.subr.mxu0 0.0
    %824 = vmatpush1.msra.mxu0 0.0
    %825 = vmatprep.subr.mxu0 0.0
    %826 = vmatpush1.msra.mxu0 0.0
    %827 = vmatprep.subr.mxu0 0.0
    %828 = vmatpush1.msra.mxu0 0.0
    %829 = vmatprep.subr.mxu0 0.0
    %830 = vmatpush1.msra.mxu0 0.0
    %831 = vmatprep.subr.mxu0 0.0
    %832 = vmatpush1.msra.mxu0 0.0
    %833 = vmatprep.subr.mxu0 0.0
    %834 = vmatpush1.msra.mxu0 0.0
    %835 = vmatprep.subr.mxu0 0.0
    %836 = vmatpush1.msra.mxu0 0.0
    %837 = vmatprep.subr.mxu0 0.0
    %838 = vmatpush1.msra.mxu0 0.0
    %839 = vmatprep.subr.mxu0 0.0
    %840 = vmatpush1.msra.mxu0 0.0
    %841 = vmatprep.subr.mxu0 0.0
    %842 = vmatpush1.msra.mxu0 0.0
    %843 = vmatprep.subr.mxu0 0.0
    %844 = vmatpush1.msra.mxu0 0.0
    %845 = vmatprep.subr.mxu0 0.0
    %846 = vmatpush1.msra.mxu0 0.0
    %847 = vmatprep.subr.mxu0 0.0
    %848 = vmatpush1.msra.mxu0 0.0
    %849 = vmatprep.mubr.f32.mxu0 0.0
    %850 = vmatmul.mubr.f32.gmra.mrb[0].mxu0 %v776
    %v851 = vpop.f32.mrb[0].mxu0
    %v852 = vadd.f32 0.0, %v851
    %v853 = vpop.f32.mrb[0].mxu0
    %854 = vmatprep.mubr.f32.mxu0 0.0
    %855 = vmatmul.mubr.f32.gmra.mrb[0].mxu0 %v779
    %v856 = vpop.f32.mrb[0].mxu0
    %v857 = vadd.f32 0.0, %v856
    %v858 = vpop.f32.mrb[0].mxu0
    %859 = vdwg.mxu0
    %v860 = vrcp.pop %v852
    %v861 = vmul.f32 %v771, %v860
    %v862 = vrcp.pop %v857
    %v863 = vmul.f32 %v773, %v862
    %v865 = vsel %vm774, %v861, 0
    %v868 = vsel %vm774, %v863, 0
    %v871 = vsel %vm781, %v700, 0
    %873 = vmatprep.subr.mxu0 0.0
    %874 = vmatpush1.msra.mxu0 %v694
    %875 = vmatprep.subr.mxu0 0.0
    %876 = vmatpush1.msra.mxu0 %v695
    %877 = vmatprep.subr.mxu0 0.0
    %878 = vmatpush1.msra.mxu0 %v696
    %879 = vmatprep.subr.mxu0 0.0
    %880 = vmatpush1.msra.mxu0 %v697
    %881 = vmatprep.subr.mxu0 0.0
    %882 = vmatpush1.msra.mxu0 %v698
    %883 = vmatprep.subr.mxu0 0.0
    %884 = vmatpush1.msra.mxu0 %v699
    %885 = vmatprep.subr.mxu0 0.0
    %886 = vmatpush1.msra.mxu0 %v871
    %887 = vmatprep.subr.mxu0 0.0
    %888 = vmatpush1.msra.mxu0 0.0
    %889 = vmatprep.subr.mxu0 0.0
    %890 = vmatpush1.msra.mxu0 0.0
    %891 = vmatprep.subr.mxu0 0.0
    %892 = vmatpush1.msra.mxu0 0.0
    %893 = vmatprep.subr.mxu0 0.0
    %894 = vmatpush1.msra.mxu0 0.0
    %895 = vmatprep.subr.mxu0 0.0
    %896 = vmatpush1.msra.mxu0 0.0
    %897 = vmatprep.subr.mxu0 0.0
    %898 = vmatpush1.msra.mxu0 0.0
    %899 = vmatprep.subr.mxu0 0.0
    %900 = vmatpush1.msra.mxu0 0.0
    %901 = vmatprep.subr.mxu0 0.0
    %902 = vmatpush1.msra.mxu0 0.0
    %903 = vmatprep.subr.mxu0 0.0
    %904 = vmatpush1.msra.mxu0 0.0
    %905 = vmatprep.subr.mxu0 0.0
    %906 = vmatpush1.msra.mxu0 0.0
    %907 = vmatprep.subr.mxu0 0.0
    %908 = vmatpush1.msra.mxu0 0.0
    %909 = vmatprep.subr.mxu0 0.0
    %910 = vmatpush1.msra.mxu0 0.0
    %911 = vmatprep.subr.mxu0 0.0
    %912 = vmatpush1.msra.mxu0 0.0
    %913 = vmatprep.subr.mxu0 0.0
    %914 = vmatpush1.msra.mxu0 0.0
    %915 = vmatprep.subr.mxu0 0.0
    %916 = vmatpush1.msra.mxu0 0.0
    %917 = vmatprep.subr.mxu0 0.0
    %918 = vmatpush1.msra.mxu0 0.0
    %919 = vmatprep.subr.mxu0 0.0
    %920 = vmatpush1.msra.mxu0 0.0
    %921 = vmatprep.subr.mxu0 0.0
    %922 = vmatpush1.msra.mxu0 0.0
    %923 = vmatprep.subr.mxu0 0.0
    %924 = vmatpush1.msra.mxu0 0.0
    %925 = vmatprep.subr.mxu0 0.0
    %926 = vmatpush1.msra.mxu0 0.0
    %927 = vmatprep.subr.mxu0 0.0
    %928 = vmatpush1.msra.mxu0 0.0
    %929 = vmatprep.subr.mxu0 0.0
    %930 = vmatpush1.msra.mxu0 0.0
    %931 = vmatprep.subr.mxu0 0.0
    %932 = vmatpush1.msra.mxu0 0.0
    %933 = vmatprep.subr.mxu0 0.0
    %934 = vmatpush1.msra.mxu0 0.0
    %935 = vmatprep.subr.mxu0 0.0
    %936 = vmatpush1.msra.mxu0 0.0
    %937 = vmatprep.mubr.f32.mxu0 0.0
    %938 = vmatmul.mubr.f32.gmra.mrb[0].mxu0 %v865
    %v939 = vpop.f32.mrb[0].mxu0
    %v940 = vadd.f32 0.0, %v939
    %v941 = vpop.f32.mrb[0].mxu0
    %942 = vmatprep.mubr.f32.mxu0 0.0
    %943 = vmatmul.mubr.f32.gmra.mrb[0].mxu0 %v868
    %v944 = vpop.f32.mrb[0].mxu0
    %v945 = vadd.f32 0.0, %v944
    %v946 = vpop.f32.mrb[0].mxu0
    %947 = vdwg.mxu0
    %vm948 = vcmask 80896
    %v949 = vsel %vm948, %v940, -inf
    %950 = vmax.xlane.f32.xlu0 %v949
    %v951 = vpop.xlane.xlu0 %950
    %vm952 = vcmask 76800
    %v953 = vsel %vm952, %v945, -inf
    %954 = vmax.xlane.f32.xlu0 %v953
    %v955 = vpop.xlane.xlu0 %954
    %v956 = vsub.f32 %v940, %v951
    %v957 = vsub.f32 %v945, %v955
    %v958 = vmul.f32 %v956, 1.442695
    %v959 = vpow.pop %v958
    %v960 = vmul.f32 %v957, 1.442695
    %v961 = vpow.pop %v960
    %v962 = vsel %vm948, %v959, 0.0
    %963 = vadd.xlane.f32.xlu0 %v962
    %v964 = vpop.xlane.xlu0 %963
    %v965 = vsel %vm952, %v961, 0.0
    %966 = vadd.xlane.f32.xlu0 %v965
    %v967 = vpop.xlane.xlu0 %966
    %v968 = vrcp.pop %v964
    %v969 = vmul.f32 %v959, %v968
    %v970 = vrcp.pop %v967
    %v971 = vmul.f32 %v961, %v970
    %v972 = vld [vmem:[#allocation5 + $0x140] sm:$0xff]
    %v973 = vld [vmem:[#allocation5 + $0x148] sm:$0xff]
    %v974 = vld [vmem:[#allocation5 + $0x150] sm:$0xff]
    %v975 = vld [vmem:[#allocation5 + $0x158] sm:$0xff]
    %v976 = vpack.c.bf16 %v973, %v972
    %v977 = vpack.c.bf16 %v975, %v974
    %v978 = vld [vmem:[#allocation5 + $0x160] sm:$0x1]
    %v979 = vld [vmem:[#allocation5 + $0x168] sm:$0xff]
    %v980 = vld [vmem:[#allocation5 + $0x170] sm:$0xff]
    %v981 = vld [vmem:[#allocation5 + $0x178] sm:$0xff]
    %v982 = vld [vmem:[#allocation5 + $0x180] sm:$0xff]
    %v983 = vld [vmem:[#allocation5 + $0x188] sm:$0xff]
    %v984 = vld [vmem:[#allocation5 + $0x190] sm:$0xff]
    %v985 = vld [vmem:[#allocation5 + $0x198] sm:$0xff]
    %v986 = vld [vmem:[#allocation5 + $0x1a0] sm:$0xff]
    %v987 = vld [vmem:[#allocation5 + $0x1a8] sm:$0xff]
    %v988 = vld [vmem:[#allocation5 + $0x1b0] sm:$0xff]
    %v989 = vld [vmem:[#allocation5 + $0x1b8] sm:$0x1]
    %v990 = vld [vmem:[#allocation5 + $0x1c0] sm:$0x1f]
    %v991 = vld [vmem:[#allocation5 + $0x1c8] sm:$0x1f]
    %v992 = vld [vmem:[#allocation5 + $0x1d0] sm:$0xff]
    %v993 = vld [vmem:[#allocation5 + $0x1d8] sm:$0xff]
    %v994 = vld [vmem:[#allocation5 + $0x1e0] sm:$0xff]
    %v995 = vld [vmem:[#allocation5 + $0x1e8] sm:$0xff]
    %v996 = vld [vmem:[#allocation5 + $0x1f0] sm:$0xff]
    %v997 = vld [vmem:[#allocation5 + $0x1f8] sm:$0xff]
    %v998 = vld [vmem:[#allocation5 + $0x200] sm:$0xff]
    %v999 = vld [vmem:[#allocation5 + $0x208] sm:$0xff]
    %v1000 = vld [vmem:[#allocation5 + $0x210] sm:$0xff]
    %v1001 = vld [vmem:[#allocation5 + $0x218] sm:$0xff]
    %v1002 = vpack.c.bf16 %v993, %v992
    %v1003 = vpack.c.bf16 %v995, %v994
    %v1004 = vpack.c.bf16 %v997, %v996
    %v1005 = vpack.c.bf16 %v999, %v998
    %v1006 = vpack.c.bf16 %v1001, %v1000
    %v1007 = vld [vmem:[#allocation5 + $0x220] sm:$0x1]
    %v1008 = vld [vmem:[#allocation2 + $0x20] sm:$0xff]
    %v1009 = vld [vmem:[#allocation2 + $0x28] sm:$0xf]
    %1011 = vset.pattern.permute.xlu0 0
    %1012 = vperm.xlu0 %1011, %v1008
    %v1013 = vpop.permute.xlu0 %1012
    %1016 = vset.pattern.permute.xlu0 0
    %1017 = vperm.xlu0 %1016, %v1009
    %v1018 = vpop.permute.xlu0 %1017
    %v1020 = vmul.f32 %v969, %v1013
    %v1021 = vmul.f32 %v971, %v1018
    %v1022 = vpack.c.bf16 %v1021, %v1020
    %1023 = vxpose.xlu0.c.b16.start [1/8] %v1022, 128
    %1024 = vxpose.xlu0.c.b16.cont [2/8] 0, 128
    %1025 = vxpose.xlu0.c.b16.cont [3/8] 0, 128
    %1026 = vxpose.xlu0.c.b16.cont [4/8] 0, 128
    %1027 = vxpose.xlu0.c.b16.cont [5/8] 0, 128
    %1028 = vxpose.xlu0.c.b16.cont [6/8] 0, 128
    %1029 = vxpose.xlu0.c.b16.cont [7/8] 0, 128
    %1030 = vxpose.xlu0.c.b16.end [8/8] 0, 128
    %v1031 = vpop.trf.xlu0
    %v1032 = vpop.trf.xlu0
    %v1033 = vpop.trf.xlu0
    %v1034 = vpop.trf.xlu0
    %v1035 = vpop.trf.xlu0
    %v1036 = vpop.trf.xlu0
    %v1037 = vpop.trf.xlu0
    %v1038 = vpop.trf.xlu0
    %v1040 = vsel %vm314, %v1031, 0
    %v1042 = vsel %vm343, %v701, 0
    %1044 = vmatprep.subr.bf16.mxu0 0
    %1045 = vmatpush1.bf16.msra.mxu0 %v1042
    %1046 = vmatprep.subr.bf16.mxu0 0
    %1047 = vmatpush1.bf16.msra.mxu0 0
    %1048 = vmatprep.subr.bf16.mxu0 0
    %1049 = vmatpush1.bf16.msra.mxu0 0
    %1050 = vmatprep.subr.bf16.mxu0 0
    %1051 = vmatpush1.bf16.msra.mxu0 0
    %1052 = vmatprep.subr.bf16.mxu0 0
    %1053 = vmatpush1.bf16.msra.mxu0 0
    %1054 = vmatprep.subr.bf16.mxu0 0
    %1055 = vmatpush1.bf16.msra.mxu0 0
    %1056 = vmatprep.subr.bf16.mxu0 0
    %1057 = vmatpush1.bf16.msra.mxu0 0
    %1058 = vmatprep.subr.bf16.mxu0 0
    %1059 = vmatpush1.bf16.msra.mxu0 0
    %1060 = vmatprep.subr.bf16.mxu0 0
    %1061 = vmatpush1.bf16.msra.mxu0 0
    %1062 = vmatprep.subr.bf16.mxu0 0
    %1063 = vmatpush1.bf16.msra.mxu0 0
    %1064 = vmatprep.subr.bf16.mxu0 0
    %1065 = vmatpush1.bf16.msra.mxu0 0
    %1066 = vmatprep.subr.bf16.mxu0 0
    %1067 = vmatpush1.bf16.msra.mxu0 0
    %1068 = vmatprep.subr.bf16.mxu0 0
    %1069 = vmatpush1.bf16.msra.mxu0 0
    %1070 = vmatprep.subr.bf16.mxu0 0
    %1071 = vmatpush1.bf16.msra.mxu0 0
    %1072 = vmatprep.subr.bf16.mxu0 0
    %1073 = vmatpush1.bf16.msra.mxu0 0
    %1074 = vmatprep.subr.bf16.mxu0 0
    %1075 = vmatpush1.bf16.msra.mxu0 0
    %1076 = vmatprep.mubr.bf16.mxu0 0
    %1077 = vmatmul.mubr.bf16.gmra.mrb[0].mxu0 %v1040
    %v1078 = vpop.f32.mrb[0].mxu0
    %v1079 = vadd.f32 0.0, %v1078
    %v1080 = vpop.f32.mrb[0].mxu0
    %v1081 = vpop.f32.mrb[0].mxu0
    %v1082 = vadd.f32 0.0, %v1081
    %v1083 = vpop.f32.mrb[0].mxu0
    %1084 = vdwg.mxu0
    %v1085 = vpack.c.bf16 %v1082, %v1079
    %v1086 = vlaneseq
    %v1087 = vshrl.u32 %v1086, 7
    %v1088 = vsub.s32 0, %v1087
    %v1089 = vrot.slane %v978, %v1088
    %v1091 = vsel %vm111, %v1085, 0
    %1093 = vmatprep.subr.bf16.mxu0 0
    %1094 = vmatpush1.bf16.msra.mxu0 %v976
    %1095 = vmatprep.subr.bf16.mxu0 0
    %1096 = vmatpush1.bf16.msra.mxu0 %v977
    %1097 = vmatprep.subr.bf16.mxu0 0
    %1098 = vmatpush1.bf16.msra.mxu0 0
    %1099 = vmatprep.subr.bf16.mxu0 0
    %1100 = vmatpush1.bf16.msra.mxu0 0
    %1101 = vmatprep.subr.bf16.mxu0 0
    %1102 = vmatpush1.bf16.msra.mxu0 0
    %1103 = vmatprep.subr.bf16.mxu0 0
    %1104 = vmatpush1.bf16.msra.mxu0 0
    %1105 = vmatprep.subr.bf16.mxu0 0
    %1106 = vmatpush1.bf16.msra.mxu0 0
    %1107 = vmatprep.subr.bf16.mxu0 0
    %1108 = vmatpush1.bf16.msra.mxu0 0
    %1109 = vmatprep.subr.bf16.mxu0 0
    %1110 = vmatpush1.bf16.msra.mxu0 0
    %1111 = vmatprep.subr.bf16.mxu0 0
    %1112 = vmatpush1.bf16.msra.mxu0 0
    %1113 = vmatprep.subr.bf16.mxu0 0
    %1114 = vmatpush1.bf16.msra.mxu0 0
    %1115 = vmatprep.subr.bf16.mxu0 0
    %1116 = vmatpush1.bf16.msra.mxu0 0
    %1117 = vmatprep.subr.bf16.mxu0 0
    %1118 = vmatpush1.bf16.msra.mxu0 0
    %1119 = vmatprep.subr.bf16.mxu0 0
    %1120 = vmatpush1.bf16.msra.mxu0 0
    %1121 = vmatprep.subr.bf16.mxu0 0
    %1122 = vmatpush1.bf16.msra.mxu0 0
    %1123 = vmatprep.subr.bf16.mxu0 0
    %1124 = vmatpush1.bf16.msra.mxu0 0
    %1125 = vmatprep.mubr.bf16.mxu0 0
    %1126 = vmatmul.mubr.bf16.gmra.mrb[0].mxu0 %v1091
    %v1127 = vpop.f32.mrb[0].mxu0
    %v1128 = vadd.f32 %v1089, %v1127
    %v1129 = vpop.f32.mrb[0].mxu0
    %v1130 = vpop.f32.mrb[0].mxu0
    %v1131 = vadd.f32 %v1089, %v1130
    %v1132 = vpop.f32.mrb[0].mxu0
    %1133 = vdwg.mxu0
    %vm1134 = vcmp.gt.f32.partialorder %v1128, 0.0
    %vm1135 = vcmp.gt.f32.partialorder %v1131, 0.0
    %v1136 = vmul.f32 %v1128, 0.01
    %v1137 = vmul.f32 %v1131, 0.01
    %v1138 = vsel %vm1134, %v1128, %v1136
    %v1139 = vsel %vm1135, %v1131, %v1137
    %v1140 = vsel %vm948, %v1020, 0.0
    %v1141 = vsel %vm952, %v1021, 0.0
    %v1142 = vadd.f32 %v1140, %v1141
    %v1143 = vrot.slane %v1142, 4
    %v1144 = vadd.f32 %v1142, %v1143
    %v1145 = vrot.slane %v1144, 2
    %v1146 = vadd.f32 %v1144, %v1145
    %v1147 = vrot.slane %v1146, 1
    %v1148 = vadd.f32 %v1146, %v1147
    %vm1149 = vcmp.eq.f32.partialorder %v1148, 0.0
    %v1150 = vsel %vm1149, 1.0, %v1148
    %v1151 = vmul.f32 %v1020, %v1020
    %v1152 = vmul.f32 %v1021, %v1021
    %v1153 = vrcp.pop %v1150
    %v1154 = vmul.f32 %v1151, %v1153
    %v1155 = vmul.f32 %v1152, %v1153
    %v1156 = vsel %vm948, %v1154, 0.0
    %1157 = vadd.xlane.f32.xlu0 %v1156
    %v1158 = vpop.xlane.xlu0 %1157
    %v1159 = vsel %vm952, %v1155, 0.0
    %1160 = vadd.xlane.f32.xlu0 %v1159
    %v1161 = vpop.xlane.xlu0 %1160
    %1162 = vadd.xlane.f32.xlu0 %v1140
    %v1163 = vpop.xlane.xlu0 %1162
    %1164 = vadd.xlane.f32.xlu0 %v1141
    %v1165 = vpop.xlane.xlu0 %1164
    %vm1166 = vcmp.eq.f32.partialorder %v1163, 0.0
    %vm1167 = vcmp.eq.f32.partialorder %v1165, 0.0
    %v1168 = vsel %vm1166, 1.0, %v1158
    %v1169 = vsel %vm1167, 1.0, %v1161
    %v1170 = vrcp.pop %v1168
    %v1171 = vmul.f32 %v1154, %v1170
    %v1172 = vrcp.pop %v1169
    %v1173 = vmul.f32 %v1155, %v1172
    %v1174 = vmax.f32 %v1171, 1e-15
    %v1175 = vmax.f32 %v1173, 1e-15
    %v1176 = vmax.f32 %v1020, 1e-15
    %v1177 = vmax.f32 %v1021, 1e-15
    %v1178 = vlog2.pop %v1174
    %v1179 = vmul.f32 %v1178, 0.6931472
    %v1180 = vlog2.pop %v1175
    %v1181 = vmul.f32 %v1180, 0.6931472
    %v1182 = vlog2.pop %v1176
    %v1183 = vmul.f32 %v1182, 0.6931472
    %v1184 = vlog2.pop %v1177
    %v1185 = vmul.f32 %v1184, 0.6931472
    %v1186 = vsub.f32 %v1179, %v1183
    %v1187 = vsub.f32 %v1181, %v1185
    %v1188 = vmul.f32 %v1174, %v1186
    %v1189 = vmul.f32 %v1175, %v1187
    %v1190 = vsel %vm948, %v1188, 0.0
    %v1191 = vsel %vm952, %v1189, 0.0
    %v1192 = vadd.f32 %v1190, %v1191
    %1193 = vadd.xlane.f32.xlu0 %v1192
    %v1194 = vpop.xlane.xlu0 %1193
    %v1195 = vrot.slane %v1194, 4
    %v1196 = vadd.f32 %v1194, %v1195
    %v1197 = vrot.slane %v1196, 2
    %v1198 = vadd.f32 %v1196, %v1197
    %v1199 = vrot.slane %v1198, 1
    %v1200 = vadd.f32 %v1198, %v1199
    %s1201 = vtos %v1200
    %v1202 = vpack.c.bf16 %v1139, %v1138
    %v1203 = vpack.c.bf16 %v980, %v979
    %v1204 = vpack.c.bf16 %v982, %v981
    %v1205 = vpack.c.bf16 %v984, %v983
    %v1206 = vpack.c.bf16 %v986, %v985
    %v1207 = vpack.c.bf16 %v988, %v987
    %vm1208 = vcmask 654336
    %v1210 = vsel %vm1208, %v1202, 0
    %1212 = vmatprep.subr.bf16.mxu0 0
    %1213 = vmatpush1.bf16.msra.mxu0 %v1203
    %1214 = vmatprep.subr.bf16.mxu0 0
    %1215 = vmatpush1.bf16.msra.mxu0 %v1204
    %1216 = vmatprep.subr.bf16.mxu0 0
    %1217 = vmatpush1.bf16.msra.mxu0 %v1205
    %1218 = vmatprep.subr.bf16.mxu0 0
    %1219 = vmatpush1.bf16.msra.mxu0 %v1206
    %1220 = vmatprep.subr.bf16.mxu0 0
    %1221 = vmatpush1.bf16.msra.mxu0 %v1207
    %1222 = vmatprep.subr.bf16.mxu0 0
    %1223 = vmatpush1.bf16.msra.mxu0 0
    %1224 = vmatprep.subr.bf16.mxu0 0
    %1225 = vmatpush1.bf16.msra.mxu0 0
    %1226 = vmatprep.subr.bf16.mxu0 0
    %1227 = vmatpush1.bf16.msra.mxu0 0
    %1228 = vmatprep.subr.bf16.mxu0 0
    %1229 = vmatpush1.bf16.msra.mxu0 0
    %1230 = vmatprep.subr.bf16.mxu0 0
    %1231 = vmatpush1.bf16.msra.mxu0 0
    %1232 = vmatprep.subr.bf16.mxu0 0
    %1233 = vmatpush1.bf16.msra.mxu0 0
    %1234 = vmatprep.subr.bf16.mxu0 0
    %1235 = vmatpush1.bf16.msra.mxu0 0
    %1236 = vmatprep.subr.bf16.mxu0 0
    %1237 = vmatpush1.bf16.msra.mxu0 0
    %1238 = vmatprep.subr.bf16.mxu0 0
    %1239 = vmatpush1.bf16.msra.mxu0 0
    %1240 = vmatprep.subr.bf16.mxu0 0
    %1241 = vmatpush1.bf16.msra.mxu0 0
    %1242 = vmatprep.subr.bf16.mxu0 0
    %1243 = vmatpush1.bf16.msra.mxu0 0
    %1244 = vmatprep.mubr.bf16.mxu0 0
    %1245 = vmatmul.mubr.bf16.gmra.mrb[0].mxu0 %v1210
    %v1246 = vpop.f32.mrb[0].mxu0
    %v1247 = vadd.f32 0.0, %v1246
    %v1248 = vpop.f32.mrb[0].mxu0
    %v1249 = vpop.f32.mrb[0].mxu0
    %v1250 = vadd.f32 0.0, %v1249
    %v1251 = vpop.f32.mrb[0].mxu0
    %1252 = vdwg.mxu0
    %v1253 = vmul.f32 %v1138, %v1138
    %v1254 = vmul.f32 %v1139, %v1139
    %v1255 = vsel %vm1208, %v1253, 0.0
    %1256 = vadd.xlane.f32.xlu0 %v1255
    %v1257 = vpop.xlane.xlu0 %1256
    %vm1258 = vcmask 648192
    %v1259 = vsel %vm1258, %v1254, 0.0
    %1260 = vadd.xlane.f32.xlu0 %v1259
    %v1261 = vpop.xlane.xlu0 %1260
    %v1262 = vlaneseq
    %v1263 = vshrl.u32 %v1262, 7
    %v1264 = vsub.s32 0, %v1263
    %v1265 = vrot.slane %v989, %v1264
    %v1266 = vadd.f32 %v1257, %v1265
    %v1267 = vadd.f32 %v1261, %v1265
    %v1268 = vmul.f32 %v1247, 2.0
    %v1269 = vmul.f32 %v1250, 2.0
    %v1270 = vsub.f32 %v1266, %v1268
    %v1271 = vsub.f32 %v1267, %v1269
    %v1272 = vmax.f32 %v1270, 0.0
    %v1273 = vmax.f32 %v1271, 0.0
    %v1274 = vadd.f32 %v1272, 1.0
    %v1275 = vadd.f32 %v1273, 1.0
    %v1276 = vrcp.pop %v1274
    %v1277 = vmul.f32 1.0, %v1276
    %v1278 = vrcp.pop %v1275
    %v1279 = vmul.f32 1.0, %v1278
    %vm1280 = vcmask 39936
    %v1282 = vsel %vm1280, %v1277, 0
    %v1285 = vsel %vm1280, %v1279, 0
    %vm1287 = vcmask 1044480
    %v1289 = vsel %vm1287, %v990, 0
    %1291 = vmatprep.subr.mxu0 0.0
    %1292 = vmatpush1.msra.mxu0 %v1289
    %1293 = vmatprep.subr.mxu0 0.0
    %1294 = vmatpush1.msra.mxu0 0.0
    %1295 = vmatprep.subr.mxu0 0.0
    %1296 = vmatpush1.msra.mxu0 0.0
    %1297 = vmatprep.subr.mxu0 0.0
    %1298 = vmatpush1.msra.mxu0 0.0
    %1299 = vmatprep.subr.mxu0 0.0
    %1300 = vmatpush1.msra.mxu0 0.0
    %1301 = vmatprep.subr.mxu0 0.0
    %1302 = vmatpush1.msra.mxu0 0.0
    %1303 = vmatprep.subr.mxu0 0.0
    %1304 = vmatpush1.msra.mxu0 0.0
    %1305 = vmatprep.subr.mxu0 0.0
    %1306 = vmatpush1.msra.mxu0 0.0
    %1307 = vmatprep.subr.mxu0 0.0
    %1308 = vmatpush1.msra.mxu0 0.0
    %1309 = vmatprep.subr.mxu0 0.0
    %1310 = vmatpush1.msra.mxu0 0.0
    %1311 = vmatprep.subr.mxu0 0.0
    %1312 = vmatpush1.msra.mxu0 0.0
    %1313 = vmatprep.subr.mxu0 0.0
    %1314 = vmatpush1.msra.mxu0 0.0
    %1315 = vmatprep.subr.mxu0 0.0
    %1316 = vmatpush1.msra.mxu0 0.0
    %1317 = vmatprep.subr.mxu0 0.0
    %1318 = vmatpush1.msra.mxu0 0.0
    %1319 = vmatprep.subr.mxu0 0.0
    %1320 = vmatpush1.msra.mxu0 0.0
    %1321 = vmatprep.subr.mxu0 0.0
    %1322 = vmatpush1.msra.mxu0 0.0
    %1323 = vmatprep.subr.mxu0 0.0
    %1324 = vmatpush1.msra.mxu0 0.0
    %1325 = vmatprep.subr.mxu0 0.0
    %1326 = vmatpush1.msra.mxu0 0.0
    %1327 = vmatprep.subr.mxu0 0.0
    %1328 = vmatpush1.msra.mxu0 0.0
    %1329 = vmatprep.subr.mxu0 0.0
    %1330 = vmatpush1.msra.mxu0 0.0
    %1331 = vmatprep.subr.mxu0 0.0
    %1332 = vmatpush1.msra.mxu0 0.0
    %1333 = vmatprep.subr.mxu0 0.0
    %1334 = vmatpush1.msra.mxu0 0.0
    %1335 = vmatprep.subr.mxu0 0.0
    %1336 = vmatpush1.msra.mxu0 0.0
    %1337 = vmatprep.subr.mxu0 0.0
    %1338 = vmatpush1.msra.mxu0 0.0
    %1339 = vmatprep.subr.mxu0 0.0
    %1340 = vmatpush1.msra.mxu0 0.0
    %1341 = vmatprep.subr.mxu0 0.0
    %1342 = vmatpush1.msra.mxu0 0.0
    %1343 = vmatprep.subr.mxu0 0.0
    %1344 = vmatpush1.msra.mxu0 0.0
    %1345 = vmatprep.subr.mxu0 0.0
    %1346 = vmatpush1.msra.mxu0 0.0
    %1347 = vmatprep.subr.mxu0 0.0
    %1348 = vmatpush1.msra.mxu0 0.0
    %1349 = vmatprep.subr.mxu0 0.0
    %1350 = vmatpush1.msra.mxu0 0.0
    %1351 = vmatprep.subr.mxu0 0.0
    %1352 = vmatpush1.msra.mxu0 0.0
    %1353 = vmatprep.subr.mxu0 0.0
    %1354 = vmatpush1.msra.mxu0 0.0
    %1355 = vmatprep.mubr.f32.mxu0 0.0
    %1356 = vmatmul.mubr.f32.gmra.mrb[0].mxu0 %v1282
    %v1357 = vpop.f32.mrb[0].mxu0
    %v1358 = vadd.f32 0.0, %v1357
    %v1359 = vpop.f32.mrb[0].mxu0
    %1360 = vmatprep.mubr.f32.mxu0 0.0
    %1361 = vmatmul.mubr.f32.gmra.mrb[0].mxu0 %v1285
    %v1362 = vpop.f32.mrb[0].mxu0
    %v1363 = vadd.f32 0.0, %v1362
    %v1364 = vpop.f32.mrb[0].mxu0
    %1365 = vdwg.mxu0
    %v1366 = vrcp.pop %v1358
    %v1367 = vmul.f32 %v1277, %v1366
    %v1368 = vrcp.pop %v1363
    %v1369 = vmul.f32 %v1279, %v1368
    %v1371 = vsel %vm1280, %v1367, 0
    %v1374 = vsel %vm1280, %v1369, 0
    %v1377 = vsel %vm1287, %v991, 0
    %1379 = vmatprep.subr.mxu0 0.0
    %1380 = vmatpush1.msra.mxu0 %v1377
    %1381 = vmatprep.subr.mxu0 0.0
    %1382 = vmatpush1.msra.mxu0 0.0
    %1383 = vmatprep.subr.mxu0 0.0
    %1384 = vmatpush1.msra.mxu0 0.0
    %1385 = vmatprep.subr.mxu0 0.0
    %1386 = vmatpush1.msra.mxu0 0.0
    %1387 = vmatprep.subr.mxu0 0.0
    %1388 = vmatpush1.msra.mxu0 0.0
    %1389 = vmatprep.subr.mxu0 0.0
    %1390 = vmatpush1.msra.mxu0 0.0
    %1391 = vmatprep.subr.mxu0 0.0
    %1392 = vmatpush1.msra.mxu0 0.0
    %1393 = vmatprep.subr.mxu0 0.0
    %1394 = vmatpush1.msra.mxu0 0.0
    %1395 = vmatprep.subr.mxu0 0.0
    %1396 = vmatpush1.msra.mxu0 0.0
    %1397 = vmatprep.subr.mxu0 0.0
    %1398 = vmatpush1.msra.mxu0 0.0
    %1399 = vmatprep.subr.mxu0 0.0
    %1400 = vmatpush1.msra.mxu0 0.0
    %1401 = vmatprep.subr.mxu0 0.0
    %1402 = vmatpush1.msra.mxu0 0.0
    %1403 = vmatprep.subr.mxu0 0.0
    %1404 = vmatpush1.msra.mxu0 0.0
    %1405 = vmatprep.subr.mxu0 0.0
    %1406 = vmatpush1.msra.mxu0 0.0
    %1407 = vmatprep.subr.mxu0 0.0
    %1408 = vmatpush1.msra.mxu0 0.0
    %1409 = vmatprep.subr.mxu0 0.0
    %1410 = vmatpush1.msra.mxu0 0.0
    %1411 = vmatprep.subr.mxu0 0.0
    %1412 = vmatpush1.msra.mxu0 0.0
    %1413 = vmatprep.subr.mxu0 0.0
    %1414 = vmatpush1.msra.mxu0 0.0
    %1415 = vmatprep.subr.mxu0 0.0
    %1416 = vmatpush1.msra.mxu0 0.0
    %1417 = vmatprep.subr.mxu0 0.0
    %1418 = vmatpush1.msra.mxu0 0.0
    %1419 = vmatprep.subr.mxu0 0.0
    %1420 = vmatpush1.msra.mxu0 0.0
    %1421 = vmatprep.subr.mxu0 0.0
    %1422 = vmatpush1.msra.mxu0 0.0
    %1423 = vmatprep.subr.mxu0 0.0
    %1424 = vmatpush1.msra.mxu0 0.0
    %1425 = vmatprep.subr.mxu0 0.0
    %1426 = vmatpush1.msra.mxu0 0.0
    %1427 = vmatprep.subr.mxu0 0.0
    %1428 = vmatpush1.msra.mxu0 0.0
    %1429 = vmatprep.subr.mxu0 0.0
    %1430 = vmatpush1.msra.mxu0 0.0
    %1431 = vmatprep.subr.mxu0 0.0
    %1432 = vmatpush1.msra.mxu0 0.0
    %1433 = vmatprep.subr.mxu0 0.0
    %1434 = vmatpush1.msra.mxu0 0.0
    %1435 = vmatprep.subr.mxu0 0.0
    %1436 = vmatpush1.msra.mxu0 0.0
    %1437 = vmatprep.subr.mxu0 0.0
    %1438 = vmatpush1.msra.mxu0 0.0
    %1439 = vmatprep.subr.mxu0 0.0
    %1440 = vmatpush1.msra.mxu0 0.0
    %1441 = vmatprep.subr.mxu0 0.0
    %1442 = vmatpush1.msra.mxu0 0.0
    %1443 = vmatprep.mubr.f32.mxu0 0.0
    %1444 = vmatmul.mubr.f32.gmra.mrb[0].mxu0 %v1371
    %v1445 = vpop.f32.mrb[0].mxu0
    %v1446 = vadd.f32 0.0, %v1445
    %v1447 = vpop.f32.mrb[0].mxu0
    %1448 = vmatprep.mubr.f32.mxu0 0.0
    %1449 = vmatmul.mubr.f32.gmra.mrb[0].mxu0 %v1374
    %v1450 = vpop.f32.mrb[0].mxu0
    %v1451 = vadd.f32 0.0, %v1450
    %v1452 = vpop.f32.mrb[0].mxu0
    %1453 = vdwg.mxu0
    %v1454 = vsub.f32 %v1446, %v1446
    %v1455 = vsub.f32 %v1451, %v1451
    %v1456 = vmul.f32 %v1454, 1.442695
    %v1457 = vpow.pop %v1456
    %v1458 = vmul.f32 %v1455, 1.442695
    %v1459 = vpow.pop %v1458
    %v1460 = vadd.f32 %v1457, 0.0
    %v1461 = vadd.f32 %v1459, 0.0
    %v1462 = vrcp.pop %v1460
    %v1463 = vmul.f32 %v1457, %v1462
    %v1464 = vrcp.pop %v1461
    %v1465 = vmul.f32 %v1459, %v1464
    %v1466 = vpack.c.bf16 %v1465, %v1463
    %1467 = vxpose.xlu0.c.b16.start [1/8] %v1466, 128
    %1468 = vxpose.xlu0.c.b16.cont [2/8] 0, 128
    %1469 = vxpose.xlu0.c.b16.cont [3/8] 0, 128
    %1470 = vxpose.xlu0.c.b16.cont [4/8] 0, 128
    %1471 = vxpose.xlu0.c.b16.cont [5/8] 0, 128
    %1472 = vxpose.xlu0.c.b16.cont [6/8] 0, 128
    %1473 = vxpose.xlu0.c.b16.cont [7/8] 0, 128
    %1474 = vxpose.xlu0.c.b16.end [8/8] 0, 128
    %v1475 = vpop.trf.xlu0
    %v1476 = vpop.trf.xlu0
    %v1477 = vpop.trf.xlu0
    %v1478 = vpop.trf.xlu0
    %v1479 = vpop.trf.xlu0
    %v1480 = vpop.trf.xlu0
    %v1481 = vpop.trf.xlu0
    %v1482 = vpop.trf.xlu0
    %v1484 = vsel %vm948, %v1475, 0
    %v1486 = vsel %vm1287, %v1202, 0
    %1488 = vmatprep.subr.bf16.mxu0 0
    %1489 = vmatpush1.bf16.msra.mxu0 %v1486
    %1490 = vmatprep.subr.bf16.mxu0 0
    %1491 = vmatpush1.bf16.msra.mxu0 0
    %1492 = vmatprep.subr.bf16.mxu0 0
    %1493 = vmatpush1.bf16.msra.mxu0 0
    %1494 = vmatprep.subr.bf16.mxu0 0
    %1495 = vmatpush1.bf16.msra.mxu0 0
    %1496 = vmatprep.subr.bf16.mxu0 0
    %1497 = vmatpush1.bf16.msra.mxu0 0
    %1498 = vmatprep.subr.bf16.mxu0 0
    %1499 = vmatpush1.bf16.msra.mxu0 0
    %1500 = vmatprep.subr.bf16.mxu0 0
    %1501 = vmatpush1.bf16.msra.mxu0 0
    %1502 = vmatprep.subr.bf16.mxu0 0
    %1503 = vmatpush1.bf16.msra.mxu0 0
    %1504 = vmatprep.subr.bf16.mxu0 0
    %1505 = vmatpush1.bf16.msra.mxu0 0
    %1506 = vmatprep.subr.bf16.mxu0 0
    %1507 = vmatpush1.bf16.msra.mxu0 0
    %1508 = vmatprep.subr.bf16.mxu0 0
    %1509 = vmatpush1.bf16.msra.mxu0 0
    %1510 = vmatprep.subr.bf16.mxu0 0
    %1511 = vmatpush1.bf16.msra.mxu0 0
    %1512 = vmatprep.subr.bf16.mxu0 0
    %1513 = vmatpush1.bf16.msra.mxu0 0
    %1514 = vmatprep.subr.bf16.mxu0 0
    %1515 = vmatpush1.bf16.msra.mxu0 0
    %1516 = vmatprep.subr.bf16.mxu0 0
    %1517 = vmatpush1.bf16.msra.mxu0 0
    %1518 = vmatprep.subr.bf16.mxu0 0
    %1519 = vmatpush1.bf16.msra.mxu0 0
    %1520 = vmatprep.mubr.bf16.mxu0 0
    %1521 = vmatmul.mubr.bf16.gmra.mrb[0].mxu0 %v1484
    %v1522 = vpop.f32.mrb[0].mxu0
    %v1523 = vadd.f32 0.0, %v1522
    %v1524 = vpop.f32.mrb[0].mxu0
    %v1525 = vpop.f32.mrb[0].mxu0
    %v1526 = vpop.f32.mrb[0].mxu0
    %1527 = vdwg.mxu0
    %v1528 = vpack.c.bf16 %v1523, %v1523
    %v1530 = vsel %vm1208, %v1528, 0
    %1532 = vmatprep.subr.bf16.mxu0 0
    %1533 = vmatpush1.bf16.msra.mxu0 %v1002
    %1534 = vmatprep.subr.bf16.mxu0 0
    %1535 = vmatpush1.bf16.msra.mxu0 %v1003
    %1536 = vmatprep.subr.bf16.mxu0 0
    %1537 = vmatpush1.bf16.msra.mxu0 %v1004
    %1538 = vmatprep.subr.bf16.mxu0 0
    %1539 = vmatpush1.bf16.msra.mxu0 %v1005
    %1540 = vmatprep.subr.bf16.mxu0 0
    %1541 = vmatpush1.bf16.msra.mxu0 %v1006
    %1542 = vmatprep.subr.bf16.mxu0 0
    %1543 = vmatpush1.bf16.msra.mxu0 0
    %1544 = vmatprep.subr.bf16.mxu0 0
    %1545 = vmatpush1.bf16.msra.mxu0 0
    %1546 = vmatprep.subr.bf16.mxu0 0
    %1547 = vmatpush1.bf16.msra.mxu0 0
    %1548 = vmatprep.subr.bf16.mxu0 0
    %1549 = vmatpush1.bf16.msra.mxu0 0
    %1550 = vmatprep.subr.bf16.mxu0 0
    %1551 = vmatpush1.bf16.msra.mxu0 0
    %1552 = vmatprep.subr.bf16.mxu0 0
    %1553 = vmatpush1.bf16.msra.mxu0 0
    %1554 = vmatprep.subr.bf16.mxu0 0
    %1555 = vmatpush1.bf16.msra.mxu0 0
    %1556 = vmatprep.subr.bf16.mxu0 0
    %1557 = vmatpush1.bf16.msra.mxu0 0
    %1558 = vmatprep.subr.bf16.mxu0 0
    %1559 = vmatpush1.bf16.msra.mxu0 0
    %1560 = vmatprep.subr.bf16.mxu0 0
    %1561 = vmatpush1.bf16.msra.mxu0 0
    %1562 = vmatprep.subr.bf16.mxu0 0
    %1563 = vmatpush1.bf16.msra.mxu0 0
    %1564 = vmatprep.mubr.bf16.mxu0 0
    %1565 = vmatmul.mubr.bf16.gmra.mrb[0].mxu0 %v1530
    %v1566 = vpop.f32.mrb[0].mxu0
    %v1567 = vadd.f32 %v1007, %v1566
    %v1568 = vpop.f32.mrb[0].mxu0
    %v1569 = vpop.f32.mrb[0].mxu0
    %v1570 = vpop.f32.mrb[0].mxu0
    %1571 = vdwg.mxu0
    %vm1572 = vcmask 1040384
    %v1573 = vsel %vm1572, %v1567, -inf
    %1574 = vmax.xlane.f32.xlu0 %v1573
    %v1575 = vpop.xlane.xlu0 %1574
    %v1576 = vsub.f32 %v1567, %v1575
    %v1577 = vmul.f32 %v1576, 1.442695
    %v1578 = vpow.pop %v1577
    %v1579 = vsel %vm1572, %v1578, 0.0
    %1580 = vadd.xlane.f32.xlu0 %v1579
    %v1581 = vpop.xlane.xlu0 %1580
    %v1582 = vlog2.pop %v1581
    %v1583 = vmul.f32 %v1582, 0.6931472
    %v1584 = vsub.f32 %v1576, %v1583
    %1585 = vst [vmem:[#allocation7] sm:$0x1] %v1584
    %v1586 = vstv %s1201
    %v1587 = vadd.f32 %v1586, 0.0
    %vm1588 = vcmask 7168
    %v1589 = vsel %vm1588, %v1463, 0.0
    %vm1590 = vcmask 1024
    %v1591 = vsel %vm1590, %v1465, 0.0
    %v1592 = vadd.f32 %v1589, %v1591
    %v1593 = vrot.slane %v1592, 4
    %v1594 = vadd.f32 %v1592, %v1593
    %v1595 = vrot.slane %v1594, 2
    %v1596 = vadd.f32 %v1594, %v1595
    %v1597 = vrot.slane %v1596, 1
    %v1598 = vadd.f32 %v1596, %v1597
    %vm1599 = vcmp.eq.f32.partialorder %v1598, 0.0
    %v1600 = vsel %vm1599, 1.0, %v1598
    %v1601 = vmul.f32 %v1463, %v1463
    %v1602 = vmul.f32 %v1465, %v1465
    %v1603 = vrcp.pop %v1600
    %v1604 = vmul.f32 %v1601, %v1603
    %v1605 = vmul.f32 %v1602, %v1603
    %v1606 = vadd.f32 %v1604, 0.0
    %v1607 = vadd.f32 %v1605, 0.0
    %v1608 = vadd.f32 %v1463, 0.0
    %v1609 = vadd.f32 %v1465, 0.0
    %vm1610 = vcmp.eq.f32.partialorder %v1608, 0.0
    %vm1611 = vcmp.eq.f32.partialorder %v1609, 0.0
    %v1612 = vsel %vm1610, 1.0, %v1606
    %v1613 = vsel %vm1611, 1.0, %v1607
    %v1614 = vrcp.pop %v1612
    %v1615 = vmul.f32 %v1604, %v1614
    %v1616 = vrcp.pop %v1613
    %v1617 = vmul.f32 %v1605, %v1616
    %v1618 = vmax.f32 %v1615, 1e-15
    %v1619 = vmax.f32 %v1617, 1e-15
    %v1620 = vmax.f32 %v1463, 1e-15
    %v1621 = vmax.f32 %v1465, 1e-15
    %v1622 = vlog2.pop %v1618
    %v1623 = vmul.f32 %v1622, 0.6931472
    %v1624 = vlog2.pop %v1619
    %v1625 = vmul.f32 %v1624, 0.6931472
    %v1626 = vlog2.pop %v1620
    %v1627 = vmul.f32 %v1626, 0.6931472
    %v1628 = vlog2.pop %v1621
    %v1629 = vmul.f32 %v1628, 0.6931472
    %v1630 = vsub.f32 %v1623, %v1627
    %v1631 = vsub.f32 %v1625, %v1629
    %v1632 = vmul.f32 %v1618, %v1630
    %v1633 = vmul.f32 %v1619, %v1631
    %v1634 = vsel %vm1588, %v1632, 0.0
    %v1635 = vsel %vm1590, %v1633, 0.0
    %v1636 = vadd.f32 %v1634, %v1635
    %1637 = vadd.xlane.f32.xlu0 %v1636
    %v1638 = vpop.xlane.xlu0 %1637
    %v1639 = vrot.slane %v1638, 4
    %v1640 = vadd.f32 %v1638, %v1639
    %v1641 = vrot.slane %v1640, 2
    %v1642 = vadd.f32 %v1640, %v1641
    %v1643 = vrot.slane %v1642, 1
    %v1644 = vadd.f32 %v1642, %v1643
    %s1645 = vtos %v1644
    %v1646 = vstv %s1645
    %v1647 = vadd.f32 %v1587, %v1646
    %1648 = vset.pattern.permute.xlu0 1
    %1649 = vperm.xlu0 %1648, %v1008
    %v1650 = vpop.permute.xlu0 %1649
    %1652 = vset.pattern.permute.xlu0 1
    %1653 = vperm.xlu0 %1652, %v1009
    %v1654 = vpop.permute.xlu0 %1653
    %v1656 = vmul.f32 %v969, %v1650
    %v1657 = vmul.f32 %v971, %v1654
    %v1658 = vpack.c.bf16 %v1657, %v1656
    %1659 = vxpose.xlu0.c.b16.start [1/8] %v1658, 128
    %1660 = vxpose.xlu0.c.b16.cont [2/8] 0, 128
    %1661 = vxpose.xlu0.c.b16.cont [3/8] 0, 128
    %1662 = vxpose.xlu0.c.b16.cont [4/8] 0, 128
    %1663 = vxpose.xlu0.c.b16.cont [5/8] 0, 128
    %1664 = vxpose.xlu0.c.b16.cont [6/8] 0, 128
    %1665 = vxpose.xlu0.c.b16.cont [7/8] 0, 128
    %1666 = vxpose.xlu0.c.b16.end [8/8] 0, 128
    %v1667 = vpop.trf.xlu0
    %v1668 = vpop.trf.xlu0
    %v1669 = vpop.trf.xlu0
    %v1670 = vpop.trf.xlu0
    %v1671 = vpop.trf.xlu0
    %v1672 = vpop.trf.xlu0
    %v1673 = vpop.trf.xlu0
    %v1674 = vpop.trf.xlu0
    %v1676 = vsel %vm314, %v1667, 0
    %1678 = vmatprep.subr.bf16.mxu0 0
    %1679 = vmatpush1.bf16.msra.mxu0 %v1042
    %1680 = vmatprep.subr.bf16.mxu0 0
    %1681 = vmatpush1.bf16.msra.mxu0 0
    %1682 = vmatprep.subr.bf16.mxu0 0
    %1683 = vmatpush1.bf16.msra.mxu0 0
    %1684 = vmatprep.subr.bf16.mxu0 0
    %1685 = vmatpush1.bf16.msra.mxu0 0
    %1686 = vmatprep.subr.bf16.mxu0 0
    %1687 = vmatpush1.bf16.msra.mxu0 0
    %1688 = vmatprep.subr.bf16.mxu0 0
    %1689 = vmatpush1.bf16.msra.mxu0 0
    %1690 = vmatprep.subr.bf16.mxu0 0
    %1691 = vmatpush1.bf16.msra.mxu0 0
    %1692 = vmatprep.subr.bf16.mxu0 0
    %1693 = vmatpush1.bf16.msra.mxu0 0
    %1694 = vmatprep.subr.bf16.mxu0 0
    %1695 = vmatpush1.bf16.msra.mxu0 0
    %1696 = vmatprep.subr.bf16.mxu0 0
    %1697 = vmatpush1.bf16.msra.mxu0 0
    %1698 = vmatprep.subr.bf16.mxu0 0
    %1699 = vmatpush1.bf16.msra.mxu0 0
    %1700 = vmatprep.subr.bf16.mxu0 0
    %1701 = vmatpush1.bf16.msra.mxu0 0
    %1702 = vmatprep.subr.bf16.mxu0 0
    %1703 = vmatpush1.bf16.msra.mxu0 0
    %1704 = vmatprep.subr.bf16.mxu0 0
    %1705 = vmatpush1.bf16.msra.mxu0 0
    %1706 = vmatprep.subr.bf16.mxu0 0
    %1707 = vmatpush1.bf16.msra.mxu0 0
    %1708 = vmatprep.subr.bf16.mxu0 0
    %1709 = vmatpush1.bf16.msra.mxu0 0
    %1710 = vmatprep.mubr.bf16.mxu0 0
    %1711 = vmatmul.mubr.bf16.gmra.mrb[0].mxu0 %v1676
    %v1712 = vpop.f32.mrb[0].mxu0
    %v1713 = vadd.f32 0.0, %v1712
    %v1714 = vpop.f32.mrb[0].mxu0
    %v1715 = vpop.f32.mrb[0].mxu0
    %v1716 = vadd.f32 0.0, %v1715
    %v1717 = vpop.f32.mrb[0].mxu0
    %1718 = vdwg.mxu0
    %v1719 = vpack.c.bf16 %v1716, %v1713
    %v1721 = vsel %vm111, %v1719, 0
    %1723 = vmatprep.subr.bf16.mxu0 0
    %1724 = vmatpush1.bf16.msra.mxu0 %v976
    %1725 = vmatprep.subr.bf16.mxu0 0
    %1726 = vmatpush1.bf16.msra.mxu0 %v977
    %1727 = vmatprep.subr.bf16.mxu0 0
    %1728 = vmatpush1.bf16.msra.mxu0 0
    %1729 = vmatprep.subr.bf16.mxu0 0
    %1730 = vmatpush1.bf16.msra.mxu0 0
    %1731 = vmatprep.subr.bf16.mxu0 0
    %1732 = vmatpush1.bf16.msra.mxu0 0
    %1733 = vmatprep.subr.bf16.mxu0 0
    %1734 = vmatpush1.bf16.msra.mxu0 0
    %1735 = vmatprep.subr.bf16.mxu0 0
    %1736 = vmatpush1.bf16.msra.mxu0 0
    %1737 = vmatprep.subr.bf16.mxu0 0
    %1738 = vmatpush1.bf16.msra.mxu0 0
    %1739 = vmatprep.subr.bf16.mxu0 0
    %1740 = vmatpush1.bf16.msra.mxu0 0
    %1741 = vmatprep.subr.bf16.mxu0 0
    %1742 = vmatpush1.bf16.msra.mxu0 0
    %1743 = vmatprep.subr.bf16.mxu0 0
    %1744 = vmatpush1.bf16.msra.mxu0 0
    %1745 = vmatprep.subr.bf16.mxu0 0
    %1746 = vmatpush1.bf16.msra.mxu0 0
    %1747 = vmatprep.subr.bf16.mxu0 0
    %1748 = vmatpush1.bf16.msra.mxu0 0
    %1749 = vmatprep.subr.bf16.mxu0 0
    %1750 = vmatpush1.bf16.msra.mxu0 0
    %1751 = vmatprep.subr.bf16.mxu0 0
    %1752 = vmatpush1.bf16.msra.mxu0 0
    %1753 = vmatprep.subr.bf16.mxu0 0
    %1754 = vmatpush1.bf16.msra.mxu0 0
    %1755 = vmatprep.mubr.bf16.mxu0 0
    %1756 = vmatmul.mubr.bf16.gmra.mrb[0].mxu0 %v1721
    %v1757 = vpop.f32.mrb[0].mxu0
    %v1758 = vadd.f32 %v1089, %v1757
    %v1759 = vpop.f32.mrb[0].mxu0
    %v1760 = vpop.f32.mrb[0].mxu0
    %v1761 = vadd.f32 %v1089, %v1760
    %v1762 = vpop.f32.mrb[0].mxu0
    %1763 = vdwg.mxu0
    %vm1764 = vcmp.gt.f32.partialorder %v1758, 0.0
    %vm1765 = vcmp.gt.f32.partialorder %v1761, 0.0
    %v1766 = vmul.f32 %v1758, 0.01
    %v1767 = vmul.f32 %v1761, 0.01
    %v1768 = vsel %vm1764, %v1758, %v1766
    %v1769 = vsel %vm1765, %v1761, %v1767
    %v1770 = vsel %vm948, %v1656, 0.0
    %v1771 = vsel %vm952, %v1657, 0.0
    %v1772 = vadd.f32 %v1770, %v1771
    %v1773 = vrot.slane %v1772, 4
    %v1774 = vadd.f32 %v1772, %v1773
    %v1775 = vrot.slane %v1774, 2
    %v1776 = vadd.f32 %v1774, %v1775
    %v1777 = vrot.slane %v1776, 1
    %v1778 = vadd.f32 %v1776, %v1777
    %vm1779 = vcmp.eq.f32.partialorder %v1778, 0.0
    %v1780 = vsel %vm1779, 1.0, %v1778
    %v1781 = vmul.f32 %v1656, %v1656
    %v1782 = vmul.f32 %v1657, %v1657
    %v1783 = vrcp.pop %v1780
    %v1784 = vmul.f32 %v1781, %v1783
    %v1785 = vmul.f32 %v1782, %v1783
    %v1786 = vsel %vm948, %v1784, 0.0
    %1787 = vadd.xlane.f32.xlu0 %v1786
    %v1788 = vpop.xlane.xlu0 %1787
    %v1789 = vsel %vm952, %v1785, 0.0
    %1790 = vadd.xlane.f32.xlu0 %v1789
    %v1791 = vpop.xlane.xlu0 %1790
    %1792 = vadd.xlane.f32.xlu0 %v1770
    %v1793 = vpop.xlane.xlu0 %1792
    %1794 = vadd.xlane.f32.xlu0 %v1771
    %v1795 = vpop.xlane.xlu0 %1794
    %vm1796 = vcmp.eq.f32.partialorder %v1793, 0.0
    %vm1797 = vcmp.eq.f32.partialorder %v1795, 0.0
    %v1798 = vsel %vm1796, 1.0, %v1788
    %v1799 = vsel %vm1797, 1.0, %v1791
    %v1800 = vrcp.pop %v1798
    %v1801 = vmul.f32 %v1784, %v1800
    %v1802 = vrcp.pop %v1799
    %v1803 = vmul.f32 %v1785, %v1802
    %v1804 = vmax.f32 %v1801, 1e-15
    %v1805 = vmax.f32 %v1803, 1e-15
    %v1806 = vmax.f32 %v1656, 1e-15
    %v1807 = vmax.f32 %v1657, 1e-15
    %v1808 = vlog2.pop %v1804
    %v1809 = vmul.f32 %v1808, 0.6931472
    %v1810 = vlog2.pop %v1805
    %v1811 = vmul.f32 %v1810, 0.6931472
    %v1812 = vlog2.pop %v1806
    %v1813 = vmul.f32 %v1812, 0.6931472
    %v1814 = vlog2.pop %v1807
    %v1815 = vmul.f32 %v1814, 0.6931472
    %v1816 = vsub.f32 %v1809, %v1813
    %v1817 = vsub.f32 %v1811, %v1815
    %v1818 = vmul.f32 %v1804, %v1816
    %v1819 = vmul.f32 %v1805, %v1817
    %v1820 = vsel %vm948, %v1818, 0.0
    %v1821 = vsel %vm952, %v1819, 0.0
    %v1822 = vadd.f32 %v1820, %v1821
    %1823 = vadd.xlane.f32.xlu0 %v1822
    %v1824 = vpop.xlane.xlu0 %1823
    %v1825 = vrot.slane %v1824, 4
    %v1826 = vadd.f32 %v1824, %v1825
    %v1827 = vrot.slane %v1826, 2
    %v1828 = vadd.f32 %v1826, %v1827
    %v1829 = vrot.slane %v1828, 1
    %v1830 = vadd.f32 %v1828, %v1829
    %s1831 = vtos %v1830
    %v1832 = vpack.c.bf16 %v1769, %v1768
    %v1834 = vsel %vm1208, %v1832, 0
    %1836 = vmatprep.subr.bf16.mxu0 0
    %1837 = vmatpush1.bf16.msra.mxu0 %v1203
    %1838 = vmatprep.subr.bf16.mxu0 0
    %1839 = vmatpush1.bf16.msra.mxu0 %v1204
    %1840 = vmatprep.subr.bf16.mxu0 0
    %1841 = vmatpush1.bf16.msra.mxu0 %v1205
    %1842 = vmatprep.subr.bf16.mxu0 0
    %1843 = vmatpush1.bf16.msra.mxu0 %v1206
    %1844 = vmatprep.subr.bf16.mxu0 0
    %1845 = vmatpush1.bf16.msra.mxu0 %v1207
    %1846 = vmatprep.subr.bf16.mxu0 0
    %1847 = vmatpush1.bf16.msra.mxu0 0
    %1848 = vmatprep.subr.bf16.mxu0 0
    %1849 = vmatpush1.bf16.msra.mxu0 0
    %1850 = vmatprep.subr.bf16.mxu0 0
    %1851 = vmatpush1.bf16.msra.mxu0 0
    %1852 = vmatprep.subr.bf16.mxu0 0
    %1853 = vmatpush1.bf16.msra.mxu0 0
    %1854 = vmatprep.subr.bf16.mxu0 0
    %1855 = vmatpush1.bf16.msra.mxu0 0
    %1856 = vmatprep.subr.bf16.mxu0 0
    %1857 = vmatpush1.bf16.msra.mxu0 0
    %1858 = vmatprep.subr.bf16.mxu0 0
    %1859 = vmatpush1.bf16.msra.mxu0 0
    %1860 = vmatprep.subr.bf16.mxu0 0
    %1861 = vmatpush1.bf16.msra.mxu0 0
    %1862 = vmatprep.subr.bf16.mxu0 0
    %1863 = vmatpush1.bf16.msra.mxu0 0
    %1864 = vmatprep.subr.bf16.mxu0 0
    %1865 = vmatpush1.bf16.msra.mxu0 0
    %1866 = vmatprep.subr.bf16.mxu0 0
    %1867 = vmatpush1.bf16.msra.mxu0 0
    %1868 = vmatprep.mubr.bf16.mxu0 0
    %1869 = vmatmul.mubr.bf16.gmra.mrb[0].mxu0 %v1834
    %v1870 = vpop.f32.mrb[0].mxu0
    %v1871 = vadd.f32 0.0, %v1870
    %v1872 = vpop.f32.mrb[0].mxu0
    %v1873 = vpop.f32.mrb[0].mxu0
    %v1874 = vadd.f32 0.0, %v1873
    %v1875 = vpop.f32.mrb[0].mxu0
    %1876 = vdwg.mxu0
    %v1877 = vmul.f32 %v1768, %v1768
    %v1878 = vmul.f32 %v1769, %v1769
    %v1879 = vsel %vm1208, %v1877, 0.0
    %1880 = vadd.xlane.f32.xlu0 %v1879
    %v1881 = vpop.xlane.xlu0 %1880
    %v1882 = vsel %vm1258, %v1878, 0.0
    %1883 = vadd.xlane.f32.xlu0 %v1882
    %v1884 = vpop.xlane.xlu0 %1883
    %v1885 = vadd.f32 %v1881, %v1265
    %v1886 = vadd.f32 %v1884, %v1265
    %v1887 = vmul.f32 %v1871, 2.0
    %v1888 = vmul.f32 %v1874, 2.0
    %v1889 = vsub.f32 %v1885, %v1887
    %v1890 = vsub.f32 %v1886, %v1888
    %v1891 = vmax.f32 %v1889, 0.0
    %v1892 = vmax.f32 %v1890, 0.0
    %v1893 = vadd.f32 %v1891, 1.0
    %v1894 = vadd.f32 %v1892, 1.0
    %v1895 = vrcp.pop %v1893
    %v1896 = vmul.f32 1.0, %v1895
    %v1897 = vrcp.pop %v1894
    %v1898 = vmul.f32 1.0, %v1897
    %v1900 = vsel %vm1280, %v1896, 0
    %v1903 = vsel %vm1280, %v1898, 0
    %1905 = vmatprep.subr.mxu0 0.0
    %1906 = vmatpush1.msra.mxu0 %v1289
    %1907 = vmatprep.subr.mxu0 0.0
    %1908 = vmatpush1.msra.mxu0 0.0
    %1909 = vmatprep.subr.mxu0 0.0
    %1910 = vmatpush1.msra.mxu0 0.0
    %1911 = vmatprep.subr.mxu0 0.0
    %1912 = vmatpush1.msra.mxu0 0.0
    %1913 = vmatprep.subr.mxu0 0.0
    %1914 = vmatpush1.msra.mxu0 0.0
    %1915 = vmatprep.subr.mxu0 0.0
    %1916 = vmatpush1.msra.mxu0 0.0
    %1917 = vmatprep.subr.mxu0 0.0
    %1918 = vmatpush1.msra.mxu0 0.0
    %1919 = vmatprep.subr.mxu0 0.0
    %1920 = vmatpush1.msra.mxu0 0.0
    %1921 = vmatprep.subr.mxu0 0.0
    %1922 = vmatpush1.msra.mxu0 0.0
    %1923 = vmatprep.subr.mxu0 0.0
    %1924 = vmatpush1.msra.mxu0 0.0
    %1925 = vmatprep.subr.mxu0 0.0
    %1926 = vmatpush1.msra.mxu0 0.0
    %1927 = vmatprep.subr.mxu0 0.0
    %1928 = vmatpush1.msra.mxu0 0.0
    %1929 = vmatprep.subr.mxu0 0.0
    %1930 = vmatpush1.msra.mxu0 0.0
    %1931 = vmatprep.subr.mxu0 0.0
    %1932 = vmatpush1.msra.mxu0 0.0
    %1933 = vmatprep.subr.mxu0 0.0
    %1934 = vmatpush1.msra.mxu0 0.0
    %1935 = vmatprep.subr.mxu0 0.0
    %1936 = vmatpush1.msra.mxu0 0.0
    %1937 = vmatprep.subr.mxu0 0.0
    %1938 = vmatpush1.msra.mxu0 0.0
    %1939 = vmatprep.subr.mxu0 0.0
    %1940 = vmatpush1.msra.mxu0 0.0
    %1941 = vmatprep.subr.mxu0 0.0
    %1942 = vmatpush1.msra.mxu0 0.0
    %1943 = vmatprep.subr.mxu0 0.0
    %1944 = vmatpush1.msra.mxu0 0.0
    %1945 = vmatprep.subr.mxu0 0.0
    %1946 = vmatpush1.msra.mxu0 0.0
    %1947 = vmatprep.subr.mxu0 0.0
    %1948 = vmatpush1.msra.mxu0 0.0
    %1949 = vmatprep.subr.mxu0 0.0
    %1950 = vmatpush1.msra.mxu0 0.0
    %1951 = vmatprep.subr.mxu0 0.0
    %1952 = vmatpush1.msra.mxu0 0.0
    %1953 = vmatprep.subr.mxu0 0.0
    %1954 = vmatpush1.msra.mxu0 0.0
    %1955 = vmatprep.subr.mxu0 0.0
    %1956 = vmatpush1.msra.mxu0 0.0
    %1957 = vmatprep.subr.mxu0 0.0
    %1958 = vmatpush1.msra.mxu0 0.0
    %1959 = vmatprep.subr.mxu0 0.0
    %1960 = vmatpush1.msra.mxu0 0.0
    %1961 = vmatprep.subr.mxu0 0.0
    %1962 = vmatpush1.msra.mxu0 0.0
    %1963 = vmatprep.subr.mxu0 0.0
    %1964 = vmatpush1.msra.mxu0 0.0
    %1965 = vmatprep.subr.mxu0 0.0
    %1966 = vmatpush1.msra.mxu0 0.0
    %1967 = vmatprep.subr.mxu0 0.0
    %1968 = vmatpush1.msra.mxu0 0.0
    %1969 = vmatprep.mubr.f32.mxu0 0.0
    %1970 = vmatmul.mubr.f32.gmra.mrb[0].mxu0 %v1900
    %v1971 = vpop.f32.mrb[0].mxu0
    %v1972 = vadd.f32 0.0, %v1971
    %v1973 = vpop.f32.mrb[0].mxu0
    %1974 = vmatprep.mubr.f32.mxu0 0.0
    %1975 = vmatmul.mubr.f32.gmra.mrb[0].mxu0 %v1903
    %v1976 = vpop.f32.mrb[0].mxu0
    %v1977 = vadd.f32 0.0, %v1976
    %v1978 = vpop.f32.mrb[0].mxu0
    %1979 = vdwg.mxu0
    %v1980 = vrcp.pop %v1972
    %v1981 = vmul.f32 %v1896, %v1980
    %v1982 = vrcp.pop %v1977
    %v1983 = vmul.f32 %v1898, %v1982
    %v1985 = vsel %vm1280, %v1981, 0
    %v1988 = vsel %vm1280, %v1983, 0
    %1990 = vmatprep.subr.mxu0 0.0
    %1991 = vmatpush1.msra.mxu0 %v1377
    %1992 = vmatprep.subr.mxu0 0.0
    %1993 = vmatpush1.msra.mxu0 0.0
    %1994 = vmatprep.subr.mxu0 0.0
    %1995 = vmatpush1.msra.mxu0 0.0
    %1996 = vmatprep.subr.mxu0 0.0
    %1997 = vmatpush1.msra.mxu0 0.0
    %1998 = vmatprep.subr.mxu0 0.0
    %1999 = vmatpush1.msra.mxu0 0.0
    %2000 = vmatprep.subr.mxu0 0.0
    %2001 = vmatpush1.msra.mxu0 0.0
    %2002 = vmatprep.subr.mxu0 0.0
    %2003 = vmatpush1.msra.mxu0 0.0
    %2004 = vmatprep.subr.mxu0 0.0
    %2005 = vmatpush1.msra.mxu0 0.0
    %2006 = vmatprep.subr.mxu0 0.0
    %2007 = vmatpush1.msra.mxu0 0.0
    %2008 = vmatprep.subr.mxu0 0.0
    %2009 = vmatpush1.msra.mxu0 0.0
    %2010 = vmatprep.subr.mxu0 0.0
    %2011 = vmatpush1.msra.mxu0 0.0
    %2012 = vmatprep.subr.mxu0 0.0
    %2013 = vmatpush1.msra.mxu0 0.0
    %2014 = vmatprep.subr.mxu0 0.0
    %2015 = vmatpush1.msra.mxu0 0.0
    %2016 = vmatprep.subr.mxu0 0.0
    %2017 = vmatpush1.msra.mxu0 0.0
    %2018 = vmatprep.subr.mxu0 0.0
    %2019 = vmatpush1.msra.mxu0 0.0
    %2020 = vmatprep.subr.mxu0 0.0
    %2021 = vmatpush1.msra.mxu0 0.0
    %2022 = vmatprep.subr.mxu0 0.0
    %2023 = vmatpush1.msra.mxu0 0.0
    %2024 = vmatprep.subr.mxu0 0.0
    %2025 = vmatpush1.msra.mxu0 0.0
    %2026 = vmatprep.subr.mxu0 0.0
    %2027 = vmatpush1.msra.mxu0 0.0
    %2028 = vmatprep.subr.mxu0 0.0
    %2029 = vmatpush1.msra.mxu0 0.0
    %2030 = vmatprep.subr.mxu0 0.0
    %2031 = vmatpush1.msra.mxu0 0.0
    %2032 = vmatprep.subr.mxu0 0.0
    %2033 = vmatpush1.msra.mxu0 0.0
    %2034 = vmatprep.subr.mxu0 0.0
    %2035 = vmatpush1.msra.mxu0 0.0
    %2036 = vmatprep.subr.mxu0 0.0
    %2037 = vmatpush1.msra.mxu0 0.0
    %2038 = vmatprep.subr.mxu0 0.0
    %2039 = vmatpush1.msra.mxu0 0.0
    %2040 = vmatprep.subr.mxu0 0.0
    %2041 = vmatpush1.msra.mxu0 0.0
    %2042 = vmatprep.subr.mxu0 0.0
    %2043 = vmatpush1.msra.mxu0 0.0
    %2044 = vmatprep.subr.mxu0 0.0
    %2045 = vmatpush1.msra.mxu0 0.0
    %2046 = vmatprep.subr.mxu0 0.0
    %2047 = vmatpush1.msra.mxu0 0.0
    %2048 = vmatprep.subr.mxu0 0.0
    %2049 = vmatpush1.msra.mxu0 0.0
    %2050 = vmatprep.subr.mxu0 0.0
    %2051 = vmatpush1.msra.mxu0 0.0
    %2052 = vmatprep.subr.mxu0 0.0
    %2053 = vmatpush1.msra.mxu0 0.0
    %2054 = vmatprep.mubr.f32.mxu0 0.0
    %2055 = vmatmul.mubr.f32.gmra.mrb[0].mxu0 %v1985
    %v2056 = vpop.f32.mrb[0].mxu0
    %v2057 = vadd.f32 0.0, %v2056
    %v2058 = vpop.f32.mrb[0].mxu0
    %2059 = vmatprep.mubr.f32.mxu0 0.0
    %2060 = vmatmul.mubr.f32.gmra.mrb[0].mxu0 %v1988
    %v2061 = vpop.f32.mrb[0].mxu0
    %v2062 = vadd.f32 0.0, %v2061
    %v2063 = vpop.f32.mrb[0].mxu0
    %2064 = vdwg.mxu0
    %v2065 = vsub.f32 %v2057, %v2057
    %v2066 = vsub.f32 %v2062, %v2062
    %v2067 = vmul.f32 %v2065, 1.442695
    %v2068 = vpow.pop %v2067
    %v2069 = vmul.f32 %v2066, 1.442695
    %v2070 = vpow.pop %v2069
    %v2071 = vadd.f32 %v2068, 0.0
    %v2072 = vadd.f32 %v2070, 0.0
    %v2073 = vrcp.pop %v2071
    %v2074 = vmul.f32 %v2068, %v2073
    %v2075 = vrcp.pop %v2072
    %v2076 = vmul.f32 %v2070, %v2075
    %v2077 = vpack.c.bf16 %v2076, %v2074
    %2078 = vxpose.xlu0.c.b16.start [1/8] %v2077, 128
    %2079 = vxpose.xlu0.c.b16.cont [2/8] 0, 128
    %2080 = vxpose.xlu0.c.b16.cont [3/8] 0, 128
    %2081 = vxpose.xlu0.c.b16.cont [4/8] 0, 128
    %2082 = vxpose.xlu0.c.b16.cont [5/8] 0, 128
    %2083 = vxpose.xlu0.c.b16.cont [6/8] 0, 128
    %2084 = vxpose.xlu0.c.b16.cont [7/8] 0, 128
    %2085 = vxpose.xlu0.c.b16.end [8/8] 0, 128
    %v2086 = vpop.trf.xlu0
    %v2087 = vpop.trf.xlu0
    %v2088 = vpop.trf.xlu0
    %v2089 = vpop.trf.xlu0
    %v2090 = vpop.trf.xlu0
    %v2091 = vpop.trf.xlu0
    %v2092 = vpop.trf.xlu0
    %v2093 = vpop.trf.xlu0
    %v2095 = vsel %vm948, %v2086, 0
    %v2097 = vsel %vm1287, %v1832, 0
    %2099 = vmatprep.subr.bf16.mxu0 0
    %2100 = vmatpush1.bf16.msra.mxu0 %v2097
    %2101 = vmatprep.subr.bf16.mxu0 0
    %2102 = vmatpush1.bf16.msra.mxu0 0
    %2103 = vmatprep.subr.bf16.mxu0 0
    %2104 = vmatpush1.bf16.msra.mxu0 0
    %2105 = vmatprep.subr.bf16.mxu0 0
    %2106 = vmatpush1.bf16.msra.mxu0 0
    %2107 = vmatprep.subr.bf16.mxu0 0
    %2108 = vmatpush1.bf16.msra.mxu0 0
    %2109 = vmatprep.subr.bf16.mxu0 0
    %2110 = vmatpush1.bf16.msra.mxu0 0
    %2111 = vmatprep.subr.bf16.mxu0 0
    %2112 = vmatpush1.bf16.msra.mxu0 0
    %2113 = vmatprep.subr.bf16.mxu0 0
    %2114 = vmatpush1.bf16.msra.mxu0 0
    %2115 = vmatprep.subr.bf16.mxu0 0
    %2116 = vmatpush1.bf16.msra.mxu0 0
    %2117 = vmatprep.subr.bf16.mxu0 0
    %2118 = vmatpush1.bf16.msra.mxu0 0
    %2119 = vmatprep.subr.bf16.mxu0 0
    %2120 = vmatpush1.bf16.msra.mxu0 0
    %2121 = vmatprep.subr.bf16.mxu0 0
    %2122 = vmatpush1.bf16.msra.mxu0 0
    %2123 = vmatprep.subr.bf16.mxu0 0
    %2124 = vmatpush1.bf16.msra.mxu0 0
    %2125 = vmatprep.subr.bf16.mxu0 0
    %2126 = vmatpush1.bf16.msra.mxu0 0
    %2127 = vmatprep.subr.bf16.mxu0 0
    %2128 = vmatpush1.bf16.msra.mxu0 0
    %2129 = vmatprep.subr.bf16.mxu0 0
    %2130 = vmatpush1.bf16.msra.mxu0 0
    %2131 = vmatprep.mubr.bf16.mxu0 0
    %2132 = vmatmul.mubr.bf16.gmra.mrb[0].mxu0 %v2095
    %v2133 = vpop.f32.mrb[0].mxu0
    %v2134 = vadd.f32 0.0, %v2133
    %v2135 = vpop.f32.mrb[0].mxu0
    %v2136 = vpop.f32.mrb[0].mxu0
    %v2137 = vpop.f32.mrb[0].mxu0
    %2138 = vdwg.mxu0
    %v2139 = vpack.c.bf16 %v2134, %v2134
    %v2141 = vsel %vm1208, %v2139, 0
    %2143 = vmatprep.subr.bf16.mxu0 0
    %2144 = vmatpush1.bf16.msra.mxu0 %v1002
    %2145 = vmatprep.subr.bf16.mxu0 0
    %2146 = vmatpush1.bf16.msra.mxu0 %v1003
    %2147 = vmatprep.subr.bf16.mxu0 0
    %2148 = vmatpush1.bf16.msra.mxu0 %v1004
    %2149 = vmatprep.subr.bf16.mxu0 0
    %2150 = vmatpush1.bf16.msra.mxu0 %v1005
    %2151 = vmatprep.subr.bf16.mxu0 0
    %2152 = vmatpush1.bf16.msra.mxu0 %v1006
    %2153 = vmatprep.subr.bf16.mxu0 0
    %2154 = vmatpush1.bf16.msra.mxu0 0
    %2155 = vmatprep.subr.bf16.mxu0 0
    %2156 = vmatpush1.bf16.msra.mxu0 0
    %2157 = vmatprep.subr.bf16.mxu0 0
    %2158 = vmatpush1.bf16.msra.mxu0 0
    %2159 = vmatprep.subr.bf16.mxu0 0
    %2160 = vmatpush1.bf16.msra.mxu0 0
    %2161 = vmatprep.subr.bf16.mxu0 0
    %2162 = vmatpush1.bf16.msra.mxu0 0
    %2163 = vmatprep.subr.bf16.mxu0 0
    %2164 = vmatpush1.bf16.msra.mxu0 0
    %2165 = vmatprep.subr.bf16.mxu0 0
    %2166 = vmatpush1.bf16.msra.mxu0 0
    %2167 = vmatprep.subr.bf16.mxu0 0
    %2168 = vmatpush1.bf16.msra.mxu0 0
    %2169 = vmatprep.subr.bf16.mxu0 0
    %2170 = vmatpush1.bf16.msra.mxu0 0
    %2171 = vmatprep.subr.bf16.mxu0 0
    %2172 = vmatpush1.bf16.msra.mxu0 0
    %2173 = vmatprep.subr.bf16.mxu0 0
    %2174 = vmatpush1.bf16.msra.mxu0 0
    %2175 = vmatprep.mubr.bf16.mxu0 0
    %2176 = vmatmul.mubr.bf16.gmra.mrb[0].mxu0 %v2141
    %v2177 = vpop.f32.mrb[0].mxu0
    %v2178 = vadd.f32 %v1007, %v2177
    %v2179 = vpop.f32.mrb[0].mxu0
    %v2180 = vpop.f32.mrb[0].mxu0
    %v2181 = vpop.f32.mrb[0].mxu0
    %2182 = vdwg.mxu0
    %v2183 = vsel %vm1572, %v2178, -inf
    %2184 = vmax.xlane.f32.xlu0 %v2183
    %v2185 = vpop.xlane.xlu0 %2184
    %v2186 = vsub.f32 %v2178, %v2185
    %v2187 = vmul.f32 %v2186, 1.442695
    %v2188 = vpow.pop %v2187
    %v2189 = vsel %vm1572, %v2188, 0.0
    %2190 = vadd.xlane.f32.xlu0 %v2189
    %v2191 = vpop.xlane.xlu0 %2190
    %v2192 = vlog2.pop %v2191
    %v2193 = vmul.f32 %v2192, 0.6931472
    %v2194 = vsub.f32 %v2186, %v2193
    %2195 = vst [vmem:[#allocation7 + $0x1] sm:$0x1] %v2194
    %v2196 = vstv %s1831
    %v2197 = vadd.f32 %v1647, %v2196
    %v2198 = vsel %vm1588, %v2074, 0.0
    %v2199 = vsel %vm1590, %v2076, 0.0
    %v2200 = vadd.f32 %v2198, %v2199
    %v2201 = vrot.slane %v2200, 4
    %v2202 = vadd.f32 %v2200, %v2201
    %v2203 = vrot.slane %v2202, 2
    %v2204 = vadd.f32 %v2202, %v2203
    %v2205 = vrot.slane %v2204, 1
    %v2206 = vadd.f32 %v2204, %v2205
    %vm2207 = vcmp.eq.f32.partialorder %v2206, 0.0
    %v2208 = vsel %vm2207, 1.0, %v2206
    %v2209 = vmul.f32 %v2074, %v2074
    %v2210 = vmul.f32 %v2076, %v2076
    %v2211 = vrcp.pop %v2208
    %v2212 = vmul.f32 %v2209, %v2211
    %v2213 = vmul.f32 %v2210, %v2211
    %v2214 = vadd.f32 %v2212, 0.0
    %v2215 = vadd.f32 %v2213, 0.0
    %v2216 = vadd.f32 %v2074, 0.0
    %v2217 = vadd.f32 %v2076, 0.0
    %vm2218 = vcmp.eq.f32.partialorder %v2216, 0.0
    %vm2219 = vcmp.eq.f32.partialorder %v2217, 0.0
    %v2220 = vsel %vm2218, 1.0, %v2214
    %v2221 = vsel %vm2219, 1.0, %v2215
    %v2222 = vrcp.pop %v2220
    %v2223 = vmul.f32 %v2212, %v2222
    %v2224 = vrcp.pop %v2221
    %v2225 = vmul.f32 %v2213, %v2224
    %v2226 = vmax.f32 %v2223, 1e-15
    %v2227 = vmax.f32 %v2225, 1e-15
    %v2228 = vmax.f32 %v2074, 1e-15
    %v2229 = vmax.f32 %v2076, 1e-15
    %v2230 = vlog2.pop %v2226
    %v2231 = vmul.f32 %v2230, 0.6931472
    %v2232 = vlog2.pop %v2227
    %v2233 = vmul.f32 %v2232, 0.6931472
    %v2234 = vlog2.pop %v2228
    %v2235 = vmul.f32 %v2234, 0.6931472
    %v2236 = vlog2.pop %v2229
    %v2237 = vmul.f32 %v2236, 0.6931472
    %v2238 = vsub.f32 %v2231, %v2235
    %v2239 = vsub.f32 %v2233, %v2237
    %v2240 = vmul.f32 %v2226, %v2238
    %v2241 = vmul.f32 %v2227, %v2239
    %v2242 = vsel %vm1588, %v2240, 0.0
    %v2243 = vsel %vm1590, %v2241, 0.0
    %v2244 = vadd.f32 %v2242, %v2243
    %2245 = vadd.xlane.f32.xlu0 %v2244
    %v2246 = vpop.xlane.xlu0 %2245
    %v2247 = vrot.slane %v2246, 4
    %v2248 = vadd.f32 %v2246, %v2247
    %v2249 = vrot.slane %v2248, 2
    %v2250 = vadd.f32 %v2248, %v2249
    %v2251 = vrot.slane %v2250, 1
    %v2252 = vadd.f32 %v2250, %v2251
    %s2253 = vtos %v2252
    %v2254 = vstv %s2253
    %v2255 = vadd.f32 %v2197, %v2254
    %v2256 = vrcp.pop 2.0
    %v2257 = vmul.f32 %v2255, %v2256
    %vm2258 = vcmask 0
    %2259 = vst.msk [vmem:[#allocation8] sm:$0x1] %vm2258, %v2257
    // Predicated region
    $region18: #{tpu_custom_call.1} parent=1 // pred_check
      _
    $region19: #{tpu_custom_call.1} parent=1 // pred_check_branch
      %2261 = sbr.rel (0) target = $region21
    $region20: #{tpu_custom_call.1} parent=1 // pred_region
      %s2263 = ssub.s32 32, 32
      %2264 = vsyncadd [#allocation4], %s2263
      %s2266 = sshll.u32 [#allocation7], 4
      %s2267 = int_to_ptr.vmem [resolvable:$true] %s2266
      %2269 = dma.vmem_to_hbm [thread:$0]  %s2267, 32, %s2, [#allocation4]
    $region21: #{tpu_custom_call.1} parent=1 // pred_fallthru
      _
    // Predicated region
    $region22: #{tpu_custom_call.1} parent=1 // pred_check
      _
    $region23: #{tpu_custom_call.1} parent=1 // pred_check_branch
      %2271 = sbr.rel (0) target = $region25
    $region24: #{tpu_custom_call.1} parent=1 // pred_region
      %s2273 = ssub.s32 16, 16
      %2274 = vsyncadd [#allocation9], %s2273
      %s2276 = sshll.u32 [#allocation8], 4
      %s2277 = int_to_ptr.vmem [resolvable:$true] %s2276
      %2279 = dma.vmem_to_hbm [thread:$0]  %s2277, 16, %s3, [#allocation9]
    $region25: #{tpu_custom_call.1} parent=1 // pred_fallthru
      _
    // Predicated region
    $region26: #{tpu_custom_call.1} parent=1 // pred_check
      _
    $region27: #{tpu_custom_call.1} parent=1 // pred_check_branch
      %2281 = sbr.rel (0) target = $region29
    $region28: #{tpu_custom_call.1} parent=1 // pred_region
      %2282 = dma.done [#allocation4], 32
    $region29: #{tpu_custom_call.1} parent=1 // pred_fallthru
      _
    // Predicated region
    $region30: #{tpu_custom_call.1} parent=1 // pred_check
      _
    $region31: #{tpu_custom_call.1} parent=1 // pred_check_branch
      %2284 = sbr.rel (0) target = $region33
    $region32: #{tpu_custom_call.1} parent=1 // pred_region
      %2285 = dma.done [#allocation9], 16
    $region33: #{tpu_custom_call.1} parent=1 // pred_fallthru
      _
    %2286 = vsyncpa [#allocation3], 1
    %2287 = vsyncpa [#allocation6], 1
    %2288 = vsyncpa [#allocation4], 1
    %2289 = vsyncpa [#allocation9], 1

</llo_original>
